<compile_context>
chip_gen: v6e
topology: v6e:2x2x1
jax: 0.10.0
libtpu: 0.0.40
codegen_flags: <defaults>
</compile_context>

<pallas_src>
import jax
import jax.numpy as jnp
from jax.experimental import pallas as pl
from jax.experimental.pallas import tpu as pltpu

# ----------------------------- tiny RoBERTa config ---------------------------------
BATCH = 2
TITLE_LEN = 8
SAPO_LEN = 8
VOCAB = 100
MAX_POS = 64
HIDDEN = 32
NUM_HEADS = 2
HEAD_DIM = HIDDEN // NUM_HEADS
FFN = 64
NUM_LAYERS = 2
WORD_EMBED_DIM = 16
LN_EPS = 1e-5
NEG_INF = -1e9

# ---- packed-vector block layout (rows of the (N_VEC_ROWS, 128) "vec" operand) ----
VEC_W = 128
_ROW_EMB_G = 0
_ROW_EMB_B = 1
_ROWS_PER_LAYER = 8          # [bqkv, bo, ln1_g, ln1_b, b_ff1, b_ff2, ln2_g, ln2_b]


def _lrow(l, k):
    return 2 + l * _ROWS_PER_LAYER + k


_ROW_POOL_B = 2 + NUM_LAYERS * _ROWS_PER_LAYER
_ROW_B_COMB = _ROW_POOL_B + 1
_N_VEC_ROWS = _ROW_B_COMB + 1


# ================================ fused Pallas kernel ===============================

def _news_encoder_kernel(x_ref, maskrow_ref, sel_ref, vec_ref,
                         wqkv_h_ref, wo_ref, wff1_ref, wff2_ref,
                         pool_w_ref, w_comb_ref, o_ref):
    """Entire NewsEncoder forward on VMEM-resident values.

    x:       (R, H)   R = 2*B*L rows (title batches first, then sapo batches)
    maskrow: (1, R)   key-validity mask (0/1)
    sel:     (2B, R)  one-hot CLS-row selection matrix (title rows then sapo rows)
    vec:     (N_VEC_ROWS, 128) packed bias / LayerNorm vectors (zero-padded rows)
    wqkv_h:  (NL*NH*3, H, D)   per-head Q/K/V weights
    wo:      (NL, H, H);  wff1: (NL, H, FFN);  wff2: (NL, FFN, H)
    pool_w:  (H, H);  w_comb: (2, H, 128) folded reduce_dim+linear_combine (lane-padded)
    out:     (B, 128) lane-dense; real result in the first WORD_EMBED_DIM columns
    """
    H, D = HIDDEN, HEAD_DIM
    R = x_ref.shape[0]
    two_b = sel_ref.shape[0]
    B = two_b // 2
    L = R // two_b
    scale = 1.0 / (D ** 0.5)

    def ln(x, g, b):
        mu = jnp.mean(x, axis=-1, keepdims=True)
        var = jnp.mean(jnp.square(x - mu), axis=-1, keepdims=True)
        return (x - mu) * jax.lax.rsqrt(var + LN_EPS) * g + b

    # Load the packed parameter-vector block once; all further accesses are value slices.
    vec = vec_ref[...]

    def vrow(i, w=H):
        return vec[i:i + 1, :w]

    # ---- block-diagonal additive attention bias, built in-kernel from the compact mask ----
    ri = jax.lax.broadcasted_iota(jnp.int32, (R, R), 0).astype(jnp.float32)
    ci = jax.lax.broadcasted_iota(jnp.int32, (R, R), 1).astype(jnp.float32)
    same_batch = jnp.floor(ri * (1.0 / L)) == jnp.floor(ci * (1.0 / L))
    key_ok = maskrow_ref[...] > 0.0                          # (1, R) broadcasts over rows
    bias = jnp.where(same_batch & key_ok, 0.0, NEG_INF).astype(jnp.float32)

    # ---- embedding LayerNorm ----
    h = ln(x_ref[...], vrow(_ROW_EMB_G), vrow(_ROW_EMB_B))

    for l in range(NUM_LAYERS):                              # static unroll (tiny model)
        bqkv = vec[_lrow(l, 0):_lrow(l, 0) + 1, :3 * H]       # (1, 3H) = [bq | bk | bv]
        wo_l = wo_ref[l]                                      # (H, H)

        attn = None
        for hh in range(NUM_HEADS):
            base = (l * NUM_HEADS + hh) * 3
            # per-head Q/K/V: direct (R,H)x(H,D) matmuls — no lane slicing of activations
            qh = (jnp.dot(h, wqkv_h_ref[base + 0], preferred_element_type=jnp.float32)
                  + bqkv[:, 0 * H + hh * D:0 * H + (hh + 1) * D])
            kh = (jnp.dot(h, wqkv_h_ref[base + 1], preferred_element_type=jnp.float32)
                  + bqkv[:, 1 * H + hh * D:1 * H + (hh + 1) * D])
            vh = (jnp.dot(h, wqkv_h_ref[base + 2], preferred_element_type=jnp.float32)
                  + bqkv[:, 2 * H + hh * D:2 * H + (hh + 1) * D])

            s = jax.lax.dot_general(qh, kh, (((1,), (1,)), ((), ())),
                                    preferred_element_type=jnp.float32)   # (R, R)
            s = s * scale + bias
            s = s - jnp.max(s, axis=-1, keepdims=True)
            p = jnp.exp(s)
            p = p * pl.reciprocal(jnp.sum(p, axis=-1, keepdims=True), approx=True)
            ctx_h = jnp.dot(p, vh, preferred_element_type=jnp.float32)    # (R, D)
            # output projection accumulated per head (sublane slice of Wo — fine)
            part = jnp.dot(ctx_h, wo_l[hh * D:(hh + 1) * D, :],
                           preferred_element_type=jnp.float32)            # (R, H)
            attn = part if attn is None else attn + part
        attn = attn + vrow(_lrow(l, 1))                                   # + bo

        h = ln(h + attn, vrow(_lrow(l, 2)), vrow(_lrow(l, 3)))

        # ---- feed-forward ----
        ff = jax.nn.gelu(jnp.dot(h, wff1_ref[l], preferred_element_type=jnp.float32)
                         + vec[_lrow(l, 4):_lrow(l, 4) + 1, :FFN])
        ff = jnp.dot(ff, wff2_ref[l], preferred_element_type=jnp.float32) + vrow(_lrow(l, 5))
        h = ln(h + ff, vrow(_lrow(l, 6)), vrow(_lrow(l, 7)))

    # ---- merged pooler: one CLS selection + one tanh(Linear) for both branches ----
    cls = jnp.dot(sel_ref[...], h, preferred_element_type=jnp.float32)         # (2B, H)
    pooled = jnp.tanh(jnp.dot(cls, pool_w_ref[...], preferred_element_type=jnp.float32)
                      + vrow(_ROW_POOL_B))                                      # (2B, H)

    # ---- folded reduce_dim + linear_combine epilogue (lane-padded to 128) ----
    out = (jnp.dot(pooled[:B], w_comb_ref[0], preferred_element_type=jnp.float32)
           + jnp.dot(pooled[B:], w_comb_ref[1], preferred_element_type=jnp.float32)
           + vec[_ROW_B_COMB:_ROW_B_COMB + 1, :])
    o_ref[...] = out.astype(o_ref.dtype)


# ============================== parameter construction ==============================

def _init(key, shape, scale=0.02):
    return scale * jax.random.normal(key, shape, dtype=jnp.float32)


def make_params(seed=0):
    key = jax.random.PRNGKey(seed)
    keys = iter(jax.random.split(key, 256))
    p = {}
    p["tok_emb"] = _init(next(keys), (VOCAB, HIDDEN))
    p["pos_emb"] = _init(next(keys), (MAX_POS, HIDDEN))
    p["emb_ln_g"] = jnp.ones((HIDDEN,), jnp.float32)
    p["emb_ln_b"] = jnp.zeros((HIDDEN,), jnp.float32)
    p["layers"] = []
    for _ in range(NUM_LAYERS):
        lyr = {
            "wq": _init(next(keys), (HIDDEN, HIDDEN)), "bq": jnp.zeros((HIDDEN,), jnp.float32),
            "wk": _init(next(keys), (HIDDEN, HIDDEN)), "bk": jnp.zeros((HIDDEN,), jnp.float32),
            "wv": _init(next(keys), (HIDDEN, HIDDEN)), "bv": jnp.zeros((HIDDEN,), jnp.float32),
            "wo": _init(next(keys), (HIDDEN, HIDDEN)), "bo": jnp.zeros((HIDDEN,), jnp.float32),
            "ln1_g": jnp.ones((HIDDEN,), jnp.float32), "ln1_b": jnp.zeros((HIDDEN,), jnp.float32),
            "w_ff1": _init(next(keys), (HIDDEN, FFN)), "b_ff1": jnp.zeros((FFN,), jnp.float32),
            "w_ff2": _init(next(keys), (FFN, HIDDEN)), "b_ff2": jnp.zeros((HIDDEN,), jnp.float32),
            "ln2_g": jnp.ones((HIDDEN,), jnp.float32), "ln2_b": jnp.zeros((HIDDEN,), jnp.float32),
        }
        p["layers"].append(lyr)
    p["pool_w"] = _init(next(keys), (HIDDEN, HIDDEN))
    p["pool_b"] = jnp.zeros((HIDDEN,), jnp.float32)
    # reduce_dim: Linear(hidden_size -> word_embed_dim)
    p["reduce_w"] = _init(next(keys), (HIDDEN, WORD_EMBED_DIM))
    p["reduce_b"] = jnp.zeros((WORD_EMBED_DIM,), jnp.float32)
    # linear_combine: Linear(2 * word_embed_dim -> word_embed_dim)
    p["combine_w"] = _init(next(keys), (2 * WORD_EMBED_DIM, WORD_EMBED_DIM))
    p["combine_b"] = jnp.zeros((WORD_EMBED_DIM,), jnp.float32)
    return p


def prepare_fused_params(p):
    """One-time (load-time) weight folding: pack vectors, split per-head QKV weights,
    fold reduce_dim + linear_combine, build the merged CLS selector."""
    def padrow(v, width=VEC_W):
        v = jnp.asarray(v, jnp.float32).reshape(-1)
        return jnp.pad(v, (0, width - v.shape[0]))

    rows = [padrow(p["emb_ln_g"]), padrow(p["emb_ln_b"])]
    wqkv_h, wo, w_ff1, w_ff2 = [], [], [], []
    for l in p["layers"]:
        rows += [padrow(jnp.concatenate([l["bq"], l["bk"], l["bv"]])),
                 padrow(l["bo"]), padrow(l["ln1_g"]), padrow(l["ln1_b"]),
                 padrow(l["b_ff1"]), padrow(l["b_ff2"]),
                 padrow(l["ln2_g"]), padrow(l["ln2_b"])]
        for hh in range(NUM_HEADS):
            for w in (l["wq"], l["wk"], l["wv"]):
                wqkv_h.append(w[:, hh * HEAD_DIM:(hh + 1) * HEAD_DIM])
        wo.append(l["wo"])
        w_ff1.append(l["w_ff1"])
        w_ff2.append(l["w_ff2"])

    # Fold reduce_dim + linear_combine:
    #   out = concat(t_r, s_r) @ Cw + Cb,  t_r = pooled_t @ Rw + Rb,  s_r = pooled_s @ Rw + Rb
    #       = pooled_t @ (Rw @ Cw[:E]) + pooled_s @ (Rw @ Cw[E:]) + (Rb @ Cw[:E] + Rb @ Cw[E:] + Cb)
    E = WORD_EMBED_DIM
    cw_t = p["combine_w"][:E, :]
    cw_s = p["combine_w"][E:, :]
    b_comb = p["reduce_b"] @ cw_t + p["reduce_b"] @ cw_s + p["combine_b"]
    rows += [padrow(p["pool_b"]), padrow(b_comb)]
    vec = jnp.stack(rows)                                                  # (N_VEC_ROWS, 128)
    assert vec.shape[0] == _N_VEC_ROWS

    def padw(w):                                                           # (H, E) -> (H, 128)
        return jnp.pad(w, ((0, 0), (0, VEC_W - w.shape[1])))
    w_comb = jnp.stack([padw(p["reduce_w"] @ cw_t), padw(p["reduce_w"] @ cw_s)])

    # Merged CLS-row selector (title rows 0..B-1, sapo rows B..2B-1; CLS at row b*L).
    L = TITLE_LEN
    R = 2 * BATCH * L
    sel = jax.nn.one_hot(jnp.arange(2 * BATCH) * L, R, dtype=jnp.float32)  # (2B, R)

    return {
        "tok_emb": p["tok_emb"], "pos_emb": p["pos_emb"],
        "vec": vec,
        "wqkv_h": jnp.stack(wqkv_h),                                       # (NL*NH*3, H, D)
        "wo": jnp.stack(wo),                                               # (NL, H, H)
        "w_ff1": jnp.stack(w_ff1),                                         # (NL, H, FFN)
        "w_ff2": jnp.stack(w_ff2),                                         # (NL, FFN, H)
        "pool_w": p["pool_w"],                                             # (H, H)
        "w_comb": w_comb,                                                  # (2, H, 128)
        "sel": sel,                                                        # (2B, R)
    }


# ================================ forward pass ======================================

@jax.jit
def news_encoder_forward(fused, title_encoding, title_attn_mask,
                         sapo_encoding, sapo_attn_mask):
    B, Lt = title_encoding.shape
    _, Ls = sapo_encoding.shape
    # TODO(synk): fused single-pass encoder assumes title_length == sapo_length; otherwise the
    #             shorter sequence would need padding to a common L before batching.
    assert Lt == Ls and Lt <= MAX_POS
    L = Lt
    R = 2 * B * L

    # ---- glue kept in plain JAX: token-id gather + position add + mask reshape ----
    ids = jnp.concatenate([title_encoding, sapo_encoding], axis=0)          # (2B, L)
    mask = jnp.concatenate([title_attn_mask, sapo_attn_mask], axis=0)       # (2B, L)
    tok = jnp.take(fused["tok_emb"], ids, axis=0)                           # (2B, L, H)
    x = (tok + fused["pos_emb"][:L][None]).reshape(R, HIDDEN).astype(jnp.float32)
    mask_row = mask.reshape(1, R).astype(jnp.float32)

    operands = (x, mask_row, fused["sel"], fused["vec"],
                fused["wqkv_h"], fused["wo"], fused["w_ff1"], fused["w_ff2"],
                fused["pool_w"], fused["w_comb"])

    out_pad = pl.pallas_call(
        _news_encoder_kernel,
        out_shape=jax.ShapeDtypeStruct((B, VEC_W), jnp.float32),            # lane-dense output
        in_specs=[pl.BlockSpec(memory_space=pltpu.MemorySpace.VMEM)] * len(operands),
        out_specs=pl.BlockSpec(memory_space=pltpu.MemorySpace.VMEM),
    )(*operands)
    return out_pad[:, :WORD_EMBED_DIM]


# ============================ pure-JAX reference (check) ============================

def _reference_branch(params, ids, mask):
    B, L = ids.shape
    tok = jnp.take(params["tok_emb"], ids, axis=0)
    h = tok + params["pos_emb"][:L][None]

    def ln(x, g, b):
        mu = jnp.mean(x, -1, keepdims=True)
        var = jnp.mean(jnp.square(x - mu), -1, keepdims=True)
        return (x - mu) * jax.lax.rsqrt(var + LN_EPS) * g + b

    h = ln(h, params["emb_ln_g"], params["emb_ln_b"])
    bias = (1.0 - mask.astype(jnp.float32)) * NEG_INF                        # (B, L)
    for lyr in params["layers"]:
        q = h @ lyr["wq"] + lyr["bq"]
        k = h @ lyr["wk"] + lyr["bk"]
        v = h @ lyr["wv"] + lyr["bv"]

        def heads(t):
            return t.reshape(B, L, NUM_HEADS, HEAD_DIM).transpose(0, 2, 1, 3)

        s = jnp.einsum("bhqd,bhkd->bhqk", heads(q), heads(k)) / (HEAD_DIM ** 0.5)
        s = s + bias[:, None, None, :]
        p = jax.nn.softmax(s, axis=-1)
        ctx = jnp.einsum("bhqk,bhkd->bhqd", p, heads(v)).transpose(0, 2, 1, 3).reshape(B, L, HIDDEN)
        h = ln(h + ctx @ lyr["wo"] + lyr["bo"], lyr["ln1_g"], lyr["ln1_b"])
        ff = jax.nn.gelu(h @ lyr["w_ff1"] + lyr["b_ff1"])
        ff = ff @ lyr["w_ff2"] + lyr["b_ff2"]
        h = ln(h + ff, lyr["ln2_g"], lyr["ln2_b"])
    pooled = jnp.tanh(h[:, 0, :] @ params["pool_w"] + params["pool_b"])
    return pooled @ params["reduce_w"] + params["reduce_b"]


def reference_forward(params, t_ids, t_mask, s_ids, s_mask):
    t = _reference_branch(params, t_ids, t_mask)
    s = _reference_branch(params, s_ids, s_mask)
    return jnp.concatenate([t, s], axis=1) @ params["combine_w"] + params["combine_b"]


# ==================================== main ==========================================

if __name__ == "__main__":
    params = make_params(seed=0)
    fused = prepare_fused_params(params)   # one-time weight folding, hoisted out of the jit

    key = jax.random.PRNGKey(0)
    k1, k2 = jax.random.split(key)
    title_encoding = jax.random.randint(k1, (BATCH, TITLE_LEN), 0, VOCAB, dtype=jnp.int32)
    sapo_encoding = jax.random.randint(k2, (BATCH, SAPO_LEN), 0, VOCAB, dtype=jnp.int32)

    # attention masks: last two tokens of each title, last token of each sapo are padding
    title_attn_mask = jnp.ones((BATCH, TITLE_LEN), jnp.int32).at[:, -2:].set(0)
    sapo_attn_mask = jnp.ones((BATCH, SAPO_LEN), jnp.int32).at[:, -1:].set(0)

    out = news_encoder_forward(fused, title_encoding, title_attn_mask,
                               sapo_encoding, sapo_attn_mask)
    out = jax.block_until_ready(out)

    assert out.shape == (BATCH, WORD_EMBED_DIM), out.shape
    assert jnp.all(jnp.isfinite(out))

    # correctness cross-check against an unfused pure-JAX reference (loose tolerance for
    # MXU-vs-XLA f32 matmul accumulation + approx-reciprocal softmax differences)
    ref = reference_forward(params, title_encoding, title_attn_mask,
                            sapo_encoding, sapo_attn_mask)
    assert jnp.allclose(out, ref, rtol=5e-2, atol=5e-3), (out, ref)

    print("KERNEL_OK")
</pallas_src>

<mosaic_0001>
module attributes {stable_mosaic.version = 11 : i64} {
  func.func @_news_encoder_kernel(%arg0: memref<32x32xf32, #tpu.memory_space<vmem>>, %arg1: memref<1x32xf32, #tpu.memory_space<vmem>>, %arg2: memref<4x32xf32, #tpu.memory_space<vmem>>, %arg3: memref<20x128xf32, #tpu.memory_space<vmem>>, %arg4: memref<12x32x16xf32, #tpu.memory_space<vmem>>, %arg5: memref<2x32x32xf32, #tpu.memory_space<vmem>>, %arg6: memref<2x32x64xf32, #tpu.memory_space<vmem>>, %arg7: memref<2x64x32xf32, #tpu.memory_space<vmem>>, %arg8: memref<32x32xf32, #tpu.memory_space<vmem>>, %arg9: memref<2x32x128xf32, #tpu.memory_space<vmem>>, %arg10: memref<2x128xf32, #tpu.memory_space<vmem>>) attributes {dimension_semantics = [], scalar_prefetch = 0 : i64, scratch_operands = 0 : i64, tpu.core_type = #tpu.core_type<tc>} {
    %c0 = arith.constant 0 : index
    %c0_0 = arith.constant 0 : index
    %0 = vector.load %arg3[%c0, %c0_0] : memref<20x128xf32, #tpu.memory_space<vmem>>, vector<20x128xf32>
    %1 = tpu.iota {dimensions = array<i32: 0>} : vector<32x32xi32>
    %2 = arith.sitofp %1 : vector<32x32xi32> to vector<32x32xf32>
    %3 = tpu.iota {dimensions = array<i32: 1>} : vector<32x32xi32>
    %4 = arith.sitofp %3 : vector<32x32xi32> to vector<32x32xf32>
    %cst = arith.constant 1.250000e-01 : f32
    %5 = vector.broadcast %cst : f32 to vector<32x32xf32>
    %6 = arith.mulf %2, %5 : vector<32x32xf32>
    %7 = math.floor %6 : vector<32x32xf32>
    %cst_1 = arith.constant 1.250000e-01 : f32
    %8 = vector.broadcast %cst_1 : f32 to vector<32x32xf32>
    %9 = arith.mulf %4, %8 : vector<32x32xf32>
    %10 = math.floor %9 : vector<32x32xf32>
    %11 = arith.cmpf oeq, %7, %10 : vector<32x32xf32>
    %c0_2 = arith.constant 0 : index
    %c0_3 = arith.constant 0 : index
    %12 = vector.load %arg1[%c0_2, %c0_3] : memref<1x32xf32, #tpu.memory_space<vmem>>, vector<1x32xf32>
    %cst_4 = arith.constant 0.000000e+00 : f32
    %13 = vector.broadcast %cst_4 : f32 to vector<1x32xf32>
    %14 = arith.cmpf ogt, %12, %13 : vector<1x32xf32>
    %15 = vector.broadcast %14 : vector<1x32xi1> to vector<32x32xi1>
    %16 = arith.andi %11, %15 : vector<32x32xi1>
    %cst_5 = arith.constant 0.000000e+00 : f32
    %cst_6 = arith.constant -1.000000e+09 : f32
    %17 = vector.broadcast %cst_5 : f32 to vector<32x32xf32>
    %18 = vector.broadcast %cst_6 : f32 to vector<32x32xf32>
    %19 = arith.select %16, %17, %18 : vector<32x32xi1>, vector<32x32xf32>
    %c0_7 = arith.constant 0 : index
    %c0_8 = arith.constant 0 : index
    %20 = vector.load %arg0[%c0_7, %c0_8] : memref<32x32xf32, #tpu.memory_space<vmem>>, vector<32x32xf32>
    %21 = vector.extract_strided_slice %0 {offsets = [0, 0], sizes = [1, 32], strides = [1, 1]} : vector<20x128xf32> to vector<1x32xf32>
    %22 = vector.extract_strided_slice %0 {offsets = [1, 0], sizes = [1, 32], strides = [1, 1]} : vector<20x128xf32> to vector<1x32xf32>
    %cst_9 = arith.constant dense<0.000000e+00> : vector<32xf32>
    %23 = vector.multi_reduction <add>, %20, %cst_9 [1] : vector<32x32xf32> to vector<32xf32>
    %24 = vector.shape_cast %23 : vector<32xf32> to vector<32x1xf32>
    %cst_10 = arith.constant 3.200000e+01 : f32
    %25 = vector.broadcast %cst_10 : f32 to vector<32x1xf32>
    %26 = arith.divf %24, %25 : vector<32x1xf32>
    %27 = vector.broadcast %26 : vector<32x1xf32> to vector<32x32xf32>
    %28 = arith.subf %20, %27 : vector<32x32xf32>
    %29 = arith.mulf %28, %28 : vector<32x32xf32>
    %cst_11 = arith.constant dense<0.000000e+00> : vector<32xf32>
    %30 = vector.multi_reduction <add>, %29, %cst_11 [1] : vector<32x32xf32> to vector<32xf32>
    %31 = vector.shape_cast %30 : vector<32xf32> to vector<32x1xf32>
    %cst_12 = arith.constant 3.200000e+01 : f32
    %32 = vector.broadcast %cst_12 : f32 to vector<32x1xf32>
    %33 = arith.divf %31, %32 : vector<32x1xf32>
    %34 = vector.broadcast %26 : vector<32x1xf32> to vector<32x32xf32>
    %35 = arith.subf %20, %34 : vector<32x32xf32>
    %cst_13 = arith.constant 9.99999974E-6 : f32
    %36 = vector.broadcast %cst_13 : f32 to vector<32x1xf32>
    %37 = arith.addf %33, %36 : vector<32x1xf32>
    %38 = math.rsqrt %37 : vector<32x1xf32>
    %39 = vector.broadcast %38 : vector<32x1xf32> to vector<32x32xf32>
    %40 = arith.mulf %35, %39 : vector<32x32xf32>
    %41 = vector.broadcast %21 : vector<1x32xf32> to vector<32x32xf32>
    %42 = arith.mulf %40, %41 : vector<32x32xf32>
    %43 = vector.broadcast %22 : vector<1x32xf32> to vector<32x32xf32>
    %44 = arith.addf %42, %43 : vector<32x32xf32>
    %45 = vector.extract_strided_slice %0 {offsets = [2, 0], sizes = [1, 96], strides = [1, 1]} : vector<20x128xf32> to vector<1x96xf32>
    %c0_14 = arith.constant 0 : index
    %c0_15 = arith.constant 0 : index
    %c0_16 = arith.constant 0 : index
    %46 = vector.load %arg5[%c0_14, %c0_15, %c0_16] : memref<2x32x32xf32, #tpu.memory_space<vmem>>, vector<1x32x32xf32>
    %47 = vector.shape_cast %46 : vector<1x32x32xf32> to vector<32x32xf32>
    %c0_17 = arith.constant 0 : index
    %c0_18 = arith.constant 0 : index
    %c0_19 = arith.constant 0 : index
    %48 = vector.load %arg4[%c0_17, %c0_18, %c0_19] : memref<12x32x16xf32, #tpu.memory_space<vmem>>, vector<1x32x16xf32>
    %49 = vector.shape_cast %48 : vector<1x32x16xf32> to vector<32x16xf32>
    %cst_20 = arith.constant dense<0.000000e+00> : vector<32x16xf32>
    %50 = tpu.matmul %44, %49, %cst_20 {dimension_numbers = #tpu.dot_dimension_numbers<[1], [0], [0], [1], [0, 0, 1, 1], [], []>} : vector<32x32xf32>, vector<32x16xf32>, vector<32x16xf32> -> vector<32x16xf32>
    %51 = vector.extract_strided_slice %45 {offsets = [0, 0], sizes = [1, 16], strides = [1, 1]} : vector<1x96xf32> to vector<1x16xf32>
    %52 = vector.broadcast %51 : vector<1x16xf32> to vector<32x16xf32>
    %53 = arith.addf %50, %52 : vector<32x16xf32>
    %c1 = arith.constant 1 : index
    %c0_21 = arith.constant 0 : index
    %c0_22 = arith.constant 0 : index
    %54 = vector.load %arg4[%c1, %c0_21, %c0_22] : memref<12x32x16xf32, #tpu.memory_space<vmem>>, vector<1x32x16xf32>
    %55 = vector.shape_cast %54 : vector<1x32x16xf32> to vector<32x16xf32>
    %cst_23 = arith.constant dense<0.000000e+00> : vector<32x16xf32>
    %56 = tpu.matmul %44, %55, %cst_23 {dimension_numbers = #tpu.dot_dimension_numbers<[1], [0], [0], [1], [0, 0, 1, 1], [], []>} : vector<32x32xf32>, vector<32x16xf32>, vector<32x16xf32> -> vector<32x16xf32>
    %57 = vector.extract_strided_slice %45 {offsets = [0, 32], sizes = [1, 16], strides = [1, 1]} : vector<1x96xf32> to vector<1x16xf32>
    %58 = vector.broadcast %57 : vector<1x16xf32> to vector<32x16xf32>
    %59 = arith.addf %56, %58 : vector<32x16xf32>
    %c2 = arith.constant 2 : index
    %c0_24 = arith.constant 0 : index
    %c0_25 = arith.constant 0 : index
    %60 = vector.load %arg4[%c2, %c0_24, %c0_25] : memref<12x32x16xf32, #tpu.memory_space<vmem>>, vector<1x32x16xf32>
    %61 = vector.shape_cast %60 : vector<1x32x16xf32> to vector<32x16xf32>
    %cst_26 = arith.constant dense<0.000000e+00> : vector<32x16xf32>
    %62 = tpu.matmul %44, %61, %cst_26 {dimension_numbers = #tpu.dot_dimension_numbers<[1], [0], [0], [1], [0, 0, 1, 1], [], []>} : vector<32x32xf32>, vector<32x16xf32>, vector<32x16xf32> -> vector<32x16xf32>
    %63 = vector.extract_strided_slice %45 {offsets = [0, 64], sizes = [1, 16], strides = [1, 1]} : vector<1x96xf32> to vector<1x16xf32>
    %64 = vector.broadcast %63 : vector<1x16xf32> to vector<32x16xf32>
    %65 = arith.addf %62, %64 : vector<32x16xf32>
    %cst_27 = arith.constant dense<0.000000e+00> : vector<32x32xf32>
    %66 = tpu.matmul %53, %59, %cst_27 {dimension_numbers = #tpu.dot_dimension_numbers<[1], [1], [0], [0], [0, 0, 1, 0], [], []>} : vector<32x16xf32>, vector<32x16xf32>, vector<32x32xf32> -> vector<32x32xf32>
    %cst_28 = arith.constant 2.500000e-01 : f32
    %67 = vector.broadcast %cst_28 : f32 to vector<32x32xf32>
    %68 = arith.mulf %66, %67 : vector<32x32xf32>
    %69 = arith.addf %68, %19 : vector<32x32xf32>
    %cst_29 = arith.constant dense<0xFF800000> : vector<32xf32>
    %70 = vector.multi_reduction <maximumf>, %69, %cst_29 [1] : vector<32x32xf32> to vector<32xf32>
    %71 = vector.shape_cast %70 : vector<32xf32> to vector<32x1xf32>
    %72 = vector.broadcast %71 : vector<32x1xf32> to vector<32x32xf32>
    %73 = arith.subf %69, %72 : vector<32x32xf32>
    %74 = math.exp %73 : vector<32x32xf32>
    %cst_30 = arith.constant dense<0.000000e+00> : vector<32xf32>
    %75 = vector.multi_reduction <add>, %74, %cst_30 [1] : vector<32x32xf32> to vector<32xf32>
    %76 = vector.shape_cast %75 : vector<32xf32> to vector<32x1xf32>
    %77 = tpu.reciprocal %76 {approx = true} : vector<32x1xf32> -> vector<32x1xf32>
    %78 = vector.broadcast %77 : vector<32x1xf32> to vector<32x32xf32>
    %79 = arith.mulf %74, %78 : vector<32x32xf32>
    %cst_31 = arith.constant dense<0.000000e+00> : vector<32x16xf32>
    %80 = tpu.matmul %79, %65, %cst_31 {dimension_numbers = #tpu.dot_dimension_numbers<[1], [0], [0], [1], [0, 0, 1, 1], [], []>} : vector<32x32xf32>, vector<32x16xf32>, vector<32x16xf32> -> vector<32x16xf32>
    %81 = vector.extract_strided_slice %47 {offsets = [0, 0], sizes = [16, 32], strides = [1, 1]} : vector<32x32xf32> to vector<16x32xf32>
    %cst_32 = arith.constant dense<0.000000e+00> : vector<32x32xf32>
    %82 = tpu.matmul %80, %81, %cst_32 {dimension_numbers = #tpu.dot_dimension_numbers<[1], [0], [0], [1], [0, 0, 1, 1], [], []>} : vector<32x16xf32>, vector<16x32xf32>, vector<32x32xf32> -> vector<32x32xf32>
    %c3 = arith.constant 3 : index
    %c0_33 = arith.constant 0 : index
    %c0_34 = arith.constant 0 : index
    %83 = vector.load %arg4[%c3, %c0_33, %c0_34] : memref<12x32x16xf32, #tpu.memory_space<vmem>>, vector<1x32x16xf32>
    %84 = vector.shape_cast %83 : vector<1x32x16xf32> to vector<32x16xf32>
    %cst_35 = arith.constant dense<0.000000e+00> : vector<32x16xf32>
    %85 = tpu.matmul %44, %84, %cst_35 {dimension_numbers = #tpu.dot_dimension_numbers<[1], [0], [0], [1], [0, 0, 1, 1], [], []>} : vector<32x32xf32>, vector<32x16xf32>, vector<32x16xf32> -> vector<32x16xf32>
    %86 = vector.extract_strided_slice %45 {offsets = [0, 16], sizes = [1, 16], strides = [1, 1]} : vector<1x96xf32> to vector<1x16xf32>
    %87 = vector.broadcast %86 : vector<1x16xf32> to vector<32x16xf32>
    %88 = arith.addf %85, %87 : vector<32x16xf32>
    %c4 = arith.constant 4 : index
    %c0_36 = arith.constant 0 : index
    %c0_37 = arith.constant 0 : index
    %89 = vector.load %arg4[%c4, %c0_36, %c0_37] : memref<12x32x16xf32, #tpu.memory_space<vmem>>, vector<1x32x16xf32>
    %90 = vector.shape_cast %89 : vector<1x32x16xf32> to vector<32x16xf32>
    %cst_38 = arith.constant dense<0.000000e+00> : vector<32x16xf32>
    %91 = tpu.matmul %44, %90, %cst_38 {dimension_numbers = #tpu.dot_dimension_numbers<[1], [0], [0], [1], [0, 0, 1, 1], [], []>} : vector<32x32xf32>, vector<32x16xf32>, vector<32x16xf32> -> vector<32x16xf32>
    %92 = vector.extract_strided_slice %45 {offsets = [0, 48], sizes = [1, 16], strides = [1, 1]} : vector<1x96xf32> to vector<1x16xf32>
    %93 = vector.broadcast %92 : vector<1x16xf32> to vector<32x16xf32>
    %94 = arith.addf %91, %93 : vector<32x16xf32>
    %c5 = arith.constant 5 : index
    %c0_39 = arith.constant 0 : index
    %c0_40 = arith.constant 0 : index
    %95 = vector.load %arg4[%c5, %c0_39, %c0_40] : memref<12x32x16xf32, #tpu.memory_space<vmem>>, vector<1x32x16xf32>
    %96 = vector.shape_cast %95 : vector<1x32x16xf32> to vector<32x16xf32>
    %cst_41 = arith.constant dense<0.000000e+00> : vector<32x16xf32>
    %97 = tpu.matmul %44, %96, %cst_41 {dimension_numbers = #tpu.dot_dimension_numbers<[1], [0], [0], [1], [0, 0, 1, 1], [], []>} : vector<32x32xf32>, vector<32x16xf32>, vector<32x16xf32> -> vector<32x16xf32>
    %98 = vector.extract_strided_slice %45 {offsets = [0, 80], sizes = [1, 16], strides = [1, 1]} : vector<1x96xf32> to vector<1x16xf32>
    %99 = vector.broadcast %98 : vector<1x16xf32> to vector<32x16xf32>
    %100 = arith.addf %97, %99 : vector<32x16xf32>
    %cst_42 = arith.constant dense<0.000000e+00> : vector<32x32xf32>
    %101 = tpu.matmul %88, %94, %cst_42 {dimension_numbers = #tpu.dot_dimension_numbers<[1], [1], [0], [0], [0, 0, 1, 0], [], []>} : vector<32x16xf32>, vector<32x16xf32>, vector<32x32xf32> -> vector<32x32xf32>
    %cst_43 = arith.constant 2.500000e-01 : f32
    %102 = vector.broadcast %cst_43 : f32 to vector<32x32xf32>
    %103 = arith.mulf %101, %102 : vector<32x32xf32>
    %104 = arith.addf %103, %19 : vector<32x32xf32>
    %cst_44 = arith.constant dense<0xFF800000> : vector<32xf32>
    %105 = vector.multi_reduction <maximumf>, %104, %cst_44 [1] : vector<32x32xf32> to vector<32xf32>
    %106 = vector.shape_cast %105 : vector<32xf32> to vector<32x1xf32>
    %107 = vector.broadcast %106 : vector<32x1xf32> to vector<32x32xf32>
    %108 = arith.subf %104, %107 : vector<32x32xf32>
    %109 = math.exp %108 : vector<32x32xf32>
    %cst_45 = arith.constant dense<0.000000e+00> : vector<32xf32>
    %110 = vector.multi_reduction <add>, %109, %cst_45 [1] : vector<32x32xf32> to vector<32xf32>
    %111 = vector.shape_cast %110 : vector<32xf32> to vector<32x1xf32>
    %112 = tpu.reciprocal %111 {approx = true} : vector<32x1xf32> -> vector<32x1xf32>
    %113 = vector.broadcast %112 : vector<32x1xf32> to vector<32x32xf32>
    %114 = arith.mulf %109, %113 : vector<32x32xf32>
    %cst_46 = arith.constant dense<0.000000e+00> : vector<32x16xf32>
    %115 = tpu.matmul %114, %100, %cst_46 {dimension_numbers = #tpu.dot_dimension_numbers<[1], [0], [0], [1], [0, 0, 1, 1], [], []>} : vector<32x32xf32>, vector<32x16xf32>, vector<32x16xf32> -> vector<32x16xf32>
    %116 = vector.extract_strided_slice %47 {offsets = [16, 0], sizes = [16, 32], strides = [1, 1]} : vector<32x32xf32> to vector<16x32xf32>
    %cst_47 = arith.constant dense<0.000000e+00> : vector<32x32xf32>
    %117 = tpu.matmul %115, %116, %cst_47 {dimension_numbers = #tpu.dot_dimension_numbers<[1], [0], [0], [1], [0, 0, 1, 1], [], []>} : vector<32x16xf32>, vector<16x32xf32>, vector<32x32xf32> -> vector<32x32xf32>
    %118 = arith.addf %82, %117 : vector<32x32xf32>
    %119 = vector.extract_strided_slice %0 {offsets = [3, 0], sizes = [1, 32], strides = [1, 1]} : vector<20x128xf32> to vector<1x32xf32>
    %120 = vector.broadcast %119 : vector<1x32xf32> to vector<32x32xf32>
    %121 = arith.addf %118, %120 : vector<32x32xf32>
    %122 = arith.addf %44, %121 : vector<32x32xf32>
    %123 = vector.extract_strided_slice %0 {offsets = [4, 0], sizes = [1, 32], strides = [1, 1]} : vector<20x128xf32> to vector<1x32xf32>
    %124 = vector.extract_strided_slice %0 {offsets = [5, 0], sizes = [1, 32], strides = [1, 1]} : vector<20x128xf32> to vector<1x32xf32>
    %cst_48 = arith.constant dense<0.000000e+00> : vector<32xf32>
    %125 = vector.multi_reduction <add>, %122, %cst_48 [1] : vector<32x32xf32> to vector<32xf32>
    %126 = vector.shape_cast %125 : vector<32xf32> to vector<32x1xf32>
    %cst_49 = arith.constant 3.200000e+01 : f32
    %127 = vector.broadcast %cst_49 : f32 to vector<32x1xf32>
    %128 = arith.divf %126, %127 : vector<32x1xf32>
    %129 = vector.broadcast %128 : vector<32x1xf32> to vector<32x32xf32>
    %130 = arith.subf %122, %129 : vector<32x32xf32>
    %131 = arith.mulf %130, %130 : vector<32x32xf32>
    %cst_50 = arith.constant dense<0.000000e+00> : vector<32xf32>
    %132 = vector.multi_reduction <add>, %131, %cst_50 [1] : vector<32x32xf32> to vector<32xf32>
    %133 = vector.shape_cast %132 : vector<32xf32> to vector<32x1xf32>
    %cst_51 = arith.constant 3.200000e+01 : f32
    %134 = vector.broadcast %cst_51 : f32 to vector<32x1xf32>
    %135 = arith.divf %133, %134 : vector<32x1xf32>
    %136 = vector.broadcast %128 : vector<32x1xf32> to vector<32x32xf32>
    %137 = arith.subf %122, %136 : vector<32x32xf32>
    %cst_52 = arith.constant 9.99999974E-6 : f32
    %138 = vector.broadcast %cst_52 : f32 to vector<32x1xf32>
    %139 = arith.addf %135, %138 : vector<32x1xf32>
    %140 = math.rsqrt %139 : vector<32x1xf32>
    %141 = vector.broadcast %140 : vector<32x1xf32> to vector<32x32xf32>
    %142 = arith.mulf %137, %141 : vector<32x32xf32>
    %143 = vector.broadcast %123 : vector<1x32xf32> to vector<32x32xf32>
    %144 = arith.mulf %142, %143 : vector<32x32xf32>
    %145 = vector.broadcast %124 : vector<1x32xf32> to vector<32x32xf32>
    %146 = arith.addf %144, %145 : vector<32x32xf32>
    %c0_53 = arith.constant 0 : index
    %c0_54 = arith.constant 0 : index
    %c0_55 = arith.constant 0 : index
    %147 = vector.load %arg6[%c0_53, %c0_54, %c0_55] : memref<2x32x64xf32, #tpu.memory_space<vmem>>, vector<1x32x64xf32>
    %148 = vector.shape_cast %147 : vector<1x32x64xf32> to vector<32x64xf32>
    %cst_56 = arith.constant dense<0.000000e+00> : vector<32x64xf32>
    %149 = tpu.matmul %146, %148, %cst_56 {dimension_numbers = #tpu.dot_dimension_numbers<[1], [0], [0], [1], [0, 0, 1, 1], [], []>} : vector<32x32xf32>, vector<32x64xf32>, vector<32x64xf32> -> vector<32x64xf32>
    %150 = vector.extract_strided_slice %0 {offsets = [6, 0], sizes = [1, 64], strides = [1, 1]} : vector<20x128xf32> to vector<1x64xf32>
    %151 = vector.broadcast %150 : vector<1x64xf32> to vector<32x64xf32>
    %152 = arith.addf %149, %151 : vector<32x64xf32>
    %153 = arith.mulf %152, %152 : vector<32x64xf32>
    %154 = arith.mulf %152, %153 : vector<32x64xf32>
    %cst_57 = arith.constant 4.471500e-02 : f32
    %155 = vector.broadcast %cst_57 : f32 to vector<32x64xf32>
    %156 = arith.mulf %155, %154 : vector<32x64xf32>
    %157 = arith.addf %152, %156 : vector<32x64xf32>
    %cst_58 = arith.constant 0.797884583 : f32
    %158 = vector.broadcast %cst_58 : f32 to vector<32x64xf32>
    %159 = arith.mulf %158, %157 : vector<32x64xf32>
    %160 = math.tanh %159 : vector<32x64xf32>
    %cst_59 = arith.constant 1.000000e+00 : f32
    %161 = vector.broadcast %cst_59 : f32 to vector<32x64xf32>
    %162 = arith.addf %161, %160 : vector<32x64xf32>
    %cst_60 = arith.constant 5.000000e-01 : f32
    %163 = vector.broadcast %cst_60 : f32 to vector<32x64xf32>
    %164 = arith.mulf %163, %162 : vector<32x64xf32>
    %165 = arith.mulf %152, %164 : vector<32x64xf32>
    %c0_61 = arith.constant 0 : index
    %c0_62 = arith.constant 0 : index
    %c0_63 = arith.constant 0 : index
    %166 = vector.load %arg7[%c0_61, %c0_62, %c0_63] : memref<2x64x32xf32, #tpu.memory_space<vmem>>, vector<1x64x32xf32>
    %167 = vector.shape_cast %166 : vector<1x64x32xf32> to vector<64x32xf32>
    %cst_64 = arith.constant dense<0.000000e+00> : vector<32x32xf32>
    %168 = tpu.matmul %165, %167, %cst_64 {dimension_numbers = #tpu.dot_dimension_numbers<[1], [0], [0], [1], [0, 0, 1, 1], [], []>} : vector<32x64xf32>, vector<64x32xf32>, vector<32x32xf32> -> vector<32x32xf32>
    %169 = vector.extract_strided_slice %0 {offsets = [7, 0], sizes = [1, 32], strides = [1, 1]} : vector<20x128xf32> to vector<1x32xf32>
    %170 = vector.broadcast %169 : vector<1x32xf32> to vector<32x32xf32>
    %171 = arith.addf %168, %170 : vector<32x32xf32>
    %172 = arith.addf %146, %171 : vector<32x32xf32>
    %173 = vector.extract_strided_slice %0 {offsets = [8, 0], sizes = [1, 32], strides = [1, 1]} : vector<20x128xf32> to vector<1x32xf32>
    %174 = vector.extract_strided_slice %0 {offsets = [9, 0], sizes = [1, 32], strides = [1, 1]} : vector<20x128xf32> to vector<1x32xf32>
    %cst_65 = arith.constant dense<0.000000e+00> : vector<32xf32>
    %175 = vector.multi_reduction <add>, %172, %cst_65 [1] : vector<32x32xf32> to vector<32xf32>
    %176 = vector.shape_cast %175 : vector<32xf32> to vector<32x1xf32>
    %cst_66 = arith.constant 3.200000e+01 : f32
    %177 = vector.broadcast %cst_66 : f32 to vector<32x1xf32>
    %178 = arith.divf %176, %177 : vector<32x1xf32>
    %179 = vector.broadcast %178 : vector<32x1xf32> to vector<32x32xf32>
    %180 = arith.subf %172, %179 : vector<32x32xf32>
    %181 = arith.mulf %180, %180 : vector<32x32xf32>
    %cst_67 = arith.constant dense<0.000000e+00> : vector<32xf32>
    %182 = vector.multi_reduction <add>, %181, %cst_67 [1] : vector<32x32xf32> to vector<32xf32>
    %183 = vector.shape_cast %182 : vector<32xf32> to vector<32x1xf32>
    %cst_68 = arith.constant 3.200000e+01 : f32
    %184 = vector.broadcast %cst_68 : f32 to vector<32x1xf32>
    %185 = arith.divf %183, %184 : vector<32x1xf32>
    %186 = vector.broadcast %178 : vector<32x1xf32> to vector<32x32xf32>
    %187 = arith.subf %172, %186 : vector<32x32xf32>
    %cst_69 = arith.constant 9.99999974E-6 : f32
    %188 = vector.broadcast %cst_69 : f32 to vector<32x1xf32>
    %189 = arith.addf %185, %188 : vector<32x1xf32>
    %190 = math.rsqrt %189 : vector<32x1xf32>
    %191 = vector.broadcast %190 : vector<32x1xf32> to vector<32x32xf32>
    %192 = arith.mulf %187, %191 : vector<32x32xf32>
    %193 = vector.broadcast %173 : vector<1x32xf32> to vector<32x32xf32>
    %194 = arith.mulf %192, %193 : vector<32x32xf32>
    %195 = vector.broadcast %174 : vector<1x32xf32> to vector<32x32xf32>
    %196 = arith.addf %194, %195 : vector<32x32xf32>
    %197 = vector.extract_strided_slice %0 {offsets = [10, 0], sizes = [1, 96], strides = [1, 1]} : vector<20x128xf32> to vector<1x96xf32>
    %c1_70 = arith.constant 1 : index
    %c0_71 = arith.constant 0 : index
    %c0_72 = arith.constant 0 : index
    %198 = vector.load %arg5[%c1_70, %c0_71, %c0_72] : memref<2x32x32xf32, #tpu.memory_space<vmem>>, vector<1x32x32xf32>
    %199 = vector.shape_cast %198 : vector<1x32x32xf32> to vector<32x32xf32>
    %c6 = arith.constant 6 : index
    %c0_73 = arith.constant 0 : index
    %c0_74 = arith.constant 0 : index
    %200 = vector.load %arg4[%c6, %c0_73, %c0_74] : memref<12x32x16xf32, #tpu.memory_space<vmem>>, vector<1x32x16xf32>
    %201 = vector.shape_cast %200 : vector<1x32x16xf32> to vector<32x16xf32>
    %cst_75 = arith.constant dense<0.000000e+00> : vector<32x16xf32>
    %202 = tpu.matmul %196, %201, %cst_75 {dimension_numbers = #tpu.dot_dimension_numbers<[1], [0], [0], [1], [0, 0, 1, 1], [], []>} : vector<32x32xf32>, vector<32x16xf32>, vector<32x16xf32> -> vector<32x16xf32>
    %203 = vector.extract_strided_slice %197 {offsets = [0, 0], sizes = [1, 16], strides = [1, 1]} : vector<1x96xf32> to vector<1x16xf32>
    %204 = vector.broadcast %203 : vector<1x16xf32> to vector<32x16xf32>
    %205 = arith.addf %202, %204 : vector<32x16xf32>
    %c7 = arith.constant 7 : index
    %c0_76 = arith.constant 0 : index
    %c0_77 = arith.constant 0 : index
    %206 = vector.load %arg4[%c7, %c0_76, %c0_77] : memref<12x32x16xf32, #tpu.memory_space<vmem>>, vector<1x32x16xf32>
    %207 = vector.shape_cast %206 : vector<1x32x16xf32> to vector<32x16xf32>
    %cst_78 = arith.constant dense<0.000000e+00> : vector<32x16xf32>
    %208 = tpu.matmul %196, %207, %cst_78 {dimension_numbers = #tpu.dot_dimension_numbers<[1], [0], [0], [1], [0, 0, 1, 1], [], []>} : vector<32x32xf32>, vector<32x16xf32>, vector<32x16xf32> -> vector<32x16xf32>
    %209 = vector.extract_strided_slice %197 {offsets = [0, 32], sizes = [1, 16], strides = [1, 1]} : vector<1x96xf32> to vector<1x16xf32>
    %210 = vector.broadcast %209 : vector<1x16xf32> to vector<32x16xf32>
    %211 = arith.addf %208, %210 : vector<32x16xf32>
    %c8 = arith.constant 8 : index
    %c0_79 = arith.constant 0 : index
    %c0_80 = arith.constant 0 : index
    %212 = vector.load %arg4[%c8, %c0_79, %c0_80] : memref<12x32x16xf32, #tpu.memory_space<vmem>>, vector<1x32x16xf32>
    %213 = vector.shape_cast %212 : vector<1x32x16xf32> to vector<32x16xf32>
    %cst_81 = arith.constant dense<0.000000e+00> : vector<32x16xf32>
    %214 = tpu.matmul %196, %213, %cst_81 {dimension_numbers = #tpu.dot_dimension_numbers<[1], [0], [0], [1], [0, 0, 1, 1], [], []>} : vector<32x32xf32>, vector<32x16xf32>, vector<32x16xf32> -> vector<32x16xf32>
    %215 = vector.extract_strided_slice %197 {offsets = [0, 64], sizes = [1, 16], strides = [1, 1]} : vector<1x96xf32> to vector<1x16xf32>
    %216 = vector.broadcast %215 : vector<1x16xf32> to vector<32x16xf32>
    %217 = arith.addf %214, %216 : vector<32x16xf32>
    %cst_82 = arith.constant dense<0.000000e+00> : vector<32x32xf32>
    %218 = tpu.matmul %205, %211, %cst_82 {dimension_numbers = #tpu.dot_dimension_numbers<[1], [1], [0], [0], [0, 0, 1, 0], [], []>} : vector<32x16xf32>, vector<32x16xf32>, vector<32x32xf32> -> vector<32x32xf32>
    %cst_83 = arith.constant 2.500000e-01 : f32
    %219 = vector.broadcast %cst_83 : f32 to vector<32x32xf32>
    %220 = arith.mulf %218, %219 : vector<32x32xf32>
    %221 = arith.addf %220, %19 : vector<32x32xf32>
    %cst_84 = arith.constant dense<0xFF800000> : vector<32xf32>
    %222 = vector.multi_reduction <maximumf>, %221, %cst_84 [1] : vector<32x32xf32> to vector<32xf32>
    %223 = vector.shape_cast %222 : vector<32xf32> to vector<32x1xf32>
    %224 = vector.broadcast %223 : vector<32x1xf32> to vector<32x32xf32>
    %225 = arith.subf %221, %224 : vector<32x32xf32>
    %226 = math.exp %225 : vector<32x32xf32>
    %cst_85 = arith.constant dense<0.000000e+00> : vector<32xf32>
    %227 = vector.multi_reduction <add>, %226, %cst_85 [1] : vector<32x32xf32> to vector<32xf32>
    %228 = vector.shape_cast %227 : vector<32xf32> to vector<32x1xf32>
    %229 = tpu.reciprocal %228 {approx = true} : vector<32x1xf32> -> vector<32x1xf32>
    %230 = vector.broadcast %229 : vector<32x1xf32> to vector<32x32xf32>
    %231 = arith.mulf %226, %230 : vector<32x32xf32>
    %cst_86 = arith.constant dense<0.000000e+00> : vector<32x16xf32>
    %232 = tpu.matmul %231, %217, %cst_86 {dimension_numbers = #tpu.dot_dimension_numbers<[1], [0], [0], [1], [0, 0, 1, 1], [], []>} : vector<32x32xf32>, vector<32x16xf32>, vector<32x16xf32> -> vector<32x16xf32>
    %233 = vector.extract_strided_slice %199 {offsets = [0, 0], sizes = [16, 32], strides = [1, 1]} : vector<32x32xf32> to vector<16x32xf32>
    %cst_87 = arith.constant dense<0.000000e+00> : vector<32x32xf32>
    %234 = tpu.matmul %232, %233, %cst_87 {dimension_numbers = #tpu.dot_dimension_numbers<[1], [0], [0], [1], [0, 0, 1, 1], [], []>} : vector<32x16xf32>, vector<16x32xf32>, vector<32x32xf32> -> vector<32x32xf32>
    %c9 = arith.constant 9 : index
    %c0_88 = arith.constant 0 : index
    %c0_89 = arith.constant 0 : index
    %235 = vector.load %arg4[%c9, %c0_88, %c0_89] : memref<12x32x16xf32, #tpu.memory_space<vmem>>, vector<1x32x16xf32>
    %236 = vector.shape_cast %235 : vector<1x32x16xf32> to vector<32x16xf32>
    %cst_90 = arith.constant dense<0.000000e+00> : vector<32x16xf32>
    %237 = tpu.matmul %196, %236, %cst_90 {dimension_numbers = #tpu.dot_dimension_numbers<[1], [0], [0], [1], [0, 0, 1, 1], [], []>} : vector<32x32xf32>, vector<32x16xf32>, vector<32x16xf32> -> vector<32x16xf32>
    %238 = vector.extract_strided_slice %197 {offsets = [0, 16], sizes = [1, 16], strides = [1, 1]} : vector<1x96xf32> to vector<1x16xf32>
    %239 = vector.broadcast %238 : vector<1x16xf32> to vector<32x16xf32>
    %240 = arith.addf %237, %239 : vector<32x16xf32>
    %c10 = arith.constant 10 : index
    %c0_91 = arith.constant 0 : index
    %c0_92 = arith.constant 0 : index
    %241 = vector.load %arg4[%c10, %c0_91, %c0_92] : memref<12x32x16xf32, #tpu.memory_space<vmem>>, vector<1x32x16xf32>
    %242 = vector.shape_cast %241 : vector<1x32x16xf32> to vector<32x16xf32>
    %cst_93 = arith.constant dense<0.000000e+00> : vector<32x16xf32>
    %243 = tpu.matmul %196, %242, %cst_93 {dimension_numbers = #tpu.dot_dimension_numbers<[1], [0], [0], [1], [0, 0, 1, 1], [], []>} : vector<32x32xf32>, vector<32x16xf32>, vector<32x16xf32> -> vector<32x16xf32>
    %244 = vector.extract_strided_slice %197 {offsets = [0, 48], sizes = [1, 16], strides = [1, 1]} : vector<1x96xf32> to vector<1x16xf32>
    %245 = vector.broadcast %244 : vector<1x16xf32> to vector<32x16xf32>
    %246 = arith.addf %243, %245 : vector<32x16xf32>
    %c11 = arith.constant 11 : index
    %c0_94 = arith.constant 0 : index
    %c0_95 = arith.constant 0 : index
    %247 = vector.load %arg4[%c11, %c0_94, %c0_95] : memref<12x32x16xf32, #tpu.memory_space<vmem>>, vector<1x32x16xf32>
    %248 = vector.shape_cast %247 : vector<1x32x16xf32> to vector<32x16xf32>
    %cst_96 = arith.constant dense<0.000000e+00> : vector<32x16xf32>
    %249 = tpu.matmul %196, %248, %cst_96 {dimension_numbers = #tpu.dot_dimension_numbers<[1], [0], [0], [1], [0, 0, 1, 1], [], []>} : vector<32x32xf32>, vector<32x16xf32>, vector<32x16xf32> -> vector<32x16xf32>
    %250 = vector.extract_strided_slice %197 {offsets = [0, 80], sizes = [1, 16], strides = [1, 1]} : vector<1x96xf32> to vector<1x16xf32>
    %251 = vector.broadcast %250 : vector<1x16xf32> to vector<32x16xf32>
    %252 = arith.addf %249, %251 : vector<32x16xf32>
    %cst_97 = arith.constant dense<0.000000e+00> : vector<32x32xf32>
    %253 = tpu.matmul %240, %246, %cst_97 {dimension_numbers = #tpu.dot_dimension_numbers<[1], [1], [0], [0], [0, 0, 1, 0], [], []>} : vector<32x16xf32>, vector<32x16xf32>, vector<32x32xf32> -> vector<32x32xf32>
    %cst_98 = arith.constant 2.500000e-01 : f32
    %254 = vector.broadcast %cst_98 : f32 to vector<32x32xf32>
    %255 = arith.mulf %253, %254 : vector<32x32xf32>
    %256 = arith.addf %255, %19 : vector<32x32xf32>
    %cst_99 = arith.constant dense<0xFF800000> : vector<32xf32>
    %257 = vector.multi_reduction <maximumf>, %256, %cst_99 [1] : vector<32x32xf32> to vector<32xf32>
    %258 = vector.shape_cast %257 : vector<32xf32> to vector<32x1xf32>
    %259 = vector.broadcast %258 : vector<32x1xf32> to vector<32x32xf32>
    %260 = arith.subf %256, %259 : vector<32x32xf32>
    %261 = math.exp %260 : vector<32x32xf32>
    %cst_100 = arith.constant dense<0.000000e+00> : vector<32xf32>
    %262 = vector.multi_reduction <add>, %261, %cst_100 [1] : vector<32x32xf32> to vector<32xf32>
    %263 = vector.shape_cast %262 : vector<32xf32> to vector<32x1xf32>
    %264 = tpu.reciprocal %263 {approx = true} : vector<32x1xf32> -> vector<32x1xf32>
    %265 = vector.broadcast %264 : vector<32x1xf32> to vector<32x32xf32>
    %266 = arith.mulf %261, %265 : vector<32x32xf32>
    %cst_101 = arith.constant dense<0.000000e+00> : vector<32x16xf32>
    %267 = tpu.matmul %266, %252, %cst_101 {dimension_numbers = #tpu.dot_dimension_numbers<[1], [0], [0], [1], [0, 0, 1, 1], [], []>} : vector<32x32xf32>, vector<32x16xf32>, vector<32x16xf32> -> vector<32x16xf32>
    %268 = vector.extract_strided_slice %199 {offsets = [16, 0], sizes = [16, 32], strides = [1, 1]} : vector<32x32xf32> to vector<16x32xf32>
    %cst_102 = arith.constant dense<0.000000e+00> : vector<32x32xf32>
    %269 = tpu.matmul %267, %268, %cst_102 {dimension_numbers = #tpu.dot_dimension_numbers<[1], [0], [0], [1], [0, 0, 1, 1], [], []>} : vector<32x16xf32>, vector<16x32xf32>, vector<32x32xf32> -> vector<32x32xf32>
    %270 = arith.addf %234, %269 : vector<32x32xf32>
    %271 = vector.extract_strided_slice %0 {offsets = [11, 0], sizes = [1, 32], strides = [1, 1]} : vector<20x128xf32> to vector<1x32xf32>
    %272 = vector.broadcast %271 : vector<1x32xf32> to vector<32x32xf32>
    %273 = arith.addf %270, %272 : vector<32x32xf32>
    %274 = arith.addf %196, %273 : vector<32x32xf32>
    %275 = vector.extract_strided_slice %0 {offsets = [12, 0], sizes = [1, 32], strides = [1, 1]} : vector<20x128xf32> to vector<1x32xf32>
    %276 = vector.extract_strided_slice %0 {offsets = [13, 0], sizes = [1, 32], strides = [1, 1]} : vector<20x128xf32> to vector<1x32xf32>
    %cst_103 = arith.constant dense<0.000000e+00> : vector<32xf32>
    %277 = vector.multi_reduction <add>, %274, %cst_103 [1] : vector<32x32xf32> to vector<32xf32>
    %278 = vector.shape_cast %277 : vector<32xf32> to vector<32x1xf32>
    %cst_104 = arith.constant 3.200000e+01 : f32
    %279 = vector.broadcast %cst_104 : f32 to vector<32x1xf32>
    %280 = arith.divf %278, %279 : vector<32x1xf32>
    %281 = vector.broadcast %280 : vector<32x1xf32> to vector<32x32xf32>
    %282 = arith.subf %274, %281 : vector<32x32xf32>
    %283 = arith.mulf %282, %282 : vector<32x32xf32>
    %cst_105 = arith.constant dense<0.000000e+00> : vector<32xf32>
    %284 = vector.multi_reduction <add>, %283, %cst_105 [1] : vector<32x32xf32> to vector<32xf32>
    %285 = vector.shape_cast %284 : vector<32xf32> to vector<32x1xf32>
    %cst_106 = arith.constant 3.200000e+01 : f32
    %286 = vector.broadcast %cst_106 : f32 to vector<32x1xf32>
    %287 = arith.divf %285, %286 : vector<32x1xf32>
    %288 = vector.broadcast %280 : vector<32x1xf32> to vector<32x32xf32>
    %289 = arith.subf %274, %288 : vector<32x32xf32>
    %cst_107 = arith.constant 9.99999974E-6 : f32
    %290 = vector.broadcast %cst_107 : f32 to vector<32x1xf32>
    %291 = arith.addf %287, %290 : vector<32x1xf32>
    %292 = math.rsqrt %291 : vector<32x1xf32>
    %293 = vector.broadcast %292 : vector<32x1xf32> to vector<32x32xf32>
    %294 = arith.mulf %289, %293 : vector<32x32xf32>
    %295 = vector.broadcast %275 : vector<1x32xf32> to vector<32x32xf32>
    %296 = arith.mulf %294, %295 : vector<32x32xf32>
    %297 = vector.broadcast %276 : vector<1x32xf32> to vector<32x32xf32>
    %298 = arith.addf %296, %297 : vector<32x32xf32>
    %c1_108 = arith.constant 1 : index
    %c0_109 = arith.constant 0 : index
    %c0_110 = arith.constant 0 : index
    %299 = vector.load %arg6[%c1_108, %c0_109, %c0_110] : memref<2x32x64xf32, #tpu.memory_space<vmem>>, vector<1x32x64xf32>
    %300 = vector.shape_cast %299 : vector<1x32x64xf32> to vector<32x64xf32>
    %cst_111 = arith.constant dense<0.000000e+00> : vector<32x64xf32>
    %301 = tpu.matmul %298, %300, %cst_111 {dimension_numbers = #tpu.dot_dimension_numbers<[1], [0], [0], [1], [0, 0, 1, 1], [], []>} : vector<32x32xf32>, vector<32x64xf32>, vector<32x64xf32> -> vector<32x64xf32>
    %302 = vector.extract_strided_slice %0 {offsets = [14, 0], sizes = [1, 64], strides = [1, 1]} : vector<20x128xf32> to vector<1x64xf32>
    %303 = vector.broadcast %302 : vector<1x64xf32> to vector<32x64xf32>
    %304 = arith.addf %301, %303 : vector<32x64xf32>
    %305 = arith.mulf %304, %304 : vector<32x64xf32>
    %306 = arith.mulf %304, %305 : vector<32x64xf32>
    %cst_112 = arith.constant 4.471500e-02 : f32
    %307 = vector.broadcast %cst_112 : f32 to vector<32x64xf32>
    %308 = arith.mulf %307, %306 : vector<32x64xf32>
    %309 = arith.addf %304, %308 : vector<32x64xf32>
    %cst_113 = arith.constant 0.797884583 : f32
    %310 = vector.broadcast %cst_113 : f32 to vector<32x64xf32>
    %311 = arith.mulf %310, %309 : vector<32x64xf32>
    %312 = math.tanh %311 : vector<32x64xf32>
    %cst_114 = arith.constant 1.000000e+00 : f32
    %313 = vector.broadcast %cst_114 : f32 to vector<32x64xf32>
    %314 = arith.addf %313, %312 : vector<32x64xf32>
    %cst_115 = arith.constant 5.000000e-01 : f32
    %315 = vector.broadcast %cst_115 : f32 to vector<32x64xf32>
    %316 = arith.mulf %315, %314 : vector<32x64xf32>
    %317 = arith.mulf %304, %316 : vector<32x64xf32>
    %c1_116 = arith.constant 1 : index
    %c0_117 = arith.constant 0 : index
    %c0_118 = arith.constant 0 : index
    %318 = vector.load %arg7[%c1_116, %c0_117, %c0_118] : memref<2x64x32xf32, #tpu.memory_space<vmem>>, vector<1x64x32xf32>
    %319 = vector.shape_cast %318 : vector<1x64x32xf32> to vector<64x32xf32>
    %cst_119 = arith.constant dense<0.000000e+00> : vector<32x32xf32>
    %320 = tpu.matmul %317, %319, %cst_119 {dimension_numbers = #tpu.dot_dimension_numbers<[1], [0], [0], [1], [0, 0, 1, 1], [], []>} : vector<32x64xf32>, vector<64x32xf32>, vector<32x32xf32> -> vector<32x32xf32>
    %321 = vector.extract_strided_slice %0 {offsets = [15, 0], sizes = [1, 32], strides = [1, 1]} : vector<20x128xf32> to vector<1x32xf32>
    %322 = vector.broadcast %321 : vector<1x32xf32> to vector<32x32xf32>
    %323 = arith.addf %320, %322 : vector<32x32xf32>
    %324 = arith.addf %298, %323 : vector<32x32xf32>
    %325 = vector.extract_strided_slice %0 {offsets = [16, 0], sizes = [1, 32], strides = [1, 1]} : vector<20x128xf32> to vector<1x32xf32>
    %326 = vector.extract_strided_slice %0 {offsets = [17, 0], sizes = [1, 32], strides = [1, 1]} : vector<20x128xf32> to vector<1x32xf32>
    %cst_120 = arith.constant dense<0.000000e+00> : vector<32xf32>
    %327 = vector.multi_reduction <add>, %324, %cst_120 [1] : vector<32x32xf32> to vector<32xf32>
    %328 = vector.shape_cast %327 : vector<32xf32> to vector<32x1xf32>
    %cst_121 = arith.constant 3.200000e+01 : f32
    %329 = vector.broadcast %cst_121 : f32 to vector<32x1xf32>
    %330 = arith.divf %328, %329 : vector<32x1xf32>
    %331 = vector.broadcast %330 : vector<32x1xf32> to vector<32x32xf32>
    %332 = arith.subf %324, %331 : vector<32x32xf32>
    %333 = arith.mulf %332, %332 : vector<32x32xf32>
    %cst_122 = arith.constant dense<0.000000e+00> : vector<32xf32>
    %334 = vector.multi_reduction <add>, %333, %cst_122 [1] : vector<32x32xf32> to vector<32xf32>
    %335 = vector.shape_cast %334 : vector<32xf32> to vector<32x1xf32>
    %cst_123 = arith.constant 3.200000e+01 : f32
    %336 = vector.broadcast %cst_123 : f32 to vector<32x1xf32>
    %337 = arith.divf %335, %336 : vector<32x1xf32>
    %338 = vector.broadcast %330 : vector<32x1xf32> to vector<32x32xf32>
    %339 = arith.subf %324, %338 : vector<32x32xf32>
    %cst_124 = arith.constant 9.99999974E-6 : f32
    %340 = vector.broadcast %cst_124 : f32 to vector<32x1xf32>
    %341 = arith.addf %337, %340 : vector<32x1xf32>
    %342 = math.rsqrt %341 : vector<32x1xf32>
    %343 = vector.broadcast %342 : vector<32x1xf32> to vector<32x32xf32>
    %344 = arith.mulf %339, %343 : vector<32x32xf32>
    %345 = vector.broadcast %325 : vector<1x32xf32> to vector<32x32xf32>
    %346 = arith.mulf %344, %345 : vector<32x32xf32>
    %347 = vector.broadcast %326 : vector<1x32xf32> to vector<32x32xf32>
    %348 = arith.addf %346, %347 : vector<32x32xf32>
    %c0_125 = arith.constant 0 : index
    %c0_126 = arith.constant 0 : index
    %349 = vector.load %arg2[%c0_125, %c0_126] : memref<4x32xf32, #tpu.memory_space<vmem>>, vector<4x32xf32>
    %cst_127 = arith.constant dense<0.000000e+00> : vector<4x32xf32>
    %350 = tpu.matmul %349, %348, %cst_127 {dimension_numbers = #tpu.dot_dimension_numbers<[1], [0], [0], [1], [0, 0, 1, 1], [], []>} : vector<4x32xf32>, vector<32x32xf32>, vector<4x32xf32> -> vector<4x32xf32>
    %c0_128 = arith.constant 0 : index
    %c0_129 = arith.constant 0 : index
    %351 = vector.load %arg8[%c0_128, %c0_129] : memref<32x32xf32, #tpu.memory_space<vmem>>, vector<32x32xf32>
    %cst_130 = arith.constant dense<0.000000e+00> : vector<4x32xf32>
    %352 = tpu.matmul %350, %351, %cst_130 {dimension_numbers = #tpu.dot_dimension_numbers<[1], [0], [0], [1], [0, 0, 1, 1], [], []>} : vector<4x32xf32>, vector<32x32xf32>, vector<4x32xf32> -> vector<4x32xf32>
    %353 = vector.extract_strided_slice %0 {offsets = [18, 0], sizes = [1, 32], strides = [1, 1]} : vector<20x128xf32> to vector<1x32xf32>
    %354 = vector.broadcast %353 : vector<1x32xf32> to vector<4x32xf32>
    %355 = arith.addf %352, %354 : vector<4x32xf32>
    %356 = math.tanh %355 : vector<4x32xf32>
    %357 = vector.extract_strided_slice %356 {offsets = [0, 0], sizes = [2, 32], strides = [1, 1]} : vector<4x32xf32> to vector<2x32xf32>
    %c0_131 = arith.constant 0 : index
    %c0_132 = arith.constant 0 : index
    %c0_133 = arith.constant 0 : index
    %358 = vector.load %arg9[%c0_131, %c0_132, %c0_133] : memref<2x32x128xf32, #tpu.memory_space<vmem>>, vector<1x32x128xf32>
    %359 = vector.shape_cast %358 : vector<1x32x128xf32> to vector<32x128xf32>
    %cst_134 = arith.constant dense<0.000000e+00> : vector<2x128xf32>
    %360 = tpu.matmul %357, %359, %cst_134 {dimension_numbers = #tpu.dot_dimension_numbers<[1], [0], [0], [1], [0, 0, 1, 1], [], []>} : vector<2x32xf32>, vector<32x128xf32>, vector<2x128xf32> -> vector<2x128xf32>
    %361 = vector.extract_strided_slice %356 {offsets = [2, 0], sizes = [2, 32], strides = [1, 1]} : vector<4x32xf32> to vector<2x32xf32>
    %c1_135 = arith.constant 1 : index
    %c0_136 = arith.constant 0 : index
    %c0_137 = arith.constant 0 : index
    %362 = vector.load %arg9[%c1_135, %c0_136, %c0_137] : memref<2x32x128xf32, #tpu.memory_space<vmem>>, vector<1x32x128xf32>
    %363 = vector.shape_cast %362 : vector<1x32x128xf32> to vector<32x128xf32>
    %cst_138 = arith.constant dense<0.000000e+00> : vector<2x128xf32>
    %364 = tpu.matmul %361, %363, %cst_138 {dimension_numbers = #tpu.dot_dimension_numbers<[1], [0], [0], [1], [0, 0, 1, 1], [], []>} : vector<2x32xf32>, vector<32x128xf32>, vector<2x128xf32> -> vector<2x128xf32>
    %365 = arith.addf %360, %364 : vector<2x128xf32>
    %366 = vector.extract_strided_slice %0 {offsets = [19, 0], sizes = [1, 128], strides = [1, 1]} : vector<20x128xf32> to vector<1x128xf32>
    %367 = vector.broadcast %366 : vector<1x128xf32> to vector<2x128xf32>
    %368 = arith.addf %365, %367 : vector<2x128xf32>
    %c0_139 = arith.constant 0 : index
    %c0_140 = arith.constant 0 : index
    %369 = vector.load %arg10[%c0_139, %c0_140] : memref<2x128xf32, #tpu.memory_space<vmem>>, vector<2x128xf32>
    tpu.vector_store %arg10[%c0_139, %c0_140], %368 {strides = array<i32>} : memref<2x128xf32, #tpu.memory_space<vmem>>, vector<2x128xf32>,
    return
  }
}

</mosaic_0001>

<llo_original>
// kernel: news_encoder_forward.1
$region0: #{news_encoder_forward.1}
  #allocation0 [shape = 'u32[]', space=smem, size = 0x4, offset = 0x4, fixed_abs, tag = 'smem constant byte address 0x4 - core index']
  #allocation1 [shape = 'u32[144,128]{1,0:T(1,128)}', space=vmem, size = 0x12000, scoped, tag = 'internal scratch']
  %s0 = inlined_call_operand.vmem [shape: f32[32,32], index: 0, kind: input, shape index: {}]
  %s1 = inlined_call_operand.vmem [shape: f32[1,32], index: 1, kind: input, shape index: {}]
  %s2 = inlined_call_operand.vmem [shape: f32[4,32], index: 2, kind: input, shape index: {}]
  %s3 = inlined_call_operand.vmem [shape: f32[20,128], index: 3, kind: input, shape index: {}]
  %s4 = inlined_call_operand.vmem [shape: f32[12,32,16], index: 4, kind: input, shape index: {}]
  %s5 = inlined_call_operand.vmem [shape: f32[2,32,32], index: 5, kind: input, shape index: {}]
  %s6 = inlined_call_operand.vmem [shape: f32[2,32,64], index: 6, kind: input, shape index: {}]
  %s7 = inlined_call_operand.vmem [shape: f32[2,64,32], index: 7, kind: input, shape index: {}]
  %s8 = inlined_call_operand.vmem [shape: f32[32,32], index: 8, kind: input, shape index: {}]
  %s9 = inlined_call_operand.vmem [shape: f32[2,32,128], index: 9, kind: input, shape index: {}]
  %s10 = inlined_call_operand.hbm [shape: f32[2,128], index: 10, kind: output, shape index: {}]
  %s11 = sld [smem:[#allocation0]]
  $region50: #{news_encoder_forward.1} parent=0
    _
  %s13 = ssub.s32 1, %s11
  %s14 = scalar_select 0, %s13, %s11
  $region1: #{news_encoder_forward.1} parent=0
    #allocation2 [shape = 'u8[1024]{0}', space=vmem, size = 0x400, scoped, tag = 'output window, operand 0, single buffered']
    #allocation3 [shape = 's32[1]{0}', space=sflag, size = 0x4, scoped, tag = 'scoped memory for news_encoder_forward.1']
    %15 = vsyncpa [#allocation3], 0
    // Predicated region
    $region2: #{news_encoder_forward.1} parent=1 // pred_check
      _
    $region3: #{news_encoder_forward.1} parent=1 // pred_check_branch
      %17 = sbr.rel (0) target = $region5
    $region4: #{news_encoder_forward.1} parent=1 // pred_region
      _
    $region5: #{news_encoder_forward.1} parent=1 // pred_fallthru
      _
    // Predicated region
    $region6: #{news_encoder_forward.1} parent=1 // pred_check
      _
    $region7: #{news_encoder_forward.1} parent=1 // pred_check_branch
      %19 = sbr.rel (0) target = $region9
    $region8: #{news_encoder_forward.1} parent=1 // pred_region
      _
    $region9: #{news_encoder_forward.1} parent=1 // pred_fallthru
      _
    // Predicated region
    $region10: #{news_encoder_forward.1} parent=1 // pred_check
      _
    $region11: #{news_encoder_forward.1} parent=1 // pred_check_branch
      %21 = sbr.rel (0) target = $region13
    $region12: #{news_encoder_forward.1} parent=1 // pred_region
      _
    $region13: #{news_encoder_forward.1} parent=1 // pred_fallthru
      _
    // Predicated region
    $region14: #{news_encoder_forward.1} parent=1 // pred_check
      _
    $region15: #{news_encoder_forward.1} parent=1 // pred_check_branch
      %23 = sbr.rel (0) target = $region17
    $region16: #{news_encoder_forward.1} parent=1 // pred_region
      _
    $region17: #{news_encoder_forward.1} parent=1 // pred_fallthru
      _
    // Predicated region
    $region18: #{news_encoder_forward.1} parent=1 // pred_check
      _
    $region19: #{news_encoder_forward.1} parent=1 // pred_check_branch
      %25 = sbr.rel (0) target = $region21
    $region20: #{news_encoder_forward.1} parent=1 // pred_region
      _
    $region21: #{news_encoder_forward.1} parent=1 // pred_fallthru
      _
    // Predicated region
    $region22: #{news_encoder_forward.1} parent=1 // pred_check
      _
    $region23: #{news_encoder_forward.1} parent=1 // pred_check_branch
      %27 = sbr.rel (0) target = $region25
    $region24: #{news_encoder_forward.1} parent=1 // pred_region
      _
    $region25: #{news_encoder_forward.1} parent=1 // pred_fallthru
      _
    // Predicated region
    $region26: #{news_encoder_forward.1} parent=1 // pred_check
      _
    $region27: #{news_encoder_forward.1} parent=1 // pred_check_branch
      %29 = sbr.rel (0) target = $region29
    $region28: #{news_encoder_forward.1} parent=1 // pred_region
      _
    $region29: #{news_encoder_forward.1} parent=1 // pred_fallthru
      _
    // Predicated region
    $region30: #{news_encoder_forward.1} parent=1 // pred_check
      _
    $region31: #{news_encoder_forward.1} parent=1 // pred_check_branch
      %31 = sbr.rel (0) target = $region33
    $region32: #{news_encoder_forward.1} parent=1 // pred_region
      _
    $region33: #{news_encoder_forward.1} parent=1 // pred_fallthru
      _
    // Predicated region
    $region34: #{news_encoder_forward.1} parent=1 // pred_check
      _
    $region35: #{news_encoder_forward.1} parent=1 // pred_check_branch
      %33 = sbr.rel (0) target = $region37
    $region36: #{news_encoder_forward.1} parent=1 // pred_region
      _
    $region37: #{news_encoder_forward.1} parent=1 // pred_fallthru
      _
    // Predicated region
    $region38: #{news_encoder_forward.1} parent=1 // pred_check
      _
    $region39: #{news_encoder_forward.1} parent=1 // pred_check_branch
      %35 = sbr.rel (0) target = $region41
    $region40: #{news_encoder_forward.1} parent=1 // pred_region
      _
    $region41: #{news_encoder_forward.1} parent=1 // pred_fallthru
      _
    %v36 = vld [vmem:[%s3] sm:$0xff]
    %v37 = vld [vmem:[%s3 + $0x8] sm:$0xff]
    %v38 = vld [vmem:[%s3 + $0x10] sm:$0xf]
    %v39 = vlaneseq
    %v40 = vshrl.u32 %v39, 7
    %v41 = vadd.s32 %v40, 8
    %v42 = vadd.s32 %v40, 16
    %v43 = vadd.s32 %v40, 24
    %v44 = vcvt.s32.f32 %v40
    %v45 = vcvt.s32.f32 %v41
    %v46 = vcvt.s32.f32 %v42
    %v47 = vcvt.s32.f32 %v43
    %v48 = vlaneseq
    %v49 = vand.u32 %v48, 127
    %v50 = vcvt.s32.f32 %v49
    %v51 = vmul.f32 %v44, 0.125
    %v52 = vmul.f32 %v45, 0.125
    %v53 = vmul.f32 %v46, 0.125
    %v54 = vmul.f32 %v47, 0.125
    %v55 = vfloor.f32 %v51
    %v56 = vfloor.f32 %v52
    %v57 = vfloor.f32 %v53
    %v58 = vfloor.f32 %v54
    %v59 = vmul.f32 %v50, 0.125
    %v60 = vfloor.f32 %v59
    %vm61 = vcmp.eq.f32.partialorder %v55, %v60
    %vm62 = vcmp.eq.f32.partialorder %v56, %v60
    %vm63 = vcmp.eq.f32.partialorder %v57, %v60
    %vm64 = vcmp.eq.f32.partialorder %v58, %v60
    %v65 = vld [vmem:[%s1] sm:$0x1]
    %vm66 = vcmp.gt.f32.partialorder %v65, 0.0
    %v67 = vsel %vm66, 1, 0
    %v68 = vlaneseq
    %v69 = vshrl.u32 %v68, 7
    %v70 = vsub.s32 0, %v69
    %v71 = vrot.slane %v67, %v70
    %vm72 = vcmp.eq.s32.totalorder %v71, 1
    %vm73 = vmand %vm61, %vm72
    %vm74 = vmand %vm62, %vm72
    %vm75 = vmand %vm63, %vm72
    %vm76 = vmand %vm64, %vm72
    %v77 = vsel %vm73, 0.0, -1e+09
    %v78 = vsel %vm74, 0.0, -1e+09
    %v79 = vsel %vm75, 0.0, -1e+09
    %v80 = vsel %vm76, 0.0, -1e+09
    %v81 = vld [vmem:[%s0] sm:$0xff]
    %v82 = vld [vmem:[%s0 + $0x8] sm:$0xff]
    %v83 = vld [vmem:[%s0 + $0x10] sm:$0xff]
    %v84 = vld [vmem:[%s0 + $0x18] sm:$0xff]
    %vm85 = vcmask 261120
    %v86 = vsel %vm85, %v81, 0.0
    %87 = vadd.xlane.f32.xlu0 %v86
    %v88 = vpop.xlane.xlu0 %87
    %v89 = vsel %vm85, %v82, 0.0
    %90 = vadd.xlane.f32.xlu0 %v89
    %v91 = vpop.xlane.xlu0 %90
    %v92 = vsel %vm85, %v83, 0.0
    %93 = vadd.xlane.f32.xlu0 %v92
    %v94 = vpop.xlane.xlu0 %93
    %v95 = vsel %vm85, %v84, 0.0
    %96 = vadd.xlane.f32.xlu0 %v95
    %v97 = vpop.xlane.xlu0 %96
    %v98 = vrcp.pop 32.0
    %v99 = vmul.f32 %v88, %v98
    %v100 = vmul.f32 %v91, %v98
    %v101 = vmul.f32 %v94, %v98
    %v102 = vmul.f32 %v97, %v98
    %v103 = vsub.f32 %v81, %v99
    %v104 = vsub.f32 %v82, %v100
    %v105 = vsub.f32 %v83, %v101
    %v106 = vsub.f32 %v84, %v102
    %v107 = vmul.f32 %v103, %v103
    %v108 = vmul.f32 %v104, %v104
    %v109 = vmul.f32 %v105, %v105
    %v110 = vmul.f32 %v106, %v106
    %v111 = vsel %vm85, %v107, 0.0
    %112 = vadd.xlane.f32.xlu0 %v111
    %v113 = vpop.xlane.xlu0 %112
    %v114 = vsel %vm85, %v108, 0.0
    %115 = vadd.xlane.f32.xlu0 %v114
    %v116 = vpop.xlane.xlu0 %115
    %v117 = vsel %vm85, %v109, 0.0
    %118 = vadd.xlane.f32.xlu0 %v117
    %v119 = vpop.xlane.xlu0 %118
    %v120 = vsel %vm85, %v110, 0.0
    %121 = vadd.xlane.f32.xlu0 %v120
    %v122 = vpop.xlane.xlu0 %121
    %v123 = vmul.f32 %v113, %v98
    %v124 = vmul.f32 %v116, %v98
    %v125 = vmul.f32 %v119, %v98
    %v126 = vmul.f32 %v122, %v98
    %v127 = vadd.f32 %v123, 1e-05
    %v128 = vadd.f32 %v124, 1e-05
    %v129 = vadd.f32 %v125, 1e-05
    %v130 = vadd.f32 %v126, 1e-05
    %v131 = vrsqrt.pop %v127
    %v132 = vrsqrt.pop %v128
    %v133 = vrsqrt.pop %v129
    %v134 = vrsqrt.pop %v130
    %v135 = vmul.f32 %v103, %v131
    %v136 = vmul.f32 %v104, %v132
    %v137 = vmul.f32 %v105, %v133
    %v138 = vmul.f32 %v106, %v134
    %v139 = vlaneseq
    %v140 = vshrl.u32 %v139, 7
    %v141 = vsub.s32 0, %v140
    %v142 = vrot.slane %v36, %v141
    %v143 = vmul.f32 %v135, %v142
    %v144 = vmul.f32 %v136, %v142
    %v145 = vmul.f32 %v137, %v142
    %v146 = vmul.f32 %v138, %v142
    %v147 = vlaneseq
    %v148 = vshrl.u32 %v147, 7
    %v149 = vsub.s32 1, %v148
    %v150 = vrot.slane %v36, %v149
    %v151 = vadd.f32 %v143, %v150
    %v152 = vadd.f32 %v144, %v150
    %v153 = vadd.f32 %v145, %v150
    %v154 = vadd.f32 %v146, %v150
    %v155 = vld [vmem:[%s5] sm:$0xff]
    %v156 = vld [vmem:[%s5 + $0x8] sm:$0xff]
    %v157 = vld [vmem:[%s5 + $0x10] sm:$0xff]
    %v158 = vld [vmem:[%s5 + $0x18] sm:$0xff]
    %v159 = vld [vmem:[%s4] sm:$0xff]
    %v160 = vld [vmem:[%s4 + $0x8] sm:$0xff]
    %v161 = vld [vmem:[%s4 + $0x10] sm:$0xff]
    %v162 = vld [vmem:[%s4 + $0x18] sm:$0xff]
    %v163 = vlaneseq
    %v164 = vshrl.u32 %v163, 7
    %v165 = vsub.s32 2, %v164
    %v166 = vrot.slane %v36, %v165
    %v168 = vsel %vm85, %v151, 0
    %v171 = vsel %vm85, %v152, 0
    %v174 = vsel %vm85, %v153, 0
    %v177 = vsel %vm85, %v154, 0
    %179 = vmatprep.subr.mxu0 0.0
    %180 = vmatpush1.msra.mxu0 0.0
    %181 = vmatprep.subr.mxu0 0.0
    %182 = vmatpush1.msra.mxu0 0.0
    %183 = vmatprep.subr.mxu0 0.0
    %184 = vmatpush1.msra.mxu0 0.0
    %185 = vmatprep.subr.mxu0 0.0
    %186 = vmatpush1.msra.mxu0 0.0
    %187 = vmatprep.subr.mxu0 0.0
    %188 = vmatpush1.msra.mxu0 0.0
    %189 = vmatprep.subr.mxu0 0.0
    %190 = vmatpush1.msra.mxu0 0.0
    %191 = vmatprep.subr.mxu0 0.0
    %192 = vmatpush1.msra.mxu0 0.0
    %193 = vmatprep.subr.mxu0 0.0
    %194 = vmatpush1.msra.mxu0 0.0
    %195 = vmatprep.subr.mxu0 0.0
    %196 = vmatpush1.msra.mxu0 0.0
    %197 = vmatprep.subr.mxu0 0.0
    %198 = vmatpush1.msra.mxu0 0.0
    %199 = vmatprep.subr.mxu0 0.0
    %200 = vmatpush1.msra.mxu0 0.0
    %201 = vmatprep.subr.mxu0 0.0
    %202 = vmatpush1.msra.mxu0 0.0
    %203 = vmatprep.subr.mxu0 0.0
    %204 = vmatpush1.msra.mxu0 %v162
    %205 = vmatprep.subr.mxu0 0.0
    %206 = vmatpush1.msra.mxu0 %v161
    %207 = vmatprep.subr.mxu0 0.0
    %208 = vmatpush1.msra.mxu0 %v160
    %209 = vmatprep.subr.mxu0 0.0
    %210 = vmatpush1.msra.mxu0 %v159
    %211 = vmatprep.subr.mxu0 0.0
    %212 = vmatpush2.msra.mxu0 0.0
    %213 = vmatprep.subr.mxu0 0.0
    %214 = vmatpush2.msra.mxu0 0.0
    %215 = vmatprep.subr.mxu0 0.0
    %216 = vmatpush2.msra.mxu0 0.0
    %217 = vmatprep.subr.mxu0 0.0
    %218 = vmatpush2.msra.mxu0 0.0
    %219 = vmatprep.subr.mxu0 0.0
    %220 = vmatpush2.msra.mxu0 0.0
    %221 = vmatprep.subr.mxu0 0.0
    %222 = vmatpush2.msra.mxu0 0.0
    %223 = vmatprep.subr.mxu0 0.0
    %224 = vmatpush2.msra.mxu0 0.0
    %225 = vmatprep.subr.mxu0 0.0
    %226 = vmatpush2.msra.mxu0 0.0
    %227 = vmatprep.subr.mxu0 0.0
    %228 = vmatpush2.msra.mxu0 0.0
    %229 = vmatprep.subr.mxu0 0.0
    %230 = vmatpush2.msra.mxu0 0.0
    %231 = vmatprep.subr.mxu0 0.0
    %232 = vmatpush2.msra.mxu0 0.0
    %233 = vmatprep.subr.mxu0 0.0
    %234 = vmatpush2.msra.mxu0 0.0
    %235 = vmatprep.subr.mxu0 0.0
    %236 = vmatpush2.msra.mxu0 0.0
    %237 = vmatprep.subr.mxu0 0.0
    %238 = vmatpush2.msra.mxu0 0.0
    %239 = vmatprep.subr.mxu0 0.0
    %240 = vmatpush2.msra.mxu0 0.0
    %241 = vmatprep.subr.mxu0 0.0
    %242 = vmatpush2.msra.mxu0 0.0
    %243 = vmatprep.mubr.f32.mxu0 0.0
    %244 = vmatmul.mubr.f32.gmra.mxu0 %v168
    %v245 = vpop.f32.mrf.mxu0
    %v246 = vadd.f32 %v166, %v245
    %v247 = vpop.f32.mrf.mxu0
    %248 = vmatprep.mubr.f32.mxu0 0.0
    %249 = vmatmul.mubr.f32.gmra.mxu0 %v171
    %v250 = vpop.f32.mrf.mxu0
    %v251 = vadd.f32 %v166, %v250
    %v252 = vpop.f32.mrf.mxu0
    %253 = vmatprep.mubr.f32.mxu0 0.0
    %254 = vmatmul.mubr.f32.gmra.mxu0 %v174
    %v255 = vpop.f32.mrf.mxu0
    %v256 = vadd.f32 %v166, %v255
    %v257 = vpop.f32.mrf.mxu0
    %258 = vmatprep.mubr.f32.mxu0 0.0
    %259 = vmatmul.mubr.f32.gmra.mxu0 %v177
    %v260 = vpop.f32.mrf.mxu0
    %v261 = vadd.f32 %v166, %v260
    %v262 = vpop.f32.mrf.mxu0
    %263 = vdwg.mxu0
    %s264 = scalar_lea.vmem %s4, 32
    %v265 = vld [vmem:[%s264] sm:$0xff]
    %v266 = vld [vmem:[%s264 + $0x8] sm:$0xff]
    %v267 = vld [vmem:[%s264 + $0x10] sm:$0xff]
    %v268 = vld [vmem:[%s264 + $0x18] sm:$0xff]
    %270 = vrot.lane.b32.xlu0 %v166, 96
    %v271 = vpop.permute.xlu0 %270
    %273 = vmatprep.subr.mxu0 0.0
    %274 = vmatpush1.msra.mxu0 0.0
    %275 = vmatprep.subr.mxu0 0.0
    %276 = vmatpush1.msra.mxu0 0.0
    %277 = vmatprep.subr.mxu0 0.0
    %278 = vmatpush1.msra.mxu0 0.0
    %279 = vmatprep.subr.mxu0 0.0
    %280 = vmatpush1.msra.mxu0 0.0
    %281 = vmatprep.subr.mxu0 0.0
    %282 = vmatpush1.msra.mxu0 0.0
    %283 = vmatprep.subr.mxu0 0.0
    %284 = vmatpush1.msra.mxu0 0.0
    %285 = vmatprep.subr.mxu0 0.0
    %286 = vmatpush1.msra.mxu0 0.0
    %287 = vmatprep.subr.mxu0 0.0
    %288 = vmatpush1.msra.mxu0 0.0
    %289 = vmatprep.subr.mxu0 0.0
    %290 = vmatpush1.msra.mxu0 0.0
    %291 = vmatprep.subr.mxu0 0.0
    %292 = vmatpush1.msra.mxu0 0.0
    %293 = vmatprep.subr.mxu0 0.0
    %294 = vmatpush1.msra.mxu0 0.0
    %295 = vmatprep.subr.mxu0 0.0
    %296 = vmatpush1.msra.mxu0 0.0
    %297 = vmatprep.subr.mxu0 0.0
    %298 = vmatpush1.msra.mxu0 %v268
    %299 = vmatprep.subr.mxu0 0.0
    %300 = vmatpush1.msra.mxu0 %v267
    %301 = vmatprep.subr.mxu0 0.0
    %302 = vmatpush1.msra.mxu0 %v266
    %303 = vmatprep.subr.mxu0 0.0
    %304 = vmatpush1.msra.mxu0 %v265
    %305 = vmatprep.subr.mxu0 0.0
    %306 = vmatpush2.msra.mxu0 0.0
    %307 = vmatprep.subr.mxu0 0.0
    %308 = vmatpush2.msra.mxu0 0.0
    %309 = vmatprep.subr.mxu0 0.0
    %310 = vmatpush2.msra.mxu0 0.0
    %311 = vmatprep.subr.mxu0 0.0
    %312 = vmatpush2.msra.mxu0 0.0
    %313 = vmatprep.subr.mxu0 0.0
    %314 = vmatpush2.msra.mxu0 0.0
    %315 = vmatprep.subr.mxu0 0.0
    %316 = vmatpush2.msra.mxu0 0.0
    %317 = vmatprep.subr.mxu0 0.0
    %318 = vmatpush2.msra.mxu0 0.0
    %319 = vmatprep.subr.mxu0 0.0
    %320 = vmatpush2.msra.mxu0 0.0
    %321 = vmatprep.subr.mxu0 0.0
    %322 = vmatpush2.msra.mxu0 0.0
    %323 = vmatprep.subr.mxu0 0.0
    %324 = vmatpush2.msra.mxu0 0.0
    %325 = vmatprep.subr.mxu0 0.0
    %326 = vmatpush2.msra.mxu0 0.0
    %327 = vmatprep.subr.mxu0 0.0
    %328 = vmatpush2.msra.mxu0 0.0
    %329 = vmatprep.subr.mxu0 0.0
    %330 = vmatpush2.msra.mxu0 0.0
    %331 = vmatprep.subr.mxu0 0.0
    %332 = vmatpush2.msra.mxu0 0.0
    %333 = vmatprep.subr.mxu0 0.0
    %334 = vmatpush2.msra.mxu0 0.0
    %335 = vmatprep.subr.mxu0 0.0
    %336 = vmatpush2.msra.mxu0 0.0
    %337 = vmatprep.mubr.f32.mxu0 0.0
    %338 = vmatmul.mubr.f32.gmra.mxu0 %v168
    %v339 = vpop.f32.mrf.mxu0
    %v340 = vadd.f32 %v271, %v339
    %v341 = vpop.f32.mrf.mxu0
    %342 = vmatprep.mubr.f32.mxu0 0.0
    %343 = vmatmul.mubr.f32.gmra.mxu0 %v171
    %v344 = vpop.f32.mrf.mxu0
    %v345 = vadd.f32 %v271, %v344
    %v346 = vpop.f32.mrf.mxu0
    %347 = vmatprep.mubr.f32.mxu0 0.0
    %348 = vmatmul.mubr.f32.gmra.mxu0 %v174
    %v349 = vpop.f32.mrf.mxu0
    %v350 = vadd.f32 %v271, %v349
    %v351 = vpop.f32.mrf.mxu0
    %352 = vmatprep.mubr.f32.mxu0 0.0
    %353 = vmatmul.mubr.f32.gmra.mxu0 %v177
    %v354 = vpop.f32.mrf.mxu0
    %v355 = vadd.f32 %v271, %v354
    %v356 = vpop.f32.mrf.mxu0
    %357 = vdwg.mxu0
    %s358 = scalar_lea.vmem %s4, 64
    %v359 = vld [vmem:[%s358] sm:$0xff]
    %v360 = vld [vmem:[%s358 + $0x8] sm:$0xff]
    %v361 = vld [vmem:[%s358 + $0x10] sm:$0xff]
    %v362 = vld [vmem:[%s358 + $0x18] sm:$0xff]
    %363 = vrot.lane.b32.xlu0 %v166, 64
    %v364 = vpop.permute.xlu0 %363
    %366 = vmatprep.subr.mxu0 0.0
    %367 = vmatpush1.msra.mxu0 0.0
    %368 = vmatprep.subr.mxu0 0.0
    %369 = vmatpush1.msra.mxu0 0.0
    %370 = vmatprep.subr.mxu0 0.0
    %371 = vmatpush1.msra.mxu0 0.0
    %372 = vmatprep.subr.mxu0 0.0
    %373 = vmatpush1.msra.mxu0 0.0
    %374 = vmatprep.subr.mxu0 0.0
    %375 = vmatpush1.msra.mxu0 0.0
    %376 = vmatprep.subr.mxu0 0.0
    %377 = vmatpush1.msra.mxu0 0.0
    %378 = vmatprep.subr.mxu0 0.0
    %379 = vmatpush1.msra.mxu0 0.0
    %380 = vmatprep.subr.mxu0 0.0
    %381 = vmatpush1.msra.mxu0 0.0
    %382 = vmatprep.subr.mxu0 0.0
    %383 = vmatpush1.msra.mxu0 0.0
    %384 = vmatprep.subr.mxu0 0.0
    %385 = vmatpush1.msra.mxu0 0.0
    %386 = vmatprep.subr.mxu0 0.0
    %387 = vmatpush1.msra.mxu0 0.0
    %388 = vmatprep.subr.mxu0 0.0
    %389 = vmatpush1.msra.mxu0 0.0
    %390 = vmatprep.subr.mxu0 0.0
    %391 = vmatpush1.msra.mxu0 %v362
    %392 = vmatprep.subr.mxu0 0.0
    %393 = vmatpush1.msra.mxu0 %v361
    %394 = vmatprep.subr.mxu0 0.0
    %395 = vmatpush1.msra.mxu0 %v360
    %396 = vmatprep.subr.mxu0 0.0
    %397 = vmatpush1.msra.mxu0 %v359
    %398 = vmatprep.subr.mxu0 0.0
    %399 = vmatpush2.msra.mxu0 0.0
    %400 = vmatprep.subr.mxu0 0.0
    %401 = vmatpush2.msra.mxu0 0.0
    %402 = vmatprep.subr.mxu0 0.0
    %403 = vmatpush2.msra.mxu0 0.0
    %404 = vmatprep.subr.mxu0 0.0
    %405 = vmatpush2.msra.mxu0 0.0
    %406 = vmatprep.subr.mxu0 0.0
    %407 = vmatpush2.msra.mxu0 0.0
    %408 = vmatprep.subr.mxu0 0.0
    %409 = vmatpush2.msra.mxu0 0.0
    %410 = vmatprep.subr.mxu0 0.0
    %411 = vmatpush2.msra.mxu0 0.0
    %412 = vmatprep.subr.mxu0 0.0
    %413 = vmatpush2.msra.mxu0 0.0
    %414 = vmatprep.subr.mxu0 0.0
    %415 = vmatpush2.msra.mxu0 0.0
    %416 = vmatprep.subr.mxu0 0.0
    %417 = vmatpush2.msra.mxu0 0.0
    %418 = vmatprep.subr.mxu0 0.0
    %419 = vmatpush2.msra.mxu0 0.0
    %420 = vmatprep.subr.mxu0 0.0
    %421 = vmatpush2.msra.mxu0 0.0
    %422 = vmatprep.subr.mxu0 0.0
    %423 = vmatpush2.msra.mxu0 0.0
    %424 = vmatprep.subr.mxu0 0.0
    %425 = vmatpush2.msra.mxu0 0.0
    %426 = vmatprep.subr.mxu0 0.0
    %427 = vmatpush2.msra.mxu0 0.0
    %428 = vmatprep.subr.mxu0 0.0
    %429 = vmatpush2.msra.mxu0 0.0
    %430 = vmatprep.mubr.f32.mxu0 0.0
    %431 = vmatmul.mubr.f32.gmra.mxu0 %v168
    %v432 = vpop.f32.mrf.mxu0
    %v433 = vadd.f32 %v364, %v432
    %v434 = vpop.f32.mrf.mxu0
    %435 = vmatprep.mubr.f32.mxu0 0.0
    %436 = vmatmul.mubr.f32.gmra.mxu0 %v171
    %v437 = vpop.f32.mrf.mxu0
    %v438 = vadd.f32 %v364, %v437
    %v439 = vpop.f32.mrf.mxu0
    %440 = vmatprep.mubr.f32.mxu0 0.0
    %441 = vmatmul.mubr.f32.gmra.mxu0 %v174
    %v442 = vpop.f32.mrf.mxu0
    %v443 = vadd.f32 %v364, %v442
    %v444 = vpop.f32.mrf.mxu0
    %445 = vmatprep.mubr.f32.mxu0 0.0
    %446 = vmatmul.mubr.f32.gmra.mxu0 %v177
    %v447 = vpop.f32.mrf.mxu0
    %v448 = vadd.f32 %v364, %v447
    %v449 = vpop.f32.mrf.mxu0
    %450 = vdwg.mxu0
    %vm451 = vcmask 130048
    %v453 = vsel %vm451, %v246, 0
    %v456 = vsel %vm451, %v251, 0
    %v459 = vsel %vm451, %v256, 0
    %v462 = vsel %vm451, %v261, 0
    %v465 = vsel %vm451, %v340, 0
    %v468 = vsel %vm451, %v345, 0
    %v471 = vsel %vm451, %v350, 0
    %v474 = vsel %vm451, %v355, 0
    %476 = vmatprep.subr.mxu0 0.0
    %477 = vmatpush1.xpose.msra.mxu0 0.0
    %478 = vmatprep.subr.mxu0 0.0
    %479 = vmatpush1.xpose.msra.mxu0 0.0
    %480 = vmatprep.subr.mxu0 0.0
    %481 = vmatpush1.xpose.msra.mxu0 0.0
    %482 = vmatprep.subr.mxu0 0.0
    %483 = vmatpush1.xpose.msra.mxu0 0.0
    %484 = vmatprep.subr.mxu0 0.0
    %485 = vmatpush1.xpose.msra.mxu0 0.0
    %486 = vmatprep.subr.mxu0 0.0
    %487 = vmatpush1.xpose.msra.mxu0 0.0
    %488 = vmatprep.subr.mxu0 0.0
    %489 = vmatpush1.xpose.msra.mxu0 0.0
    %490 = vmatprep.subr.mxu0 0.0
    %491 = vmatpush1.xpose.msra.mxu0 0.0
    %492 = vmatprep.subr.mxu0 0.0
    %493 = vmatpush1.xpose.msra.mxu0 0.0
    %494 = vmatprep.subr.mxu0 0.0
    %495 = vmatpush1.xpose.msra.mxu0 0.0
    %496 = vmatprep.subr.mxu0 0.0
    %497 = vmatpush1.xpose.msra.mxu0 0.0
    %498 = vmatprep.subr.mxu0 0.0
    %499 = vmatpush1.xpose.msra.mxu0 0.0
    %500 = vmatprep.subr.mxu0 0.0
    %501 = vmatpush1.xpose.msra.mxu0 %v474
    %502 = vmatprep.subr.mxu0 0.0
    %503 = vmatpush1.xpose.msra.mxu0 %v471
    %504 = vmatprep.subr.mxu0 0.0
    %505 = vmatpush1.xpose.msra.mxu0 %v468
    %506 = vmatprep.subr.mxu0 0.0
    %507 = vmatpush1.xpose.msra.mxu0 %v465
    %508 = vmatprep.subr.mxu0 0.0
    %509 = vmatpush2.xpose.msra.mxu0 0.0
    %510 = vmatprep.subr.mxu0 0.0
    %511 = vmatpush2.xpose.msra.mxu0 0.0
    %512 = vmatprep.subr.mxu0 0.0
    %513 = vmatpush2.xpose.msra.mxu0 0.0
    %514 = vmatprep.subr.mxu0 0.0
    %515 = vmatpush2.xpose.msra.mxu0 0.0
    %516 = vmatprep.subr.mxu0 0.0
    %517 = vmatpush2.xpose.msra.mxu0 0.0
    %518 = vmatprep.subr.mxu0 0.0
    %519 = vmatpush2.xpose.msra.mxu0 0.0
    %520 = vmatprep.subr.mxu0 0.0
    %521 = vmatpush2.xpose.msra.mxu0 0.0
    %522 = vmatprep.subr.mxu0 0.0
    %523 = vmatpush2.xpose.msra.mxu0 0.0
    %524 = vmatprep.subr.mxu0 0.0
    %525 = vmatpush2.xpose.msra.mxu0 0.0
    %526 = vmatprep.subr.mxu0 0.0
    %527 = vmatpush2.xpose.msra.mxu0 0.0
    %528 = vmatprep.subr.mxu0 0.0
    %529 = vmatpush2.xpose.msra.mxu0 0.0
    %530 = vmatprep.subr.mxu0 0.0
    %531 = vmatpush2.xpose.msra.mxu0 0.0
    %532 = vmatprep.subr.mxu0 0.0
    %533 = vmatpush2.xpose.msra.mxu0 0.0
    %534 = vmatprep.subr.mxu0 0.0
    %535 = vmatpush2.xpose.msra.mxu0 0.0
    %536 = vmatprep.subr.mxu0 0.0
    %537 = vmatpush2.xpose.msra.mxu0 0.0
    %538 = vmatprep.subr.mxu0 0.0
    %539 = vmatpush2.xpose.msra.mxu0 0.0
    %540 = vmatprep.mubr.f32.mxu0 0.0
    %541 = vmatmul.mubr.f32.gmra.mxu0 %v453
    %v542 = vpop.f32.mrf.mxu0
    %v543 = vadd.f32 0.0, %v542
    %v544 = vpop.f32.mrf.mxu0
    %545 = vmatprep.mubr.f32.mxu0 0.0
    %546 = vmatmul.mubr.f32.gmra.mxu0 %v456
    %v547 = vpop.f32.mrf.mxu0
    %v548 = vadd.f32 0.0, %v547
    %v549 = vpop.f32.mrf.mxu0
    %550 = vmatprep.mubr.f32.mxu0 0.0
    %551 = vmatmul.mubr.f32.gmra.mxu0 %v459
    %v552 = vpop.f32.mrf.mxu0
    %v553 = vadd.f32 0.0, %v552
    %v554 = vpop.f32.mrf.mxu0
    %555 = vmatprep.mubr.f32.mxu0 0.0
    %556 = vmatmul.mubr.f32.gmra.mxu0 %v462
    %v557 = vpop.f32.mrf.mxu0
    %v558 = vadd.f32 0.0, %v557
    %v559 = vpop.f32.mrf.mxu0
    %560 = vdwg.mxu0
    %v561 = vmul.f32 %v543, 0.25
    %v562 = vmul.f32 %v548, 0.25
    %v563 = vmul.f32 %v553, 0.25
    %v564 = vmul.f32 %v558, 0.25
    %v565 = vadd.f32 %v561, %v77
    %v566 = vadd.f32 %v562, %v78
    %v567 = vadd.f32 %v563, %v79
    %v568 = vadd.f32 %v564, %v80
    %v569 = vsel %vm85, %v565, -inf
    %570 = vmax.xlane.f32.xlu0 %v569
    %v571 = vpop.xlane.xlu0 %570
    %v572 = vsel %vm85, %v566, -inf
    %573 = vmax.xlane.f32.xlu0 %v572
    %v574 = vpop.xlane.xlu0 %573
    %v575 = vsel %vm85, %v567, -inf
    %576 = vmax.xlane.f32.xlu0 %v575
    %v577 = vpop.xlane.xlu0 %576
    %v578 = vsel %vm85, %v568, -inf
    %579 = vmax.xlane.f32.xlu0 %v578
    %v580 = vpop.xlane.xlu0 %579
    %v581 = vsub.f32 %v565, %v571
    %v582 = vsub.f32 %v566, %v574
    %v583 = vsub.f32 %v567, %v577
    %v584 = vsub.f32 %v568, %v580
    %v585 = vmul.f32 %v581, 1.442695
    %v586 = vpow.pop %v585
    %v587 = vmul.f32 %v582, 1.442695
    %v588 = vpow.pop %v587
    %v589 = vmul.f32 %v583, 1.442695
    %v590 = vpow.pop %v589
    %v591 = vmul.f32 %v584, 1.442695
    %v592 = vpow.pop %v591
    %v593 = vsel %vm85, %v586, 0.0
    %594 = vadd.xlane.f32.xlu0 %v593
    %v595 = vpop.xlane.xlu0 %594
    %v596 = vsel %vm85, %v588, 0.0
    %597 = vadd.xlane.f32.xlu0 %v596
    %v598 = vpop.xlane.xlu0 %597
    %v599 = vsel %vm85, %v590, 0.0
    %600 = vadd.xlane.f32.xlu0 %v599
    %v601 = vpop.xlane.xlu0 %600
    %v602 = vsel %vm85, %v592, 0.0
    %603 = vadd.xlane.f32.xlu0 %v602
    %v604 = vpop.xlane.xlu0 %603
    %v605 = vrcp.pop %v595
    %v606 = vrcp.pop %v598
    %v607 = vrcp.pop %v601
    %v608 = vrcp.pop %v604
    %v609 = vmul.f32 %v586, %v605
    %v610 = vmul.f32 %v588, %v606
    %v611 = vmul.f32 %v590, %v607
    %v612 = vmul.f32 %v592, %v608
    %v614 = vsel %vm85, %v609, 0
    %v617 = vsel %vm85, %v610, 0
    %v620 = vsel %vm85, %v611, 0
    %v623 = vsel %vm85, %v612, 0
    %625 = vmatprep.subr.mxu0 0.0
    %626 = vmatpush1.msra.mxu0 0.0
    %627 = vmatprep.subr.mxu0 0.0
    %628 = vmatpush1.msra.mxu0 0.0
    %629 = vmatprep.subr.mxu0 0.0
    %630 = vmatpush1.msra.mxu0 0.0
    %631 = vmatprep.subr.mxu0 0.0
    %632 = vmatpush1.msra.mxu0 0.0
    %633 = vmatprep.subr.mxu0 0.0
    %634 = vmatpush1.msra.mxu0 0.0
    %635 = vmatprep.subr.mxu0 0.0
    %636 = vmatpush1.msra.mxu0 0.0
    %637 = vmatprep.subr.mxu0 0.0
    %638 = vmatpush1.msra.mxu0 0.0
    %639 = vmatprep.subr.mxu0 0.0
    %640 = vmatpush1.msra.mxu0 0.0
    %641 = vmatprep.subr.mxu0 0.0
    %642 = vmatpush1.msra.mxu0 0.0
    %643 = vmatprep.subr.mxu0 0.0
    %644 = vmatpush1.msra.mxu0 0.0
    %645 = vmatprep.subr.mxu0 0.0
    %646 = vmatpush1.msra.mxu0 0.0
    %647 = vmatprep.subr.mxu0 0.0
    %648 = vmatpush1.msra.mxu0 0.0
    %649 = vmatprep.subr.mxu0 0.0
    %650 = vmatpush1.msra.mxu0 %v448
    %651 = vmatprep.subr.mxu0 0.0
    %652 = vmatpush1.msra.mxu0 %v443
    %653 = vmatprep.subr.mxu0 0.0
    %654 = vmatpush1.msra.mxu0 %v438
    %655 = vmatprep.subr.mxu0 0.0
    %656 = vmatpush1.msra.mxu0 %v433
    %657 = vmatprep.subr.mxu0 0.0
    %658 = vmatpush2.msra.mxu0 0.0
    %659 = vmatprep.subr.mxu0 0.0
    %660 = vmatpush2.msra.mxu0 0.0
    %661 = vmatprep.subr.mxu0 0.0
    %662 = vmatpush2.msra.mxu0 0.0
    %663 = vmatprep.subr.mxu0 0.0
    %664 = vmatpush2.msra.mxu0 0.0
    %665 = vmatprep.subr.mxu0 0.0
    %666 = vmatpush2.msra.mxu0 0.0
    %667 = vmatprep.subr.mxu0 0.0
    %668 = vmatpush2.msra.mxu0 0.0
    %669 = vmatprep.subr.mxu0 0.0
    %670 = vmatpush2.msra.mxu0 0.0
    %671 = vmatprep.subr.mxu0 0.0
    %672 = vmatpush2.msra.mxu0 0.0
    %673 = vmatprep.subr.mxu0 0.0
    %674 = vmatpush2.msra.mxu0 0.0
    %675 = vmatprep.subr.mxu0 0.0
    %676 = vmatpush2.msra.mxu0 0.0
    %677 = vmatprep.subr.mxu0 0.0
    %678 = vmatpush2.msra.mxu0 0.0
    %679 = vmatprep.subr.mxu0 0.0
    %680 = vmatpush2.msra.mxu0 0.0
    %681 = vmatprep.subr.mxu0 0.0
    %682 = vmatpush2.msra.mxu0 0.0
    %683 = vmatprep.subr.mxu0 0.0
    %684 = vmatpush2.msra.mxu0 0.0
    %685 = vmatprep.subr.mxu0 0.0
    %686 = vmatpush2.msra.mxu0 0.0
    %687 = vmatprep.subr.mxu0 0.0
    %688 = vmatpush2.msra.mxu0 0.0
    %689 = vmatprep.mubr.f32.mxu0 0.0
    %690 = vmatmul.mubr.f32.gmra.mxu0 %v614
    %v691 = vpop.f32.mrf.mxu0
    %v692 = vadd.f32 0.0, %v691
    %v693 = vpop.f32.mrf.mxu0
    %694 = vmatprep.mubr.f32.mxu0 0.0
    %695 = vmatmul.mubr.f32.gmra.mxu0 %v617
    %v696 = vpop.f32.mrf.mxu0
    %v697 = vadd.f32 0.0, %v696
    %v698 = vpop.f32.mrf.mxu0
    %699 = vmatprep.mubr.f32.mxu0 0.0
    %700 = vmatmul.mubr.f32.gmra.mxu0 %v620
    %v701 = vpop.f32.mrf.mxu0
    %v702 = vadd.f32 0.0, %v701
    %v703 = vpop.f32.mrf.mxu0
    %704 = vmatprep.mubr.f32.mxu0 0.0
    %705 = vmatmul.mubr.f32.gmra.mxu0 %v623
    %v706 = vpop.f32.mrf.mxu0
    %v707 = vadd.f32 0.0, %v706
    %v708 = vpop.f32.mrf.mxu0
    %709 = vdwg.mxu0
    %s710 = scalar_lea.vmem %s4, 96
    %v711 = vld [vmem:[%s710] sm:$0xff]
    %v712 = vld [vmem:[%s710 + $0x8] sm:$0xff]
    %v713 = vld [vmem:[%s710 + $0x10] sm:$0xff]
    %v714 = vld [vmem:[%s710 + $0x18] sm:$0xff]
    %715 = vrot.lane.b32.xlu0 %v166, 112
    %v716 = vpop.permute.xlu0 %715
    %718 = vmatprep.subr.mxu0 0.0
    %719 = vmatpush1.msra.mxu0 0.0
    %720 = vmatprep.subr.mxu0 0.0
    %721 = vmatpush1.msra.mxu0 0.0
    %722 = vmatprep.subr.mxu0 0.0
    %723 = vmatpush1.msra.mxu0 0.0
    %724 = vmatprep.subr.mxu0 0.0
    %725 = vmatpush1.msra.mxu0 0.0
    %726 = vmatprep.subr.mxu0 0.0
    %727 = vmatpush1.msra.mxu0 0.0
    %728 = vmatprep.subr.mxu0 0.0
    %729 = vmatpush1.msra.mxu0 0.0
    %730 = vmatprep.subr.mxu0 0.0
    %731 = vmatpush1.msra.mxu0 0.0
    %732 = vmatprep.subr.mxu0 0.0
    %733 = vmatpush1.msra.mxu0 0.0
    %734 = vmatprep.subr.mxu0 0.0
    %735 = vmatpush1.msra.mxu0 0.0
    %736 = vmatprep.subr.mxu0 0.0
    %737 = vmatpush1.msra.mxu0 0.0
    %738 = vmatprep.subr.mxu0 0.0
    %739 = vmatpush1.msra.mxu0 0.0
    %740 = vmatprep.subr.mxu0 0.0
    %741 = vmatpush1.msra.mxu0 0.0
    %742 = vmatprep.subr.mxu0 0.0
    %743 = vmatpush1.msra.mxu0 %v714
    %744 = vmatprep.subr.mxu0 0.0
    %745 = vmatpush1.msra.mxu0 %v713
    %746 = vmatprep.subr.mxu0 0.0
    %747 = vmatpush1.msra.mxu0 %v712
    %748 = vmatprep.subr.mxu0 0.0
    %749 = vmatpush1.msra.mxu0 %v711
    %750 = vmatprep.subr.mxu0 0.0
    %751 = vmatpush2.msra.mxu0 0.0
    %752 = vmatprep.subr.mxu0 0.0
    %753 = vmatpush2.msra.mxu0 0.0
    %754 = vmatprep.subr.mxu0 0.0
    %755 = vmatpush2.msra.mxu0 0.0
    %756 = vmatprep.subr.mxu0 0.0
    %757 = vmatpush2.msra.mxu0 0.0
    %758 = vmatprep.subr.mxu0 0.0
    %759 = vmatpush2.msra.mxu0 0.0
    %760 = vmatprep.subr.mxu0 0.0
    %761 = vmatpush2.msra.mxu0 0.0
    %762 = vmatprep.subr.mxu0 0.0
    %763 = vmatpush2.msra.mxu0 0.0
    %764 = vmatprep.subr.mxu0 0.0
    %765 = vmatpush2.msra.mxu0 0.0
    %766 = vmatprep.subr.mxu0 0.0
    %767 = vmatpush2.msra.mxu0 0.0
    %768 = vmatprep.subr.mxu0 0.0
    %769 = vmatpush2.msra.mxu0 0.0
    %770 = vmatprep.subr.mxu0 0.0
    %771 = vmatpush2.msra.mxu0 0.0
    %772 = vmatprep.subr.mxu0 0.0
    %773 = vmatpush2.msra.mxu0 0.0
    %774 = vmatprep.subr.mxu0 0.0
    %775 = vmatpush2.msra.mxu0 0.0
    %776 = vmatprep.subr.mxu0 0.0
    %777 = vmatpush2.msra.mxu0 0.0
    %778 = vmatprep.subr.mxu0 0.0
    %779 = vmatpush2.msra.mxu0 0.0
    %780 = vmatprep.subr.mxu0 0.0
    %781 = vmatpush2.msra.mxu0 0.0
    %782 = vmatprep.mubr.f32.mxu0 0.0
    %783 = vmatmul.mubr.f32.gmra.mxu0 %v168
    %v784 = vpop.f32.mrf.mxu0
    %v785 = vadd.f32 %v716, %v784
    %v786 = vpop.f32.mrf.mxu0
    %787 = vmatprep.mubr.f32.mxu0 0.0
    %788 = vmatmul.mubr.f32.gmra.mxu0 %v171
    %v789 = vpop.f32.mrf.mxu0
    %v790 = vadd.f32 %v716, %v789
    %v791 = vpop.f32.mrf.mxu0
    %792 = vmatprep.mubr.f32.mxu0 0.0
    %793 = vmatmul.mubr.f32.gmra.mxu0 %v174
    %v794 = vpop.f32.mrf.mxu0
    %v795 = vadd.f32 %v716, %v794
    %v796 = vpop.f32.mrf.mxu0
    %797 = vmatprep.mubr.f32.mxu0 0.0
    %798 = vmatmul.mubr.f32.gmra.mxu0 %v177
    %v799 = vpop.f32.mrf.mxu0
    %v800 = vadd.f32 %v716, %v799
    %v801 = vpop.f32.mrf.mxu0
    %802 = vdwg.mxu0
    %s803 = scalar_lea.vmem %s4, 128
    %v804 = vld [vmem:[%s803] sm:$0xff]
    %v805 = vld [vmem:[%s803 + $0x8] sm:$0xff]
    %v806 = vld [vmem:[%s803 + $0x10] sm:$0xff]
    %v807 = vld [vmem:[%s803 + $0x18] sm:$0xff]
    %808 = vrot.lane.b32.xlu0 %v166, 80
    %v809 = vpop.permute.xlu0 %808
    %811 = vmatprep.subr.mxu0 0.0
    %812 = vmatpush1.msra.mxu0 0.0
    %813 = vmatprep.subr.mxu0 0.0
    %814 = vmatpush1.msra.mxu0 0.0
    %815 = vmatprep.subr.mxu0 0.0
    %816 = vmatpush1.msra.mxu0 0.0
    %817 = vmatprep.subr.mxu0 0.0
    %818 = vmatpush1.msra.mxu0 0.0
    %819 = vmatprep.subr.mxu0 0.0
    %820 = vmatpush1.msra.mxu0 0.0
    %821 = vmatprep.subr.mxu0 0.0
    %822 = vmatpush1.msra.mxu0 0.0
    %823 = vmatprep.subr.mxu0 0.0
    %824 = vmatpush1.msra.mxu0 0.0
    %825 = vmatprep.subr.mxu0 0.0
    %826 = vmatpush1.msra.mxu0 0.0
    %827 = vmatprep.subr.mxu0 0.0
    %828 = vmatpush1.msra.mxu0 0.0
    %829 = vmatprep.subr.mxu0 0.0
    %830 = vmatpush1.msra.mxu0 0.0
    %831 = vmatprep.subr.mxu0 0.0
    %832 = vmatpush1.msra.mxu0 0.0
    %833 = vmatprep.subr.mxu0 0.0
    %834 = vmatpush1.msra.mxu0 0.0
    %835 = vmatprep.subr.mxu0 0.0
    %836 = vmatpush1.msra.mxu0 %v807
    %837 = vmatprep.subr.mxu0 0.0
    %838 = vmatpush1.msra.mxu0 %v806
    %839 = vmatprep.subr.mxu0 0.0
    %840 = vmatpush1.msra.mxu0 %v805
    %841 = vmatprep.subr.mxu0 0.0
    %842 = vmatpush1.msra.mxu0 %v804
    %843 = vmatprep.subr.mxu0 0.0
    %844 = vmatpush2.msra.mxu0 0.0
    %845 = vmatprep.subr.mxu0 0.0
    %846 = vmatpush2.msra.mxu0 0.0
    %847 = vmatprep.subr.mxu0 0.0
    %848 = vmatpush2.msra.mxu0 0.0
    %849 = vmatprep.subr.mxu0 0.0
    %850 = vmatpush2.msra.mxu0 0.0
    %851 = vmatprep.subr.mxu0 0.0
    %852 = vmatpush2.msra.mxu0 0.0
    %853 = vmatprep.subr.mxu0 0.0
    %854 = vmatpush2.msra.mxu0 0.0
    %855 = vmatprep.subr.mxu0 0.0
    %856 = vmatpush2.msra.mxu0 0.0
    %857 = vmatprep.subr.mxu0 0.0
    %858 = vmatpush2.msra.mxu0 0.0
    %859 = vmatprep.subr.mxu0 0.0
    %860 = vmatpush2.msra.mxu0 0.0
    %861 = vmatprep.subr.mxu0 0.0
    %862 = vmatpush2.msra.mxu0 0.0
    %863 = vmatprep.subr.mxu0 0.0
    %864 = vmatpush2.msra.mxu0 0.0
    %865 = vmatprep.subr.mxu0 0.0
    %866 = vmatpush2.msra.mxu0 0.0
    %867 = vmatprep.subr.mxu0 0.0
    %868 = vmatpush2.msra.mxu0 0.0
    %869 = vmatprep.subr.mxu0 0.0
    %870 = vmatpush2.msra.mxu0 0.0
    %871 = vmatprep.subr.mxu0 0.0
    %872 = vmatpush2.msra.mxu0 0.0
    %873 = vmatprep.subr.mxu0 0.0
    %874 = vmatpush2.msra.mxu0 0.0
    %875 = vmatprep.mubr.f32.mxu0 0.0
    %876 = vmatmul.mubr.f32.gmra.mxu0 %v168
    %v877 = vpop.f32.mrf.mxu0
    %v878 = vadd.f32 %v809, %v877
    %v879 = vpop.f32.mrf.mxu0
    %880 = vmatprep.mubr.f32.mxu0 0.0
    %881 = vmatmul.mubr.f32.gmra.mxu0 %v171
    %v882 = vpop.f32.mrf.mxu0
    %v883 = vadd.f32 %v809, %v882
    %v884 = vpop.f32.mrf.mxu0
    %885 = vmatprep.mubr.f32.mxu0 0.0
    %886 = vmatmul.mubr.f32.gmra.mxu0 %v174
    %v887 = vpop.f32.mrf.mxu0
    %v888 = vadd.f32 %v809, %v887
    %v889 = vpop.f32.mrf.mxu0
    %890 = vmatprep.mubr.f32.mxu0 0.0
    %891 = vmatmul.mubr.f32.gmra.mxu0 %v177
    %v892 = vpop.f32.mrf.mxu0
    %v893 = vadd.f32 %v809, %v892
    %v894 = vpop.f32.mrf.mxu0
    %895 = vdwg.mxu0
    %s896 = scalar_lea.vmem %s4, 160
    %v897 = vld [vmem:[%s896] sm:$0xff]
    %v898 = vld [vmem:[%s896 + $0x8] sm:$0xff]
    %v899 = vld [vmem:[%s896 + $0x10] sm:$0xff]
    %v900 = vld [vmem:[%s896 + $0x18] sm:$0xff]
    %901 = vrot.lane.b32.xlu0 %v166, 48
    %v902 = vpop.permute.xlu0 %901
    %904 = vmatprep.subr.mxu0 0.0
    %905 = vmatpush1.msra.mxu0 0.0
    %906 = vmatprep.subr.mxu0 0.0
    %907 = vmatpush1.msra.mxu0 0.0
    %908 = vmatprep.subr.mxu0 0.0
    %909 = vmatpush1.msra.mxu0 0.0
    %910 = vmatprep.subr.mxu0 0.0
    %911 = vmatpush1.msra.mxu0 0.0
    %912 = vmatprep.subr.mxu0 0.0
    %913 = vmatpush1.msra.mxu0 0.0
    %914 = vmatprep.subr.mxu0 0.0
    %915 = vmatpush1.msra.mxu0 0.0
    %916 = vmatprep.subr.mxu0 0.0
    %917 = vmatpush1.msra.mxu0 0.0
    %918 = vmatprep.subr.mxu0 0.0
    %919 = vmatpush1.msra.mxu0 0.0
    %920 = vmatprep.subr.mxu0 0.0
    %921 = vmatpush1.msra.mxu0 0.0
    %922 = vmatprep.subr.mxu0 0.0
    %923 = vmatpush1.msra.mxu0 0.0
    %924 = vmatprep.subr.mxu0 0.0
    %925 = vmatpush1.msra.mxu0 0.0
    %926 = vmatprep.subr.mxu0 0.0
    %927 = vmatpush1.msra.mxu0 0.0
    %928 = vmatprep.subr.mxu0 0.0
    %929 = vmatpush1.msra.mxu0 %v900
    %930 = vmatprep.subr.mxu0 0.0
    %931 = vmatpush1.msra.mxu0 %v899
    %932 = vmatprep.subr.mxu0 0.0
    %933 = vmatpush1.msra.mxu0 %v898
    %934 = vmatprep.subr.mxu0 0.0
    %935 = vmatpush1.msra.mxu0 %v897
    %936 = vmatprep.subr.mxu0 0.0
    %937 = vmatpush2.msra.mxu0 0.0
    %938 = vmatprep.subr.mxu0 0.0
    %939 = vmatpush2.msra.mxu0 0.0
    %940 = vmatprep.subr.mxu0 0.0
    %941 = vmatpush2.msra.mxu0 0.0
    %942 = vmatprep.subr.mxu0 0.0
    %943 = vmatpush2.msra.mxu0 0.0
    %944 = vmatprep.subr.mxu0 0.0
    %945 = vmatpush2.msra.mxu0 0.0
    %946 = vmatprep.subr.mxu0 0.0
    %947 = vmatpush2.msra.mxu0 0.0
    %948 = vmatprep.subr.mxu0 0.0
    %949 = vmatpush2.msra.mxu0 0.0
    %950 = vmatprep.subr.mxu0 0.0
    %951 = vmatpush2.msra.mxu0 0.0
    %952 = vmatprep.subr.mxu0 0.0
    %953 = vmatpush2.msra.mxu0 0.0
    %954 = vmatprep.subr.mxu0 0.0
    %955 = vmatpush2.msra.mxu0 0.0
    %956 = vmatprep.subr.mxu0 0.0
    %957 = vmatpush2.msra.mxu0 0.0
    %958 = vmatprep.subr.mxu0 0.0
    %959 = vmatpush2.msra.mxu0 0.0
    %960 = vmatprep.subr.mxu0 0.0
    %961 = vmatpush2.msra.mxu0 0.0
    %962 = vmatprep.subr.mxu0 0.0
    %963 = vmatpush2.msra.mxu0 0.0
    %964 = vmatprep.subr.mxu0 0.0
    %965 = vmatpush2.msra.mxu0 0.0
    %966 = vmatprep.subr.mxu0 0.0
    %967 = vmatpush2.msra.mxu0 0.0
    %968 = vmatprep.mubr.f32.mxu0 0.0
    %969 = vmatmul.mubr.f32.gmra.mxu0 %v168
    %v970 = vpop.f32.mrf.mxu0
    %v971 = vadd.f32 %v902, %v970
    %v972 = vpop.f32.mrf.mxu0
    %973 = vmatprep.mubr.f32.mxu0 0.0
    %974 = vmatmul.mubr.f32.gmra.mxu0 %v171
    %v975 = vpop.f32.mrf.mxu0
    %v976 = vadd.f32 %v902, %v975
    %v977 = vpop.f32.mrf.mxu0
    %978 = vmatprep.mubr.f32.mxu0 0.0
    %979 = vmatmul.mubr.f32.gmra.mxu0 %v174
    %v980 = vpop.f32.mrf.mxu0
    %v981 = vadd.f32 %v902, %v980
    %v982 = vpop.f32.mrf.mxu0
    %983 = vmatprep.mubr.f32.mxu0 0.0
    %984 = vmatmul.mubr.f32.gmra.mxu0 %v177
    %v985 = vpop.f32.mrf.mxu0
    %v986 = vadd.f32 %v902, %v985
    %v987 = vpop.f32.mrf.mxu0
    %988 = vdwg.mxu0
    %v990 = vsel %vm451, %v785, 0
    %v993 = vsel %vm451, %v790, 0
    %v996 = vsel %vm451, %v795, 0
    %v999 = vsel %vm451, %v800, 0
    %v1002 = vsel %vm451, %v878, 0
    %v1005 = vsel %vm451, %v883, 0
    %v1008 = vsel %vm451, %v888, 0
    %v1011 = vsel %vm451, %v893, 0
    %1013 = vmatprep.subr.mxu0 0.0
    %1014 = vmatpush1.xpose.msra.mxu0 0.0
    %1015 = vmatprep.subr.mxu0 0.0
    %1016 = vmatpush1.xpose.msra.mxu0 0.0
    %1017 = vmatprep.subr.mxu0 0.0
    %1018 = vmatpush1.xpose.msra.mxu0 0.0
    %1019 = vmatprep.subr.mxu0 0.0
    %1020 = vmatpush1.xpose.msra.mxu0 0.0
    %1021 = vmatprep.subr.mxu0 0.0
    %1022 = vmatpush1.xpose.msra.mxu0 0.0
    %1023 = vmatprep.subr.mxu0 0.0
    %1024 = vmatpush1.xpose.msra.mxu0 0.0
    %1025 = vmatprep.subr.mxu0 0.0
    %1026 = vmatpush1.xpose.msra.mxu0 0.0
    %1027 = vmatprep.subr.mxu0 0.0
    %1028 = vmatpush1.xpose.msra.mxu0 0.0
    %1029 = vmatprep.subr.mxu0 0.0
    %1030 = vmatpush1.xpose.msra.mxu0 0.0
    %1031 = vmatprep.subr.mxu0 0.0
    %1032 = vmatpush1.xpose.msra.mxu0 0.0
    %1033 = vmatprep.subr.mxu0 0.0
    %1034 = vmatpush1.xpose.msra.mxu0 0.0
    %1035 = vmatprep.subr.mxu0 0.0
    %1036 = vmatpush1.xpose.msra.mxu0 0.0
    %1037 = vmatprep.subr.mxu0 0.0
    %1038 = vmatpush1.xpose.msra.mxu0 %v1011
    %1039 = vmatprep.subr.mxu0 0.0
    %1040 = vmatpush1.xpose.msra.mxu0 %v1008
    %1041 = vmatprep.subr.mxu0 0.0
    %1042 = vmatpush1.xpose.msra.mxu0 %v1005
    %1043 = vmatprep.subr.mxu0 0.0
    %1044 = vmatpush1.xpose.msra.mxu0 %v1002
    %1045 = vmatprep.subr.mxu0 0.0
    %1046 = vmatpush2.xpose.msra.mxu0 0.0
    %1047 = vmatprep.subr.mxu0 0.0
    %1048 = vmatpush2.xpose.msra.mxu0 0.0
    %1049 = vmatprep.subr.mxu0 0.0
    %1050 = vmatpush2.xpose.msra.mxu0 0.0
    %1051 = vmatprep.subr.mxu0 0.0
    %1052 = vmatpush2.xpose.msra.mxu0 0.0
    %1053 = vmatprep.subr.mxu0 0.0
    %1054 = vmatpush2.xpose.msra.mxu0 0.0
    %1055 = vmatprep.subr.mxu0 0.0
    %1056 = vmatpush2.xpose.msra.mxu0 0.0
    %1057 = vmatprep.subr.mxu0 0.0
    %1058 = vmatpush2.xpose.msra.mxu0 0.0
    %1059 = vmatprep.subr.mxu0 0.0
    %1060 = vmatpush2.xpose.msra.mxu0 0.0
    %1061 = vmatprep.subr.mxu0 0.0
    %1062 = vmatpush2.xpose.msra.mxu0 0.0
    %1063 = vmatprep.subr.mxu0 0.0
    %1064 = vmatpush2.xpose.msra.mxu0 0.0
    %1065 = vmatprep.subr.mxu0 0.0
    %1066 = vmatpush2.xpose.msra.mxu0 0.0
    %1067 = vmatprep.subr.mxu0 0.0
    %1068 = vmatpush2.xpose.msra.mxu0 0.0
    %1069 = vmatprep.subr.mxu0 0.0
    %1070 = vmatpush2.xpose.msra.mxu0 0.0
    %1071 = vmatprep.subr.mxu0 0.0
    %1072 = vmatpush2.xpose.msra.mxu0 0.0
    %1073 = vmatprep.subr.mxu0 0.0
    %1074 = vmatpush2.xpose.msra.mxu0 0.0
    %1075 = vmatprep.subr.mxu0 0.0
    %1076 = vmatpush2.xpose.msra.mxu0 0.0
    %1077 = vmatprep.mubr.f32.mxu0 0.0
    %1078 = vmatmul.mubr.f32.gmra.mxu0 %v990
    %v1079 = vpop.f32.mrf.mxu0
    %v1080 = vadd.f32 0.0, %v1079
    %v1081 = vpop.f32.mrf.mxu0
    %1082 = vmatprep.mubr.f32.mxu0 0.0
    %1083 = vmatmul.mubr.f32.gmra.mxu0 %v993
    %v1084 = vpop.f32.mrf.mxu0
    %v1085 = vadd.f32 0.0, %v1084
    %v1086 = vpop.f32.mrf.mxu0
    %1087 = vmatprep.mubr.f32.mxu0 0.0
    %1088 = vmatmul.mubr.f32.gmra.mxu0 %v996
    %v1089 = vpop.f32.mrf.mxu0
    %v1090 = vadd.f32 0.0, %v1089
    %v1091 = vpop.f32.mrf.mxu0
    %1092 = vmatprep.mubr.f32.mxu0 0.0
    %1093 = vmatmul.mubr.f32.gmra.mxu0 %v999
    %v1094 = vpop.f32.mrf.mxu0
    %v1095 = vadd.f32 0.0, %v1094
    %v1096 = vpop.f32.mrf.mxu0
    %1097 = vdwg.mxu0
    %v1098 = vmul.f32 %v1080, 0.25
    %v1099 = vmul.f32 %v1085, 0.25
    %v1100 = vmul.f32 %v1090, 0.25
    %v1101 = vmul.f32 %v1095, 0.25
    %v1102 = vadd.f32 %v1098, %v77
    %v1103 = vadd.f32 %v1099, %v78
    %v1104 = vadd.f32 %v1100, %v79
    %v1105 = vadd.f32 %v1101, %v80
    %v1106 = vsel %vm85, %v1102, -inf
    %1107 = vmax.xlane.f32.xlu0 %v1106
    %v1108 = vpop.xlane.xlu0 %1107
    %v1109 = vsel %vm85, %v1103, -inf
    %1110 = vmax.xlane.f32.xlu0 %v1109
    %v1111 = vpop.xlane.xlu0 %1110
    %v1112 = vsel %vm85, %v1104, -inf
    %1113 = vmax.xlane.f32.xlu0 %v1112
    %v1114 = vpop.xlane.xlu0 %1113
    %v1115 = vsel %vm85, %v1105, -inf
    %1116 = vmax.xlane.f32.xlu0 %v1115
    %v1117 = vpop.xlane.xlu0 %1116
    %v1118 = vsub.f32 %v1102, %v1108
    %v1119 = vsub.f32 %v1103, %v1111
    %v1120 = vsub.f32 %v1104, %v1114
    %v1121 = vsub.f32 %v1105, %v1117
    %v1122 = vmul.f32 %v1118, 1.442695
    %v1123 = vpow.pop %v1122
    %v1124 = vmul.f32 %v1119, 1.442695
    %v1125 = vpow.pop %v1124
    %v1126 = vmul.f32 %v1120, 1.442695
    %v1127 = vpow.pop %v1126
    %v1128 = vmul.f32 %v1121, 1.442695
    %v1129 = vpow.pop %v1128
    %v1130 = vsel %vm85, %v1123, 0.0
    %1131 = vadd.xlane.f32.xlu0 %v1130
    %v1132 = vpop.xlane.xlu0 %1131
    %v1133 = vsel %vm85, %v1125, 0.0
    %1134 = vadd.xlane.f32.xlu0 %v1133
    %v1135 = vpop.xlane.xlu0 %1134
    %v1136 = vsel %vm85, %v1127, 0.0
    %1137 = vadd.xlane.f32.xlu0 %v1136
    %v1138 = vpop.xlane.xlu0 %1137
    %v1139 = vsel %vm85, %v1129, 0.0
    %1140 = vadd.xlane.f32.xlu0 %v1139
    %v1141 = vpop.xlane.xlu0 %1140
    %v1142 = vrcp.pop %v1132
    %v1143 = vrcp.pop %v1135
    %v1144 = vrcp.pop %v1138
    %v1145 = vrcp.pop %v1141
    %v1146 = vmul.f32 %v1123, %v1142
    %v1147 = vmul.f32 %v1125, %v1143
    %v1148 = vmul.f32 %v1127, %v1144
    %v1149 = vmul.f32 %v1129, %v1145
    %v1151 = vsel %vm85, %v1146, 0
    %v1154 = vsel %vm85, %v1147, 0
    %v1157 = vsel %vm85, %v1148, 0
    %v1160 = vsel %vm85, %v1149, 0
    %1162 = vmatprep.subr.mxu0 0.0
    %1163 = vmatpush1.msra.mxu0 0.0
    %1164 = vmatprep.subr.mxu0 0.0
    %1165 = vmatpush1.msra.mxu0 0.0
    %1166 = vmatprep.subr.mxu0 0.0
    %1167 = vmatpush1.msra.mxu0 0.0
    %1168 = vmatprep.subr.mxu0 0.0
    %1169 = vmatpush1.msra.mxu0 0.0
    %1170 = vmatprep.subr.mxu0 0.0
    %1171 = vmatpush1.msra.mxu0 0.0
    %1172 = vmatprep.subr.mxu0 0.0
    %1173 = vmatpush1.msra.mxu0 0.0
    %1174 = vmatprep.subr.mxu0 0.0
    %1175 = vmatpush1.msra.mxu0 0.0
    %1176 = vmatprep.subr.mxu0 0.0
    %1177 = vmatpush1.msra.mxu0 0.0
    %1178 = vmatprep.subr.mxu0 0.0
    %1179 = vmatpush1.msra.mxu0 0.0
    %1180 = vmatprep.subr.mxu0 0.0
    %1181 = vmatpush1.msra.mxu0 0.0
    %1182 = vmatprep.subr.mxu0 0.0
    %1183 = vmatpush1.msra.mxu0 0.0
    %1184 = vmatprep.subr.mxu0 0.0
    %1185 = vmatpush1.msra.mxu0 0.0
    %1186 = vmatprep.subr.mxu0 0.0
    %1187 = vmatpush1.msra.mxu0 %v986
    %1188 = vmatprep.subr.mxu0 0.0
    %1189 = vmatpush1.msra.mxu0 %v981
    %1190 = vmatprep.subr.mxu0 0.0
    %1191 = vmatpush1.msra.mxu0 %v976
    %1192 = vmatprep.subr.mxu0 0.0
    %1193 = vmatpush1.msra.mxu0 %v971
    %1194 = vmatprep.subr.mxu0 0.0
    %1195 = vmatpush2.msra.mxu0 0.0
    %1196 = vmatprep.subr.mxu0 0.0
    %1197 = vmatpush2.msra.mxu0 0.0
    %1198 = vmatprep.subr.mxu0 0.0
    %1199 = vmatpush2.msra.mxu0 0.0
    %1200 = vmatprep.subr.mxu0 0.0
    %1201 = vmatpush2.msra.mxu0 0.0
    %1202 = vmatprep.subr.mxu0 0.0
    %1203 = vmatpush2.msra.mxu0 0.0
    %1204 = vmatprep.subr.mxu0 0.0
    %1205 = vmatpush2.msra.mxu0 0.0
    %1206 = vmatprep.subr.mxu0 0.0
    %1207 = vmatpush2.msra.mxu0 0.0
    %1208 = vmatprep.subr.mxu0 0.0
    %1209 = vmatpush2.msra.mxu0 0.0
    %1210 = vmatprep.subr.mxu0 0.0
    %1211 = vmatpush2.msra.mxu0 0.0
    %1212 = vmatprep.subr.mxu0 0.0
    %1213 = vmatpush2.msra.mxu0 0.0
    %1214 = vmatprep.subr.mxu0 0.0
    %1215 = vmatpush2.msra.mxu0 0.0
    %1216 = vmatprep.subr.mxu0 0.0
    %1217 = vmatpush2.msra.mxu0 0.0
    %1218 = vmatprep.subr.mxu0 0.0
    %1219 = vmatpush2.msra.mxu0 0.0
    %1220 = vmatprep.subr.mxu0 0.0
    %1221 = vmatpush2.msra.mxu0 0.0
    %1222 = vmatprep.subr.mxu0 0.0
    %1223 = vmatpush2.msra.mxu0 0.0
    %1224 = vmatprep.subr.mxu0 0.0
    %1225 = vmatpush2.msra.mxu0 0.0
    %1226 = vmatprep.mubr.f32.mxu0 0.0
    %1227 = vmatmul.mubr.f32.gmra.mxu0 %v1151
    %v1228 = vpop.f32.mrf.mxu0
    %v1229 = vadd.f32 0.0, %v1228
    %v1230 = vpop.f32.mrf.mxu0
    %1231 = vmatprep.mubr.f32.mxu0 0.0
    %1232 = vmatmul.mubr.f32.gmra.mxu0 %v1154
    %v1233 = vpop.f32.mrf.mxu0
    %v1234 = vadd.f32 0.0, %v1233
    %v1235 = vpop.f32.mrf.mxu0
    %1236 = vmatprep.mubr.f32.mxu0 0.0
    %1237 = vmatmul.mubr.f32.gmra.mxu0 %v1157
    %v1238 = vpop.f32.mrf.mxu0
    %v1239 = vadd.f32 0.0, %v1238
    %v1240 = vpop.f32.mrf.mxu0
    %1241 = vmatprep.mubr.f32.mxu0 0.0
    %1242 = vmatmul.mubr.f32.gmra.mxu0 %v1160
    %v1243 = vpop.f32.mrf.mxu0
    %v1244 = vadd.f32 0.0, %v1243
    %v1245 = vpop.f32.mrf.mxu0
    %1246 = vdwg.mxu0
    %v1248 = vsel %vm451, %v1229, 0
    %v1251 = vsel %vm451, %v1234, 0
    %v1254 = vsel %vm451, %v1239, 0
    %v1257 = vsel %vm451, %v1244, 0
    %1259 = vmatprep.subr.mxu0 0.0
    %1260 = vmatpush1.msra.mxu0 0.0
    %1261 = vmatprep.subr.mxu0 0.0
    %1262 = vmatpush1.msra.mxu0 0.0
    %1263 = vmatprep.subr.mxu0 0.0
    %1264 = vmatpush1.msra.mxu0 0.0
    %1265 = vmatprep.subr.mxu0 0.0
    %1266 = vmatpush1.msra.mxu0 0.0
    %1267 = vmatprep.subr.mxu0 0.0
    %1268 = vmatpush1.msra.mxu0 0.0
    %1269 = vmatprep.subr.mxu0 0.0
    %1270 = vmatpush1.msra.mxu0 0.0
    %1271 = vmatprep.subr.mxu0 0.0
    %1272 = vmatpush1.msra.mxu0 0.0
    %1273 = vmatprep.subr.mxu0 0.0
    %1274 = vmatpush1.msra.mxu0 0.0
    %1275 = vmatprep.subr.mxu0 0.0
    %1276 = vmatpush1.msra.mxu0 0.0
    %1277 = vmatprep.subr.mxu0 0.0
    %1278 = vmatpush1.msra.mxu0 0.0
    %1279 = vmatprep.subr.mxu0 0.0
    %1280 = vmatpush1.msra.mxu0 0.0
    %1281 = vmatprep.subr.mxu0 0.0
    %1282 = vmatpush1.msra.mxu0 0.0
    %1283 = vmatprep.subr.mxu0 0.0
    %1284 = vmatpush1.msra.mxu0 0.0
    %1285 = vmatprep.subr.mxu0 0.0
    %1286 = vmatpush1.msra.mxu0 0.0
    %1287 = vmatprep.subr.mxu0 0.0
    %1288 = vmatpush1.msra.mxu0 %v158
    %1289 = vmatprep.subr.mxu0 0.0
    %1290 = vmatpush1.msra.mxu0 %v157
    %1291 = vmatprep.subr.mxu0 0.0
    %1292 = vmatpush2.msra.mxu0 0.0
    %1293 = vmatprep.subr.mxu0 0.0
    %1294 = vmatpush2.msra.mxu0 0.0
    %1295 = vmatprep.subr.mxu0 0.0
    %1296 = vmatpush2.msra.mxu0 0.0
    %1297 = vmatprep.subr.mxu0 0.0
    %1298 = vmatpush2.msra.mxu0 0.0
    %1299 = vmatprep.subr.mxu0 0.0
    %1300 = vmatpush2.msra.mxu0 0.0
    %1301 = vmatprep.subr.mxu0 0.0
    %1302 = vmatpush2.msra.mxu0 0.0
    %1303 = vmatprep.subr.mxu0 0.0
    %1304 = vmatpush2.msra.mxu0 0.0
    %1305 = vmatprep.subr.mxu0 0.0
    %1306 = vmatpush2.msra.mxu0 0.0
    %1307 = vmatprep.subr.mxu0 0.0
    %1308 = vmatpush2.msra.mxu0 0.0
    %1309 = vmatprep.subr.mxu0 0.0
    %1310 = vmatpush2.msra.mxu0 0.0
    %1311 = vmatprep.subr.mxu0 0.0
    %1312 = vmatpush2.msra.mxu0 0.0
    %1313 = vmatprep.subr.mxu0 0.0
    %1314 = vmatpush2.msra.mxu0 0.0
    %1315 = vmatprep.subr.mxu0 0.0
    %1316 = vmatpush2.msra.mxu0 0.0
    %1317 = vmatprep.subr.mxu0 0.0
    %1318 = vmatpush2.msra.mxu0 0.0
    %1319 = vmatprep.subr.mxu0 0.0
    %1320 = vmatpush2.msra.mxu0 0.0
    %1321 = vmatprep.subr.mxu0 0.0
    %1322 = vmatpush2.msra.mxu0 0.0
    %1323 = vmatprep.mubr.f32.mxu0 0.0
    %1324 = vmatmul.mubr.f32.gmra.mxu0 %v1248
    %v1325 = vpop.f32.mrf.mxu0
    %v1326 = vadd.f32 0.0, %v1325
    %v1327 = vpop.f32.mrf.mxu0
    %1328 = vmatprep.mubr.f32.mxu0 0.0
    %1329 = vmatmul.mubr.f32.gmra.mxu0 %v1251
    %v1330 = vpop.f32.mrf.mxu0
    %v1331 = vadd.f32 0.0, %v1330
    %v1332 = vpop.f32.mrf.mxu0
    %1333 = vmatprep.mubr.f32.mxu0 0.0
    %1334 = vmatmul.mubr.f32.gmra.mxu0 %v1254
    %v1335 = vpop.f32.mrf.mxu0
    %v1336 = vadd.f32 0.0, %v1335
    %v1337 = vpop.f32.mrf.mxu0
    %1338 = vmatprep.mubr.f32.mxu0 0.0
    %1339 = vmatmul.mubr.f32.gmra.mxu0 %v1257
    %v1340 = vpop.f32.mrf.mxu0
    %v1341 = vadd.f32 0.0, %v1340
    %v1342 = vpop.f32.mrf.mxu0
    %1343 = vdwg.mxu0
    %v1345 = vsel %vm451, %v692, 0
    %v1348 = vsel %vm451, %v697, 0
    %v1351 = vsel %vm451, %v702, 0
    %v1354 = vsel %vm451, %v707, 0
    %1356 = vmatprep.subr.mxu0 0.0
    %1357 = vmatpush1.msra.mxu0 0.0
    %1358 = vmatprep.subr.mxu0 0.0
    %1359 = vmatpush1.msra.mxu0 0.0
    %1360 = vmatprep.subr.mxu0 0.0
    %1361 = vmatpush1.msra.mxu0 0.0
    %1362 = vmatprep.subr.mxu0 0.0
    %1363 = vmatpush1.msra.mxu0 0.0
    %1364 = vmatprep.subr.mxu0 0.0
    %1365 = vmatpush1.msra.mxu0 0.0
    %1366 = vmatprep.subr.mxu0 0.0
    %1367 = vmatpush1.msra.mxu0 0.0
    %1368 = vmatprep.subr.mxu0 0.0
    %1369 = vmatpush1.msra.mxu0 0.0
    %1370 = vmatprep.subr.mxu0 0.0
    %1371 = vmatpush1.msra.mxu0 0.0
    %1372 = vmatprep.subr.mxu0 0.0
    %1373 = vmatpush1.msra.mxu0 0.0
    %1374 = vmatprep.subr.mxu0 0.0
    %1375 = vmatpush1.msra.mxu0 0.0
    %1376 = vmatprep.subr.mxu0 0.0
    %1377 = vmatpush1.msra.mxu0 0.0
    %1378 = vmatprep.subr.mxu0 0.0
    %1379 = vmatpush1.msra.mxu0 0.0
    %1380 = vmatprep.subr.mxu0 0.0
    %1381 = vmatpush1.msra.mxu0 0.0
    %1382 = vmatprep.subr.mxu0 0.0
    %1383 = vmatpush1.msra.mxu0 0.0
    %1384 = vmatprep.subr.mxu0 0.0
    %1385 = vmatpush1.msra.mxu0 %v156
    %1386 = vmatprep.subr.mxu0 0.0
    %1387 = vmatpush1.msra.mxu0 %v155
    %1388 = vmatprep.subr.mxu0 0.0
    %1389 = vmatpush2.msra.mxu0 0.0
    %1390 = vmatprep.subr.mxu0 0.0
    %1391 = vmatpush2.msra.mxu0 0.0
    %1392 = vmatprep.subr.mxu0 0.0
    %1393 = vmatpush2.msra.mxu0 0.0
    %1394 = vmatprep.subr.mxu0 0.0
    %1395 = vmatpush2.msra.mxu0 0.0
    %1396 = vmatprep.subr.mxu0 0.0
    %1397 = vmatpush2.msra.mxu0 0.0
    %1398 = vmatprep.subr.mxu0 0.0
    %1399 = vmatpush2.msra.mxu0 0.0
    %1400 = vmatprep.subr.mxu0 0.0
    %1401 = vmatpush2.msra.mxu0 0.0
    %1402 = vmatprep.subr.mxu0 0.0
    %1403 = vmatpush2.msra.mxu0 0.0
    %1404 = vmatprep.subr.mxu0 0.0
    %1405 = vmatpush2.msra.mxu0 0.0
    %1406 = vmatprep.subr.mxu0 0.0
    %1407 = vmatpush2.msra.mxu0 0.0
    %1408 = vmatprep.subr.mxu0 0.0
    %1409 = vmatpush2.msra.mxu0 0.0
    %1410 = vmatprep.subr.mxu0 0.0
    %1411 = vmatpush2.msra.mxu0 0.0
    %1412 = vmatprep.subr.mxu0 0.0
    %1413 = vmatpush2.msra.mxu0 0.0
    %1414 = vmatprep.subr.mxu0 0.0
    %1415 = vmatpush2.msra.mxu0 0.0
    %1416 = vmatprep.subr.mxu0 0.0
    %1417 = vmatpush2.msra.mxu0 0.0
    %1418 = vmatprep.subr.mxu0 0.0
    %1419 = vmatpush2.msra.mxu0 0.0
    %1420 = vmatprep.mubr.f32.mxu0 0.0
    %1421 = vmatmul.mubr.f32.gmra.mxu0 %v1345
    %v1422 = vpop.f32.mrf.mxu0
    %v1423 = vadd.f32 %v1326, %v1422
    %v1424 = vpop.f32.mrf.mxu0
    %1425 = vmatprep.mubr.f32.mxu0 0.0
    %1426 = vmatmul.mubr.f32.gmra.mxu0 %v1348
    %v1427 = vpop.f32.mrf.mxu0
    %v1428 = vadd.f32 %v1331, %v1427
    %v1429 = vpop.f32.mrf.mxu0
    %1430 = vmatprep.mubr.f32.mxu0 0.0
    %1431 = vmatmul.mubr.f32.gmra.mxu0 %v1351
    %v1432 = vpop.f32.mrf.mxu0
    %v1433 = vadd.f32 %v1336, %v1432
    %v1434 = vpop.f32.mrf.mxu0
    %1435 = vmatprep.mubr.f32.mxu0 0.0
    %1436 = vmatmul.mubr.f32.gmra.mxu0 %v1354
    %v1437 = vpop.f32.mrf.mxu0
    %v1438 = vadd.f32 %v1341, %v1437
    %v1439 = vpop.f32.mrf.mxu0
    %1440 = vdwg.mxu0
    %v1441 = vlaneseq
    %v1442 = vshrl.u32 %v1441, 7
    %v1443 = vsub.s32 3, %v1442
    %v1444 = vrot.slane %v36, %v1443
    %v1445 = vadd.f32 %v1423, %v1444
    %v1446 = vadd.f32 %v1428, %v1444
    %v1447 = vadd.f32 %v1433, %v1444
    %v1448 = vadd.f32 %v1438, %v1444
    %v1449 = vadd.f32 %v151, %v1445
    %v1450 = vadd.f32 %v152, %v1446
    %v1451 = vadd.f32 %v153, %v1447
    %v1452 = vadd.f32 %v154, %v1448
    %v1453 = vsel %vm85, %v1449, 0.0
    %1454 = vadd.xlane.f32.xlu0 %v1453
    %v1455 = vpop.xlane.xlu0 %1454
    %v1456 = vsel %vm85, %v1450, 0.0
    %1457 = vadd.xlane.f32.xlu0 %v1456
    %v1458 = vpop.xlane.xlu0 %1457
    %v1459 = vsel %vm85, %v1451, 0.0
    %1460 = vadd.xlane.f32.xlu0 %v1459
    %v1461 = vpop.xlane.xlu0 %1460
    %v1462 = vsel %vm85, %v1452, 0.0
    %1463 = vadd.xlane.f32.xlu0 %v1462
    %v1464 = vpop.xlane.xlu0 %1463
    %v1465 = vmul.f32 %v1455, %v98
    %v1466 = vmul.f32 %v1458, %v98
    %v1467 = vmul.f32 %v1461, %v98
    %v1468 = vmul.f32 %v1464, %v98
    %v1469 = vsub.f32 %v1449, %v1465
    %v1470 = vsub.f32 %v1450, %v1466
    %v1471 = vsub.f32 %v1451, %v1467
    %v1472 = vsub.f32 %v1452, %v1468
    %v1473 = vmul.f32 %v1469, %v1469
    %v1474 = vmul.f32 %v1470, %v1470
    %v1475 = vmul.f32 %v1471, %v1471
    %v1476 = vmul.f32 %v1472, %v1472
    %v1477 = vsel %vm85, %v1473, 0.0
    %1478 = vadd.xlane.f32.xlu0 %v1477
    %v1479 = vpop.xlane.xlu0 %1478
    %v1480 = vsel %vm85, %v1474, 0.0
    %1481 = vadd.xlane.f32.xlu0 %v1480
    %v1482 = vpop.xlane.xlu0 %1481
    %v1483 = vsel %vm85, %v1475, 0.0
    %1484 = vadd.xlane.f32.xlu0 %v1483
    %v1485 = vpop.xlane.xlu0 %1484
    %v1486 = vsel %vm85, %v1476, 0.0
    %1487 = vadd.xlane.f32.xlu0 %v1486
    %v1488 = vpop.xlane.xlu0 %1487
    %v1489 = vmul.f32 %v1479, %v98
    %v1490 = vmul.f32 %v1482, %v98
    %v1491 = vmul.f32 %v1485, %v98
    %v1492 = vmul.f32 %v1488, %v98
    %v1493 = vadd.f32 %v1489, 1e-05
    %v1494 = vadd.f32 %v1490, 1e-05
    %v1495 = vadd.f32 %v1491, 1e-05
    %v1496 = vadd.f32 %v1492, 1e-05
    %v1497 = vrsqrt.pop %v1493
    %v1498 = vrsqrt.pop %v1494
    %v1499 = vrsqrt.pop %v1495
    %v1500 = vrsqrt.pop %v1496
    %v1501 = vmul.f32 %v1469, %v1497
    %v1502 = vmul.f32 %v1470, %v1498
    %v1503 = vmul.f32 %v1471, %v1499
    %v1504 = vmul.f32 %v1472, %v1500
    %v1505 = vlaneseq
    %v1506 = vshrl.u32 %v1505, 7
    %v1507 = vsub.s32 4, %v1506
    %v1508 = vrot.slane %v36, %v1507
    %v1509 = vmul.f32 %v1501, %v1508
    %v1510 = vmul.f32 %v1502, %v1508
    %v1511 = vmul.f32 %v1503, %v1508
    %v1512 = vmul.f32 %v1504, %v1508
    %v1513 = vlaneseq
    %v1514 = vshrl.u32 %v1513, 7
    %v1515 = vsub.s32 5, %v1514
    %v1516 = vrot.slane %v36, %v1515
    %v1517 = vadd.f32 %v1509, %v1516
    %v1518 = vadd.f32 %v1510, %v1516
    %v1519 = vadd.f32 %v1511, %v1516
    %v1520 = vadd.f32 %v1512, %v1516
    %v1521 = vld [vmem:[%s6] sm:$0xff]
    %v1522 = vld [vmem:[%s6 + $0x8] sm:$0xff]
    %v1523 = vld [vmem:[%s6 + $0x10] sm:$0xff]
    %v1524 = vld [vmem:[%s6 + $0x18] sm:$0xff]
    %v1525 = vlaneseq
    %v1526 = vshrl.u32 %v1525, 7
    %v1527 = vsub.s32 6, %v1526
    %v1528 = vrot.slane %v36, %v1527
    %v1530 = vsel %vm85, %v1517, 0
    %v1533 = vsel %vm85, %v1518, 0
    %v1536 = vsel %vm85, %v1519, 0
    %v1539 = vsel %vm85, %v1520, 0
    %1541 = vmatprep.subr.mxu0 0.0
    %1542 = vmatpush1.msra.mxu0 0.0
    %1543 = vmatprep.subr.mxu0 0.0
    %1544 = vmatpush1.msra.mxu0 0.0
    %1545 = vmatprep.subr.mxu0 0.0
    %1546 = vmatpush1.msra.mxu0 0.0
    %1547 = vmatprep.subr.mxu0 0.0
    %1548 = vmatpush1.msra.mxu0 0.0
    %1549 = vmatprep.subr.mxu0 0.0
    %1550 = vmatpush1.msra.mxu0 0.0
    %1551 = vmatprep.subr.mxu0 0.0
    %1552 = vmatpush1.msra.mxu0 0.0
    %1553 = vmatprep.subr.mxu0 0.0
    %1554 = vmatpush1.msra.mxu0 0.0
    %1555 = vmatprep.subr.mxu0 0.0
    %1556 = vmatpush1.msra.mxu0 0.0
    %1557 = vmatprep.subr.mxu0 0.0
    %1558 = vmatpush1.msra.mxu0 0.0
    %1559 = vmatprep.subr.mxu0 0.0
    %1560 = vmatpush1.msra.mxu0 0.0
    %1561 = vmatprep.subr.mxu0 0.0
    %1562 = vmatpush1.msra.mxu0 0.0
    %1563 = vmatprep.subr.mxu0 0.0
    %1564 = vmatpush1.msra.mxu0 0.0
    %1565 = vmatprep.subr.mxu0 0.0
    %1566 = vmatpush1.msra.mxu0 %v1524
    %1567 = vmatprep.subr.mxu0 0.0
    %1568 = vmatpush1.msra.mxu0 %v1523
    %1569 = vmatprep.subr.mxu0 0.0
    %1570 = vmatpush1.msra.mxu0 %v1522
    %1571 = vmatprep.subr.mxu0 0.0
    %1572 = vmatpush1.msra.mxu0 %v1521
    %1573 = vmatprep.subr.mxu0 0.0
    %1574 = vmatpush2.msra.mxu0 0.0
    %1575 = vmatprep.subr.mxu0 0.0
    %1576 = vmatpush2.msra.mxu0 0.0
    %1577 = vmatprep.subr.mxu0 0.0
    %1578 = vmatpush2.msra.mxu0 0.0
    %1579 = vmatprep.subr.mxu0 0.0
    %1580 = vmatpush2.msra.mxu0 0.0
    %1581 = vmatprep.subr.mxu0 0.0
    %1582 = vmatpush2.msra.mxu0 0.0
    %1583 = vmatprep.subr.mxu0 0.0
    %1584 = vmatpush2.msra.mxu0 0.0
    %1585 = vmatprep.subr.mxu0 0.0
    %1586 = vmatpush2.msra.mxu0 0.0
    %1587 = vmatprep.subr.mxu0 0.0
    %1588 = vmatpush2.msra.mxu0 0.0
    %1589 = vmatprep.subr.mxu0 0.0
    %1590 = vmatpush2.msra.mxu0 0.0
    %1591 = vmatprep.subr.mxu0 0.0
    %1592 = vmatpush2.msra.mxu0 0.0
    %1593 = vmatprep.subr.mxu0 0.0
    %1594 = vmatpush2.msra.mxu0 0.0
    %1595 = vmatprep.subr.mxu0 0.0
    %1596 = vmatpush2.msra.mxu0 0.0
    %1597 = vmatprep.subr.mxu0 0.0
    %1598 = vmatpush2.msra.mxu0 0.0
    %1599 = vmatprep.subr.mxu0 0.0
    %1600 = vmatpush2.msra.mxu0 0.0
    %1601 = vmatprep.subr.mxu0 0.0
    %1602 = vmatpush2.msra.mxu0 0.0
    %1603 = vmatprep.subr.mxu0 0.0
    %1604 = vmatpush2.msra.mxu0 0.0
    %1605 = vmatprep.mubr.f32.mxu0 0.0
    %1606 = vmatmul.mubr.f32.gmra.mxu0 %v1530
    %v1607 = vpop.f32.mrf.mxu0
    %v1608 = vadd.f32 %v1528, %v1607
    %v1609 = vpop.f32.mrf.mxu0
    %1610 = vmatprep.mubr.f32.mxu0 0.0
    %1611 = vmatmul.mubr.f32.gmra.mxu0 %v1533
    %v1612 = vpop.f32.mrf.mxu0
    %v1613 = vadd.f32 %v1528, %v1612
    %v1614 = vpop.f32.mrf.mxu0
    %1615 = vmatprep.mubr.f32.mxu0 0.0
    %1616 = vmatmul.mubr.f32.gmra.mxu0 %v1536
    %v1617 = vpop.f32.mrf.mxu0
    %v1618 = vadd.f32 %v1528, %v1617
    %v1619 = vpop.f32.mrf.mxu0
    %1620 = vmatprep.mubr.f32.mxu0 0.0
    %1621 = vmatmul.mubr.f32.gmra.mxu0 %v1539
    %v1622 = vpop.f32.mrf.mxu0
    %v1623 = vadd.f32 %v1528, %v1622
    %v1624 = vpop.f32.mrf.mxu0
    %1625 = vdwg.mxu0
    %v1626 = vmul.f32 %v1608, %v1608
    %v1627 = vmul.f32 %v1613, %v1613
    %v1628 = vmul.f32 %v1618, %v1618
    %v1629 = vmul.f32 %v1623, %v1623
    %v1630 = vmul.f32 %v1608, %v1626
    %v1631 = vmul.f32 %v1613, %v1627
    %v1632 = vmul.f32 %v1618, %v1628
    %v1633 = vmul.f32 %v1623, %v1629
    %v1634 = vmul.f32 %v1630, 0.044715
    %v1635 = vmul.f32 %v1631, 0.044715
    %v1636 = vmul.f32 %v1632, 0.044715
    %v1637 = vmul.f32 %v1633, 0.044715
    %v1638 = vadd.f32 %v1608, %v1634
    %v1639 = vadd.f32 %v1613, %v1635
    %v1640 = vadd.f32 %v1618, %v1636
    %v1641 = vadd.f32 %v1623, %v1637
    %v1642 = vmul.f32 %v1638, 0.7978846
    %v1643 = vmul.f32 %v1639, 0.7978846
    %v1644 = vmul.f32 %v1640, 0.7978846
    %v1645 = vmul.f32 %v1641, 0.7978846
    %v1646 = vtanh.pop %v1642
    %v1647 = vtanh.pop %v1643
    %v1648 = vtanh.pop %v1644
    %v1649 = vtanh.pop %v1645
    %v1650 = vadd.f32 %v1646, 1.0
    %v1651 = vadd.f32 %v1647, 1.0
    %v1652 = vadd.f32 %v1648, 1.0
    %v1653 = vadd.f32 %v1649, 1.0
    %v1654 = vmul.f32 %v1650, 0.5
    %v1655 = vmul.f32 %v1651, 0.5
    %v1656 = vmul.f32 %v1652, 0.5
    %v1657 = vmul.f32 %v1653, 0.5
    %v1658 = vmul.f32 %v1608, %v1654
    %v1659 = vmul.f32 %v1613, %v1655
    %v1660 = vmul.f32 %v1618, %v1656
    %v1661 = vmul.f32 %v1623, %v1657
    %v1662 = vld [vmem:[%s7] sm:$0xff]
    %v1663 = vld [vmem:[%s7 + $0x8] sm:$0xff]
    %v1664 = vld [vmem:[%s7 + $0x10] sm:$0xff]
    %v1665 = vld [vmem:[%s7 + $0x18] sm:$0xff]
    %v1666 = vld [vmem:[%s7 + $0x20] sm:$0xff]
    %v1667 = vld [vmem:[%s7 + $0x28] sm:$0xff]
    %v1668 = vld [vmem:[%s7 + $0x30] sm:$0xff]
    %v1669 = vld [vmem:[%s7 + $0x38] sm:$0xff]
    %v1670 = vlaneseq
    %v1671 = vshrl.u32 %v1670, 7
    %v1672 = vsub.s32 7, %v1671
    %v1673 = vrot.slane %v36, %v1672
    %vm1674 = vcmask 523264
    %v1676 = vsel %vm1674, %v1658, 0
    %v1679 = vsel %vm1674, %v1659, 0
    %v1682 = vsel %vm1674, %v1660, 0
    %v1685 = vsel %vm1674, %v1661, 0
    %1687 = vmatprep.subr.mxu0 0.0
    %1688 = vmatpush1.msra.mxu0 0.0
    %1689 = vmatprep.subr.mxu0 0.0
    %1690 = vmatpush1.msra.mxu0 0.0
    %1691 = vmatprep.subr.mxu0 0.0
    %1692 = vmatpush1.msra.mxu0 0.0
    %1693 = vmatprep.subr.mxu0 0.0
    %1694 = vmatpush1.msra.mxu0 0.0
    %1695 = vmatprep.subr.mxu0 0.0
    %1696 = vmatpush1.msra.mxu0 0.0
    %1697 = vmatprep.subr.mxu0 0.0
    %1698 = vmatpush1.msra.mxu0 0.0
    %1699 = vmatprep.subr.mxu0 0.0
    %1700 = vmatpush1.msra.mxu0 0.0
    %1701 = vmatprep.subr.mxu0 0.0
    %1702 = vmatpush1.msra.mxu0 0.0
    %1703 = vmatprep.subr.mxu0 0.0
    %1704 = vmatpush1.msra.mxu0 %v1669
    %1705 = vmatprep.subr.mxu0 0.0
    %1706 = vmatpush1.msra.mxu0 %v1668
    %1707 = vmatprep.subr.mxu0 0.0
    %1708 = vmatpush1.msra.mxu0 %v1667
    %1709 = vmatprep.subr.mxu0 0.0
    %1710 = vmatpush1.msra.mxu0 %v1666
    %1711 = vmatprep.subr.mxu0 0.0
    %1712 = vmatpush1.msra.mxu0 %v1665
    %1713 = vmatprep.subr.mxu0 0.0
    %1714 = vmatpush1.msra.mxu0 %v1664
    %1715 = vmatprep.subr.mxu0 0.0
    %1716 = vmatpush1.msra.mxu0 %v1663
    %1717 = vmatprep.subr.mxu0 0.0
    %1718 = vmatpush1.msra.mxu0 %v1662
    %1719 = vmatprep.subr.mxu0 0.0
    %1720 = vmatpush2.msra.mxu0 0.0
    %1721 = vmatprep.subr.mxu0 0.0
    %1722 = vmatpush2.msra.mxu0 0.0
    %1723 = vmatprep.subr.mxu0 0.0
    %1724 = vmatpush2.msra.mxu0 0.0
    %1725 = vmatprep.subr.mxu0 0.0
    %1726 = vmatpush2.msra.mxu0 0.0
    %1727 = vmatprep.subr.mxu0 0.0
    %1728 = vmatpush2.msra.mxu0 0.0
    %1729 = vmatprep.subr.mxu0 0.0
    %1730 = vmatpush2.msra.mxu0 0.0
    %1731 = vmatprep.subr.mxu0 0.0
    %1732 = vmatpush2.msra.mxu0 0.0
    %1733 = vmatprep.subr.mxu0 0.0
    %1734 = vmatpush2.msra.mxu0 0.0
    %1735 = vmatprep.subr.mxu0 0.0
    %1736 = vmatpush2.msra.mxu0 0.0
    %1737 = vmatprep.subr.mxu0 0.0
    %1738 = vmatpush2.msra.mxu0 0.0
    %1739 = vmatprep.subr.mxu0 0.0
    %1740 = vmatpush2.msra.mxu0 0.0
    %1741 = vmatprep.subr.mxu0 0.0
    %1742 = vmatpush2.msra.mxu0 0.0
    %1743 = vmatprep.subr.mxu0 0.0
    %1744 = vmatpush2.msra.mxu0 0.0
    %1745 = vmatprep.subr.mxu0 0.0
    %1746 = vmatpush2.msra.mxu0 0.0
    %1747 = vmatprep.subr.mxu0 0.0
    %1748 = vmatpush2.msra.mxu0 0.0
    %1749 = vmatprep.subr.mxu0 0.0
    %1750 = vmatpush2.msra.mxu0 0.0
    %1751 = vmatprep.mubr.f32.mxu0 0.0
    %1752 = vmatmul.mubr.f32.gmra.mxu0 %v1676
    %v1753 = vpop.f32.mrf.mxu0
    %v1754 = vadd.f32 %v1673, %v1753
    %v1755 = vpop.f32.mrf.mxu0
    %1756 = vmatprep.mubr.f32.mxu0 0.0
    %1757 = vmatmul.mubr.f32.gmra.mxu0 %v1679
    %v1758 = vpop.f32.mrf.mxu0
    %v1759 = vadd.f32 %v1673, %v1758
    %v1760 = vpop.f32.mrf.mxu0
    %1761 = vmatprep.mubr.f32.mxu0 0.0
    %1762 = vmatmul.mubr.f32.gmra.mxu0 %v1682
    %v1763 = vpop.f32.mrf.mxu0
    %v1764 = vadd.f32 %v1673, %v1763
    %v1765 = vpop.f32.mrf.mxu0
    %1766 = vmatprep.mubr.f32.mxu0 0.0
    %1767 = vmatmul.mubr.f32.gmra.mxu0 %v1685
    %v1768 = vpop.f32.mrf.mxu0
    %v1769 = vadd.f32 %v1673, %v1768
    %v1770 = vpop.f32.mrf.mxu0
    %1771 = vdwg.mxu0
    %v1772 = vadd.f32 %v1517, %v1754
    %v1773 = vadd.f32 %v1518, %v1759
    %v1774 = vadd.f32 %v1519, %v1764
    %v1775 = vadd.f32 %v1520, %v1769
    %v1776 = vsel %vm85, %v1772, 0.0
    %1777 = vadd.xlane.f32.xlu0 %v1776
    %v1778 = vpop.xlane.xlu0 %1777
    %v1779 = vsel %vm85, %v1773, 0.0
    %1780 = vadd.xlane.f32.xlu0 %v1779
    %v1781 = vpop.xlane.xlu0 %1780
    %v1782 = vsel %vm85, %v1774, 0.0
    %1783 = vadd.xlane.f32.xlu0 %v1782
    %v1784 = vpop.xlane.xlu0 %1783
    %v1785 = vsel %vm85, %v1775, 0.0
    %1786 = vadd.xlane.f32.xlu0 %v1785
    %v1787 = vpop.xlane.xlu0 %1786
    %v1788 = vmul.f32 %v1778, %v98
    %v1789 = vmul.f32 %v1781, %v98
    %v1790 = vmul.f32 %v1784, %v98
    %v1791 = vmul.f32 %v1787, %v98
    %v1792 = vsub.f32 %v1772, %v1788
    %v1793 = vsub.f32 %v1773, %v1789
    %v1794 = vsub.f32 %v1774, %v1790
    %v1795 = vsub.f32 %v1775, %v1791
    %v1796 = vmul.f32 %v1792, %v1792
    %v1797 = vmul.f32 %v1793, %v1793
    %v1798 = vmul.f32 %v1794, %v1794
    %v1799 = vmul.f32 %v1795, %v1795
    %v1800 = vsel %vm85, %v1796, 0.0
    %1801 = vadd.xlane.f32.xlu0 %v1800
    %v1802 = vpop.xlane.xlu0 %1801
    %v1803 = vsel %vm85, %v1797, 0.0
    %1804 = vadd.xlane.f32.xlu0 %v1803
    %v1805 = vpop.xlane.xlu0 %1804
    %v1806 = vsel %vm85, %v1798, 0.0
    %1807 = vadd.xlane.f32.xlu0 %v1806
    %v1808 = vpop.xlane.xlu0 %1807
    %v1809 = vsel %vm85, %v1799, 0.0
    %1810 = vadd.xlane.f32.xlu0 %v1809
    %v1811 = vpop.xlane.xlu0 %1810
    %v1812 = vmul.f32 %v1802, %v98
    %v1813 = vmul.f32 %v1805, %v98
    %v1814 = vmul.f32 %v1808, %v98
    %v1815 = vmul.f32 %v1811, %v98
    %v1816 = vadd.f32 %v1812, 1e-05
    %v1817 = vadd.f32 %v1813, 1e-05
    %v1818 = vadd.f32 %v1814, 1e-05
    %v1819 = vadd.f32 %v1815, 1e-05
    %v1820 = vrsqrt.pop %v1816
    %v1821 = vrsqrt.pop %v1817
    %v1822 = vrsqrt.pop %v1818
    %v1823 = vrsqrt.pop %v1819
    %v1824 = vmul.f32 %v1792, %v1820
    %v1825 = vmul.f32 %v1793, %v1821
    %v1826 = vmul.f32 %v1794, %v1822
    %v1827 = vmul.f32 %v1795, %v1823
    %v1828 = vlaneseq
    %v1829 = vshrl.u32 %v1828, 7
    %v1830 = vsub.s32 0, %v1829
    %v1831 = vrot.slane %v37, %v1830
    %v1832 = vmul.f32 %v1824, %v1831
    %v1833 = vmul.f32 %v1825, %v1831
    %v1834 = vmul.f32 %v1826, %v1831
    %v1835 = vmul.f32 %v1827, %v1831
    %v1836 = vlaneseq
    %v1837 = vshrl.u32 %v1836, 7
    %v1838 = vsub.s32 1, %v1837
    %v1839 = vrot.slane %v37, %v1838
    %v1840 = vadd.f32 %v1832, %v1839
    %v1841 = vadd.f32 %v1833, %v1839
    %v1842 = vadd.f32 %v1834, %v1839
    %v1843 = vadd.f32 %v1835, %v1839
    %s1844 = scalar_lea.vmem %s5, 32
    %v1845 = vld [vmem:[%s1844] sm:$0xff]
    %v1846 = vld [vmem:[%s1844 + $0x8] sm:$0xff]
    %v1847 = vld [vmem:[%s1844 + $0x10] sm:$0xff]
    %v1848 = vld [vmem:[%s1844 + $0x18] sm:$0xff]
    %s1849 = scalar_lea.vmem %s4, 192
    %v1850 = vld [vmem:[%s1849] sm:$0xff]
    %v1851 = vld [vmem:[%s1849 + $0x8] sm:$0xff]
    %v1852 = vld [vmem:[%s1849 + $0x10] sm:$0xff]
    %v1853 = vld [vmem:[%s1849 + $0x18] sm:$0xff]
    %v1854 = vlaneseq
    %v1855 = vshrl.u32 %v1854, 7
    %v1856 = vsub.s32 2, %v1855
    %v1857 = vrot.slane %v37, %v1856
    %v1859 = vsel %vm85, %v1840, 0
    %v1862 = vsel %vm85, %v1841, 0
    %v1865 = vsel %vm85, %v1842, 0
    %v1868 = vsel %vm85, %v1843, 0
    %1870 = vmatprep.subr.mxu0 0.0
    %1871 = vmatpush1.msra.mxu0 0.0
    %1872 = vmatprep.subr.mxu0 0.0
    %1873 = vmatpush1.msra.mxu0 0.0
    %1874 = vmatprep.subr.mxu0 0.0
    %1875 = vmatpush1.msra.mxu0 0.0
    %1876 = vmatprep.subr.mxu0 0.0
    %1877 = vmatpush1.msra.mxu0 0.0
    %1878 = vmatprep.subr.mxu0 0.0
    %1879 = vmatpush1.msra.mxu0 0.0
    %1880 = vmatprep.subr.mxu0 0.0
    %1881 = vmatpush1.msra.mxu0 0.0
    %1882 = vmatprep.subr.mxu0 0.0
    %1883 = vmatpush1.msra.mxu0 0.0
    %1884 = vmatprep.subr.mxu0 0.0
    %1885 = vmatpush1.msra.mxu0 0.0
    %1886 = vmatprep.subr.mxu0 0.0
    %1887 = vmatpush1.msra.mxu0 0.0
    %1888 = vmatprep.subr.mxu0 0.0
    %1889 = vmatpush1.msra.mxu0 0.0
    %1890 = vmatprep.subr.mxu0 0.0
    %1891 = vmatpush1.msra.mxu0 0.0
    %1892 = vmatprep.subr.mxu0 0.0
    %1893 = vmatpush1.msra.mxu0 0.0
    %1894 = vmatprep.subr.mxu0 0.0
    %1895 = vmatpush1.msra.mxu0 %v1853
    %1896 = vmatprep.subr.mxu0 0.0
    %1897 = vmatpush1.msra.mxu0 %v1852
    %1898 = vmatprep.subr.mxu0 0.0
    %1899 = vmatpush1.msra.mxu0 %v1851
    %1900 = vmatprep.subr.mxu0 0.0
    %1901 = vmatpush1.msra.mxu0 %v1850
    %1902 = vmatprep.subr.mxu0 0.0
    %1903 = vmatpush2.msra.mxu0 0.0
    %1904 = vmatprep.subr.mxu0 0.0
    %1905 = vmatpush2.msra.mxu0 0.0
    %1906 = vmatprep.subr.mxu0 0.0
    %1907 = vmatpush2.msra.mxu0 0.0
    %1908 = vmatprep.subr.mxu0 0.0
    %1909 = vmatpush2.msra.mxu0 0.0
    %1910 = vmatprep.subr.mxu0 0.0
    %1911 = vmatpush2.msra.mxu0 0.0
    %1912 = vmatprep.subr.mxu0 0.0
    %1913 = vmatpush2.msra.mxu0 0.0
    %1914 = vmatprep.subr.mxu0 0.0
    %1915 = vmatpush2.msra.mxu0 0.0
    %1916 = vmatprep.subr.mxu0 0.0
    %1917 = vmatpush2.msra.mxu0 0.0
    %1918 = vmatprep.subr.mxu0 0.0
    %1919 = vmatpush2.msra.mxu0 0.0
    %1920 = vmatprep.subr.mxu0 0.0
    %1921 = vmatpush2.msra.mxu0 0.0
    %1922 = vmatprep.subr.mxu0 0.0
    %1923 = vmatpush2.msra.mxu0 0.0
    %1924 = vmatprep.subr.mxu0 0.0
    %1925 = vmatpush2.msra.mxu0 0.0
    %1926 = vmatprep.subr.mxu0 0.0
    %1927 = vmatpush2.msra.mxu0 0.0
    %1928 = vmatprep.subr.mxu0 0.0
    %1929 = vmatpush2.msra.mxu0 0.0
    %1930 = vmatprep.subr.mxu0 0.0
    %1931 = vmatpush2.msra.mxu0 0.0
    %1932 = vmatprep.subr.mxu0 0.0
    %1933 = vmatpush2.msra.mxu0 0.0
    %1934 = vmatprep.mubr.f32.mxu0 0.0
    %1935 = vmatmul.mubr.f32.gmra.mxu0 %v1859
    %v1936 = vpop.f32.mrf.mxu0
    %v1937 = vadd.f32 %v1857, %v1936
    %v1938 = vpop.f32.mrf.mxu0
    %1939 = vmatprep.mubr.f32.mxu0 0.0
    %1940 = vmatmul.mubr.f32.gmra.mxu0 %v1862
    %v1941 = vpop.f32.mrf.mxu0
    %v1942 = vadd.f32 %v1857, %v1941
    %v1943 = vpop.f32.mrf.mxu0
    %1944 = vmatprep.mubr.f32.mxu0 0.0
    %1945 = vmatmul.mubr.f32.gmra.mxu0 %v1865
    %v1946 = vpop.f32.mrf.mxu0
    %v1947 = vadd.f32 %v1857, %v1946
    %v1948 = vpop.f32.mrf.mxu0
    %1949 = vmatprep.mubr.f32.mxu0 0.0
    %1950 = vmatmul.mubr.f32.gmra.mxu0 %v1868
    %v1951 = vpop.f32.mrf.mxu0
    %v1952 = vadd.f32 %v1857, %v1951
    %v1953 = vpop.f32.mrf.mxu0
    %1954 = vdwg.mxu0
    %s1955 = scalar_lea.vmem %s4, 224
    %v1956 = vld [vmem:[%s1955] sm:$0xff]
    %v1957 = vld [vmem:[%s1955 + $0x8] sm:$0xff]
    %v1958 = vld [vmem:[%s1955 + $0x10] sm:$0xff]
    %v1959 = vld [vmem:[%s1955 + $0x18] sm:$0xff]
    %1961 = vrot.lane.b32.xlu0 %v1857, 96
    %v1962 = vpop.permute.xlu0 %1961
    %1964 = vmatprep.subr.mxu0 0.0
    %1965 = vmatpush1.msra.mxu0 0.0
    %1966 = vmatprep.subr.mxu0 0.0
    %1967 = vmatpush1.msra.mxu0 0.0
    %1968 = vmatprep.subr.mxu0 0.0
    %1969 = vmatpush1.msra.mxu0 0.0
    %1970 = vmatprep.subr.mxu0 0.0
    %1971 = vmatpush1.msra.mxu0 0.0
    %1972 = vmatprep.subr.mxu0 0.0
    %1973 = vmatpush1.msra.mxu0 0.0
    %1974 = vmatprep.subr.mxu0 0.0
    %1975 = vmatpush1.msra.mxu0 0.0
    %1976 = vmatprep.subr.mxu0 0.0
    %1977 = vmatpush1.msra.mxu0 0.0
    %1978 = vmatprep.subr.mxu0 0.0
    %1979 = vmatpush1.msra.mxu0 0.0
    %1980 = vmatprep.subr.mxu0 0.0
    %1981 = vmatpush1.msra.mxu0 0.0
    %1982 = vmatprep.subr.mxu0 0.0
    %1983 = vmatpush1.msra.mxu0 0.0
    %1984 = vmatprep.subr.mxu0 0.0
    %1985 = vmatpush1.msra.mxu0 0.0
    %1986 = vmatprep.subr.mxu0 0.0
    %1987 = vmatpush1.msra.mxu0 0.0
    %1988 = vmatprep.subr.mxu0 0.0
    %1989 = vmatpush1.msra.mxu0 %v1959
    %1990 = vmatprep.subr.mxu0 0.0
    %1991 = vmatpush1.msra.mxu0 %v1958
    %1992 = vmatprep.subr.mxu0 0.0
    %1993 = vmatpush1.msra.mxu0 %v1957
    %1994 = vmatprep.subr.mxu0 0.0
    %1995 = vmatpush1.msra.mxu0 %v1956
    %1996 = vmatprep.subr.mxu0 0.0
    %1997 = vmatpush2.msra.mxu0 0.0
    %1998 = vmatprep.subr.mxu0 0.0
    %1999 = vmatpush2.msra.mxu0 0.0
    %2000 = vmatprep.subr.mxu0 0.0
    %2001 = vmatpush2.msra.mxu0 0.0
    %2002 = vmatprep.subr.mxu0 0.0
    %2003 = vmatpush2.msra.mxu0 0.0
    %2004 = vmatprep.subr.mxu0 0.0
    %2005 = vmatpush2.msra.mxu0 0.0
    %2006 = vmatprep.subr.mxu0 0.0
    %2007 = vmatpush2.msra.mxu0 0.0
    %2008 = vmatprep.subr.mxu0 0.0
    %2009 = vmatpush2.msra.mxu0 0.0
    %2010 = vmatprep.subr.mxu0 0.0
    %2011 = vmatpush2.msra.mxu0 0.0
    %2012 = vmatprep.subr.mxu0 0.0
    %2013 = vmatpush2.msra.mxu0 0.0
    %2014 = vmatprep.subr.mxu0 0.0
    %2015 = vmatpush2.msra.mxu0 0.0
    %2016 = vmatprep.subr.mxu0 0.0
    %2017 = vmatpush2.msra.mxu0 0.0
    %2018 = vmatprep.subr.mxu0 0.0
    %2019 = vmatpush2.msra.mxu0 0.0
    %2020 = vmatprep.subr.mxu0 0.0
    %2021 = vmatpush2.msra.mxu0 0.0
    %2022 = vmatprep.subr.mxu0 0.0
    %2023 = vmatpush2.msra.mxu0 0.0
    %2024 = vmatprep.subr.mxu0 0.0
    %2025 = vmatpush2.msra.mxu0 0.0
    %2026 = vmatprep.subr.mxu0 0.0
    %2027 = vmatpush2.msra.mxu0 0.0
    %2028 = vmatprep.mubr.f32.mxu0 0.0
    %2029 = vmatmul.mubr.f32.gmra.mxu0 %v1859
    %v2030 = vpop.f32.mrf.mxu0
    %v2031 = vadd.f32 %v1962, %v2030
    %v2032 = vpop.f32.mrf.mxu0
    %2033 = vmatprep.mubr.f32.mxu0 0.0
    %2034 = vmatmul.mubr.f32.gmra.mxu0 %v1862
    %v2035 = vpop.f32.mrf.mxu0
    %v2036 = vadd.f32 %v1962, %v2035
    %v2037 = vpop.f32.mrf.mxu0
    %2038 = vmatprep.mubr.f32.mxu0 0.0
    %2039 = vmatmul.mubr.f32.gmra.mxu0 %v1865
    %v2040 = vpop.f32.mrf.mxu0
    %v2041 = vadd.f32 %v1962, %v2040
    %v2042 = vpop.f32.mrf.mxu0
    %2043 = vmatprep.mubr.f32.mxu0 0.0
    %2044 = vmatmul.mubr.f32.gmra.mxu0 %v1868
    %v2045 = vpop.f32.mrf.mxu0
    %v2046 = vadd.f32 %v1962, %v2045
    %v2047 = vpop.f32.mrf.mxu0
    %2048 = vdwg.mxu0
    %s2049 = scalar_lea.vmem %s4, 256
    %v2050 = vld [vmem:[%s2049] sm:$0xff]
    %v2051 = vld [vmem:[%s2049 + $0x8] sm:$0xff]
    %v2052 = vld [vmem:[%s2049 + $0x10] sm:$0xff]
    %v2053 = vld [vmem:[%s2049 + $0x18] sm:$0xff]
    %2054 = vrot.lane.b32.xlu0 %v1857, 64
    %v2055 = vpop.permute.xlu0 %2054
    %2057 = vmatprep.subr.mxu0 0.0
    %2058 = vmatpush1.msra.mxu0 0.0
    %2059 = vmatprep.subr.mxu0 0.0
    %2060 = vmatpush1.msra.mxu0 0.0
    %2061 = vmatprep.subr.mxu0 0.0
    %2062 = vmatpush1.msra.mxu0 0.0
    %2063 = vmatprep.subr.mxu0 0.0
    %2064 = vmatpush1.msra.mxu0 0.0
    %2065 = vmatprep.subr.mxu0 0.0
    %2066 = vmatpush1.msra.mxu0 0.0
    %2067 = vmatprep.subr.mxu0 0.0
    %2068 = vmatpush1.msra.mxu0 0.0
    %2069 = vmatprep.subr.mxu0 0.0
    %2070 = vmatpush1.msra.mxu0 0.0
    %2071 = vmatprep.subr.mxu0 0.0
    %2072 = vmatpush1.msra.mxu0 0.0
    %2073 = vmatprep.subr.mxu0 0.0
    %2074 = vmatpush1.msra.mxu0 0.0
    %2075 = vmatprep.subr.mxu0 0.0
    %2076 = vmatpush1.msra.mxu0 0.0
    %2077 = vmatprep.subr.mxu0 0.0
    %2078 = vmatpush1.msra.mxu0 0.0
    %2079 = vmatprep.subr.mxu0 0.0
    %2080 = vmatpush1.msra.mxu0 0.0
    %2081 = vmatprep.subr.mxu0 0.0
    %2082 = vmatpush1.msra.mxu0 %v2053
    %2083 = vmatprep.subr.mxu0 0.0
    %2084 = vmatpush1.msra.mxu0 %v2052
    %2085 = vmatprep.subr.mxu0 0.0
    %2086 = vmatpush1.msra.mxu0 %v2051
    %2087 = vmatprep.subr.mxu0 0.0
    %2088 = vmatpush1.msra.mxu0 %v2050
    %2089 = vmatprep.subr.mxu0 0.0
    %2090 = vmatpush2.msra.mxu0 0.0
    %2091 = vmatprep.subr.mxu0 0.0
    %2092 = vmatpush2.msra.mxu0 0.0
    %2093 = vmatprep.subr.mxu0 0.0
    %2094 = vmatpush2.msra.mxu0 0.0
    %2095 = vmatprep.subr.mxu0 0.0
    %2096 = vmatpush2.msra.mxu0 0.0
    %2097 = vmatprep.subr.mxu0 0.0
    %2098 = vmatpush2.msra.mxu0 0.0
    %2099 = vmatprep.subr.mxu0 0.0
    %2100 = vmatpush2.msra.mxu0 0.0
    %2101 = vmatprep.subr.mxu0 0.0
    %2102 = vmatpush2.msra.mxu0 0.0
    %2103 = vmatprep.subr.mxu0 0.0
    %2104 = vmatpush2.msra.mxu0 0.0
    %2105 = vmatprep.subr.mxu0 0.0
    %2106 = vmatpush2.msra.mxu0 0.0
    %2107 = vmatprep.subr.mxu0 0.0
    %2108 = vmatpush2.msra.mxu0 0.0
    %2109 = vmatprep.subr.mxu0 0.0
    %2110 = vmatpush2.msra.mxu0 0.0
    %2111 = vmatprep.subr.mxu0 0.0
    %2112 = vmatpush2.msra.mxu0 0.0
    %2113 = vmatprep.subr.mxu0 0.0
    %2114 = vmatpush2.msra.mxu0 0.0
    %2115 = vmatprep.subr.mxu0 0.0
    %2116 = vmatpush2.msra.mxu0 0.0
    %2117 = vmatprep.subr.mxu0 0.0
    %2118 = vmatpush2.msra.mxu0 0.0
    %2119 = vmatprep.subr.mxu0 0.0
    %2120 = vmatpush2.msra.mxu0 0.0
    %2121 = vmatprep.mubr.f32.mxu0 0.0
    %2122 = vmatmul.mubr.f32.gmra.mxu0 %v1859
    %v2123 = vpop.f32.mrf.mxu0
    %v2124 = vadd.f32 %v2055, %v2123
    %v2125 = vpop.f32.mrf.mxu0
    %2126 = vmatprep.mubr.f32.mxu0 0.0
    %2127 = vmatmul.mubr.f32.gmra.mxu0 %v1862
    %v2128 = vpop.f32.mrf.mxu0
    %v2129 = vadd.f32 %v2055, %v2128
    %v2130 = vpop.f32.mrf.mxu0
    %2131 = vmatprep.mubr.f32.mxu0 0.0
    %2132 = vmatmul.mubr.f32.gmra.mxu0 %v1865
    %v2133 = vpop.f32.mrf.mxu0
    %v2134 = vadd.f32 %v2055, %v2133
    %v2135 = vpop.f32.mrf.mxu0
    %2136 = vmatprep.mubr.f32.mxu0 0.0
    %2137 = vmatmul.mubr.f32.gmra.mxu0 %v1868
    %v2138 = vpop.f32.mrf.mxu0
    %v2139 = vadd.f32 %v2055, %v2138
    %v2140 = vpop.f32.mrf.mxu0
    %2141 = vdwg.mxu0
    %v2143 = vsel %vm451, %v1937, 0
    %v2146 = vsel %vm451, %v1942, 0
    %v2149 = vsel %vm451, %v1947, 0
    %v2152 = vsel %vm451, %v1952, 0
    %v2155 = vsel %vm451, %v2031, 0
    %v2158 = vsel %vm451, %v2036, 0
    %v2161 = vsel %vm451, %v2041, 0
    %v2164 = vsel %vm451, %v2046, 0
    %2166 = vmatprep.subr.mxu0 0.0
    %2167 = vmatpush1.xpose.msra.mxu0 0.0
    %2168 = vmatprep.subr.mxu0 0.0
    %2169 = vmatpush1.xpose.msra.mxu0 0.0
    %2170 = vmatprep.subr.mxu0 0.0
    %2171 = vmatpush1.xpose.msra.mxu0 0.0
    %2172 = vmatprep.subr.mxu0 0.0
    %2173 = vmatpush1.xpose.msra.mxu0 0.0
    %2174 = vmatprep.subr.mxu0 0.0
    %2175 = vmatpush1.xpose.msra.mxu0 0.0
    %2176 = vmatprep.subr.mxu0 0.0
    %2177 = vmatpush1.xpose.msra.mxu0 0.0
    %2178 = vmatprep.subr.mxu0 0.0
    %2179 = vmatpush1.xpose.msra.mxu0 0.0
    %2180 = vmatprep.subr.mxu0 0.0
    %2181 = vmatpush1.xpose.msra.mxu0 0.0
    %2182 = vmatprep.subr.mxu0 0.0
    %2183 = vmatpush1.xpose.msra.mxu0 0.0
    %2184 = vmatprep.subr.mxu0 0.0
    %2185 = vmatpush1.xpose.msra.mxu0 0.0
    %2186 = vmatprep.subr.mxu0 0.0
    %2187 = vmatpush1.xpose.msra.mxu0 0.0
    %2188 = vmatprep.subr.mxu0 0.0
    %2189 = vmatpush1.xpose.msra.mxu0 0.0
    %2190 = vmatprep.subr.mxu0 0.0
    %2191 = vmatpush1.xpose.msra.mxu0 %v2164
    %2192 = vmatprep.subr.mxu0 0.0
    %2193 = vmatpush1.xpose.msra.mxu0 %v2161
    %2194 = vmatprep.subr.mxu0 0.0
    %2195 = vmatpush1.xpose.msra.mxu0 %v2158
    %2196 = vmatprep.subr.mxu0 0.0
    %2197 = vmatpush1.xpose.msra.mxu0 %v2155
    %2198 = vmatprep.subr.mxu0 0.0
    %2199 = vmatpush2.xpose.msra.mxu0 0.0
    %2200 = vmatprep.subr.mxu0 0.0
    %2201 = vmatpush2.xpose.msra.mxu0 0.0
    %2202 = vmatprep.subr.mxu0 0.0
    %2203 = vmatpush2.xpose.msra.mxu0 0.0
    %2204 = vmatprep.subr.mxu0 0.0
    %2205 = vmatpush2.xpose.msra.mxu0 0.0
    %2206 = vmatprep.subr.mxu0 0.0
    %2207 = vmatpush2.xpose.msra.mxu0 0.0
    %2208 = vmatprep.subr.mxu0 0.0
    %2209 = vmatpush2.xpose.msra.mxu0 0.0
    %2210 = vmatprep.subr.mxu0 0.0
    %2211 = vmatpush2.xpose.msra.mxu0 0.0
    %2212 = vmatprep.subr.mxu0 0.0
    %2213 = vmatpush2.xpose.msra.mxu0 0.0
    %2214 = vmatprep.subr.mxu0 0.0
    %2215 = vmatpush2.xpose.msra.mxu0 0.0
    %2216 = vmatprep.subr.mxu0 0.0
    %2217 = vmatpush2.xpose.msra.mxu0 0.0
    %2218 = vmatprep.subr.mxu0 0.0
    %2219 = vmatpush2.xpose.msra.mxu0 0.0
    %2220 = vmatprep.subr.mxu0 0.0
    %2221 = vmatpush2.xpose.msra.mxu0 0.0
    %2222 = vmatprep.subr.mxu0 0.0
    %2223 = vmatpush2.xpose.msra.mxu0 0.0
    %2224 = vmatprep.subr.mxu0 0.0
    %2225 = vmatpush2.xpose.msra.mxu0 0.0
    %2226 = vmatprep.subr.mxu0 0.0
    %2227 = vmatpush2.xpose.msra.mxu0 0.0
    %2228 = vmatprep.subr.mxu0 0.0
    %2229 = vmatpush2.xpose.msra.mxu0 0.0
    %2230 = vmatprep.mubr.f32.mxu0 0.0
    %2231 = vmatmul.mubr.f32.gmra.mxu0 %v2143
    %v2232 = vpop.f32.mrf.mxu0
    %v2233 = vadd.f32 0.0, %v2232
    %v2234 = vpop.f32.mrf.mxu0
    %2235 = vmatprep.mubr.f32.mxu0 0.0
    %2236 = vmatmul.mubr.f32.gmra.mxu0 %v2146
    %v2237 = vpop.f32.mrf.mxu0
    %v2238 = vadd.f32 0.0, %v2237
    %v2239 = vpop.f32.mrf.mxu0
    %2240 = vmatprep.mubr.f32.mxu0 0.0
    %2241 = vmatmul.mubr.f32.gmra.mxu0 %v2149
    %v2242 = vpop.f32.mrf.mxu0
    %v2243 = vadd.f32 0.0, %v2242
    %v2244 = vpop.f32.mrf.mxu0
    %2245 = vmatprep.mubr.f32.mxu0 0.0
    %2246 = vmatmul.mubr.f32.gmra.mxu0 %v2152
    %v2247 = vpop.f32.mrf.mxu0
    %v2248 = vadd.f32 0.0, %v2247
    %v2249 = vpop.f32.mrf.mxu0
    %2250 = vdwg.mxu0
    %v2251 = vmul.f32 %v2233, 0.25
    %v2252 = vmul.f32 %v2238, 0.25
    %v2253 = vmul.f32 %v2243, 0.25
    %v2254 = vmul.f32 %v2248, 0.25
    %v2255 = vadd.f32 %v2251, %v77
    %v2256 = vadd.f32 %v2252, %v78
    %v2257 = vadd.f32 %v2253, %v79
    %v2258 = vadd.f32 %v2254, %v80
    %v2259 = vsel %vm85, %v2255, -inf
    %2260 = vmax.xlane.f32.xlu0 %v2259
    %v2261 = vpop.xlane.xlu0 %2260
    %v2262 = vsel %vm85, %v2256, -inf
    %2263 = vmax.xlane.f32.xlu0 %v2262
    %v2264 = vpop.xlane.xlu0 %2263
    %v2265 = vsel %vm85, %v2257, -inf
    %2266 = vmax.xlane.f32.xlu0 %v2265
    %v2267 = vpop.xlane.xlu0 %2266
    %v2268 = vsel %vm85, %v2258, -inf
    %2269 = vmax.xlane.f32.xlu0 %v2268
    %v2270 = vpop.xlane.xlu0 %2269
    %v2271 = vsub.f32 %v2255, %v2261
    %v2272 = vsub.f32 %v2256, %v2264
    %v2273 = vsub.f32 %v2257, %v2267
    %v2274 = vsub.f32 %v2258, %v2270
    %v2275 = vmul.f32 %v2271, 1.442695
    %v2276 = vpow.pop %v2275
    %v2277 = vmul.f32 %v2272, 1.442695
    %v2278 = vpow.pop %v2277
    %v2279 = vmul.f32 %v2273, 1.442695
    %v2280 = vpow.pop %v2279
    %v2281 = vmul.f32 %v2274, 1.442695
    %v2282 = vpow.pop %v2281
    %v2283 = vsel %vm85, %v2276, 0.0
    %2284 = vadd.xlane.f32.xlu0 %v2283
    %v2285 = vpop.xlane.xlu0 %2284
    %v2286 = vsel %vm85, %v2278, 0.0
    %2287 = vadd.xlane.f32.xlu0 %v2286
    %v2288 = vpop.xlane.xlu0 %2287
    %v2289 = vsel %vm85, %v2280, 0.0
    %2290 = vadd.xlane.f32.xlu0 %v2289
    %v2291 = vpop.xlane.xlu0 %2290
    %v2292 = vsel %vm85, %v2282, 0.0
    %2293 = vadd.xlane.f32.xlu0 %v2292
    %v2294 = vpop.xlane.xlu0 %2293
    %v2295 = vrcp.pop %v2285
    %v2296 = vrcp.pop %v2288
    %v2297 = vrcp.pop %v2291
    %v2298 = vrcp.pop %v2294
    %v2299 = vmul.f32 %v2276, %v2295
    %v2300 = vmul.f32 %v2278, %v2296
    %v2301 = vmul.f32 %v2280, %v2297
    %v2302 = vmul.f32 %v2282, %v2298
    %v2304 = vsel %vm85, %v2299, 0
    %v2307 = vsel %vm85, %v2300, 0
    %v2310 = vsel %vm85, %v2301, 0
    %v2313 = vsel %vm85, %v2302, 0
    %2315 = vmatprep.subr.mxu0 0.0
    %2316 = vmatpush1.msra.mxu0 0.0
    %2317 = vmatprep.subr.mxu0 0.0
    %2318 = vmatpush1.msra.mxu0 0.0
    %2319 = vmatprep.subr.mxu0 0.0
    %2320 = vmatpush1.msra.mxu0 0.0
    %2321 = vmatprep.subr.mxu0 0.0
    %2322 = vmatpush1.msra.mxu0 0.0
    %2323 = vmatprep.subr.mxu0 0.0
    %2324 = vmatpush1.msra.mxu0 0.0
    %2325 = vmatprep.subr.mxu0 0.0
    %2326 = vmatpush1.msra.mxu0 0.0
    %2327 = vmatprep.subr.mxu0 0.0
    %2328 = vmatpush1.msra.mxu0 0.0
    %2329 = vmatprep.subr.mxu0 0.0
    %2330 = vmatpush1.msra.mxu0 0.0
    %2331 = vmatprep.subr.mxu0 0.0
    %2332 = vmatpush1.msra.mxu0 0.0
    %2333 = vmatprep.subr.mxu0 0.0
    %2334 = vmatpush1.msra.mxu0 0.0
    %2335 = vmatprep.subr.mxu0 0.0
    %2336 = vmatpush1.msra.mxu0 0.0
    %2337 = vmatprep.subr.mxu0 0.0
    %2338 = vmatpush1.msra.mxu0 0.0
    %2339 = vmatprep.subr.mxu0 0.0
    %2340 = vmatpush1.msra.mxu0 %v2139
    %2341 = vmatprep.subr.mxu0 0.0
    %2342 = vmatpush1.msra.mxu0 %v2134
    %2343 = vmatprep.subr.mxu0 0.0
    %2344 = vmatpush1.msra.mxu0 %v2129
    %2345 = vmatprep.subr.mxu0 0.0
    %2346 = vmatpush1.msra.mxu0 %v2124
    %2347 = vmatprep.subr.mxu0 0.0
    %2348 = vmatpush2.msra.mxu0 0.0
    %2349 = vmatprep.subr.mxu0 0.0
    %2350 = vmatpush2.msra.mxu0 0.0
    %2351 = vmatprep.subr.mxu0 0.0
    %2352 = vmatpush2.msra.mxu0 0.0
    %2353 = vmatprep.subr.mxu0 0.0
    %2354 = vmatpush2.msra.mxu0 0.0
    %2355 = vmatprep.subr.mxu0 0.0
    %2356 = vmatpush2.msra.mxu0 0.0
    %2357 = vmatprep.subr.mxu0 0.0
    %2358 = vmatpush2.msra.mxu0 0.0
    %2359 = vmatprep.subr.mxu0 0.0
    %2360 = vmatpush2.msra.mxu0 0.0
    %2361 = vmatprep.subr.mxu0 0.0
    %2362 = vmatpush2.msra.mxu0 0.0
    %2363 = vmatprep.subr.mxu0 0.0
    %2364 = vmatpush2.msra.mxu0 0.0
    %2365 = vmatprep.subr.mxu0 0.0
    %2366 = vmatpush2.msra.mxu0 0.0
    %2367 = vmatprep.subr.mxu0 0.0
    %2368 = vmatpush2.msra.mxu0 0.0
    %2369 = vmatprep.subr.mxu0 0.0
    %2370 = vmatpush2.msra.mxu0 0.0
    %2371 = vmatprep.subr.mxu0 0.0
    %2372 = vmatpush2.msra.mxu0 0.0
    %2373 = vmatprep.subr.mxu0 0.0
    %2374 = vmatpush2.msra.mxu0 0.0
    %2375 = vmatprep.subr.mxu0 0.0
    %2376 = vmatpush2.msra.mxu0 0.0
    %2377 = vmatprep.subr.mxu0 0.0
    %2378 = vmatpush2.msra.mxu0 0.0
    %2379 = vmatprep.mubr.f32.mxu0 0.0
    %2380 = vmatmul.mubr.f32.gmra.mxu0 %v2304
    %v2381 = vpop.f32.mrf.mxu0
    %v2382 = vadd.f32 0.0, %v2381
    %v2383 = vpop.f32.mrf.mxu0
    %2384 = vmatprep.mubr.f32.mxu0 0.0
    %2385 = vmatmul.mubr.f32.gmra.mxu0 %v2307
    %v2386 = vpop.f32.mrf.mxu0
    %v2387 = vadd.f32 0.0, %v2386
    %v2388 = vpop.f32.mrf.mxu0
    %2389 = vmatprep.mubr.f32.mxu0 0.0
    %2390 = vmatmul.mubr.f32.gmra.mxu0 %v2310
    %v2391 = vpop.f32.mrf.mxu0
    %v2392 = vadd.f32 0.0, %v2391
    %v2393 = vpop.f32.mrf.mxu0
    %2394 = vmatprep.mubr.f32.mxu0 0.0
    %2395 = vmatmul.mubr.f32.gmra.mxu0 %v2313
    %v2396 = vpop.f32.mrf.mxu0
    %v2397 = vadd.f32 0.0, %v2396
    %v2398 = vpop.f32.mrf.mxu0
    %2399 = vdwg.mxu0
    %s2400 = scalar_lea.vmem %s4, 288
    %v2401 = vld [vmem:[%s2400] sm:$0xff]
    %v2402 = vld [vmem:[%s2400 + $0x8] sm:$0xff]
    %v2403 = vld [vmem:[%s2400 + $0x10] sm:$0xff]
    %v2404 = vld [vmem:[%s2400 + $0x18] sm:$0xff]
    %2405 = vrot.lane.b32.xlu0 %v1857, 112
    %v2406 = vpop.permute.xlu0 %2405
    %2408 = vmatprep.subr.mxu0 0.0
    %2409 = vmatpush1.msra.mxu0 0.0
    %2410 = vmatprep.subr.mxu0 0.0
    %2411 = vmatpush1.msra.mxu0 0.0
    %2412 = vmatprep.subr.mxu0 0.0
    %2413 = vmatpush1.msra.mxu0 0.0
    %2414 = vmatprep.subr.mxu0 0.0
    %2415 = vmatpush1.msra.mxu0 0.0
    %2416 = vmatprep.subr.mxu0 0.0
    %2417 = vmatpush1.msra.mxu0 0.0
    %2418 = vmatprep.subr.mxu0 0.0
    %2419 = vmatpush1.msra.mxu0 0.0
    %2420 = vmatprep.subr.mxu0 0.0
    %2421 = vmatpush1.msra.mxu0 0.0
    %2422 = vmatprep.subr.mxu0 0.0
    %2423 = vmatpush1.msra.mxu0 0.0
    %2424 = vmatprep.subr.mxu0 0.0
    %2425 = vmatpush1.msra.mxu0 0.0
    %2426 = vmatprep.subr.mxu0 0.0
    %2427 = vmatpush1.msra.mxu0 0.0
    %2428 = vmatprep.subr.mxu0 0.0
    %2429 = vmatpush1.msra.mxu0 0.0
    %2430 = vmatprep.subr.mxu0 0.0
    %2431 = vmatpush1.msra.mxu0 0.0
    %2432 = vmatprep.subr.mxu0 0.0
    %2433 = vmatpush1.msra.mxu0 %v2404
    %2434 = vmatprep.subr.mxu0 0.0
    %2435 = vmatpush1.msra.mxu0 %v2403
    %2436 = vmatprep.subr.mxu0 0.0
    %2437 = vmatpush1.msra.mxu0 %v2402
    %2438 = vmatprep.subr.mxu0 0.0
    %2439 = vmatpush1.msra.mxu0 %v2401
    %2440 = vmatprep.subr.mxu0 0.0
    %2441 = vmatpush2.msra.mxu0 0.0
    %2442 = vmatprep.subr.mxu0 0.0
    %2443 = vmatpush2.msra.mxu0 0.0
    %2444 = vmatprep.subr.mxu0 0.0
    %2445 = vmatpush2.msra.mxu0 0.0
    %2446 = vmatprep.subr.mxu0 0.0
    %2447 = vmatpush2.msra.mxu0 0.0
    %2448 = vmatprep.subr.mxu0 0.0
    %2449 = vmatpush2.msra.mxu0 0.0
    %2450 = vmatprep.subr.mxu0 0.0
    %2451 = vmatpush2.msra.mxu0 0.0
    %2452 = vmatprep.subr.mxu0 0.0
    %2453 = vmatpush2.msra.mxu0 0.0
    %2454 = vmatprep.subr.mxu0 0.0
    %2455 = vmatpush2.msra.mxu0 0.0
    %2456 = vmatprep.subr.mxu0 0.0
    %2457 = vmatpush2.msra.mxu0 0.0
    %2458 = vmatprep.subr.mxu0 0.0
    %2459 = vmatpush2.msra.mxu0 0.0
    %2460 = vmatprep.subr.mxu0 0.0
    %2461 = vmatpush2.msra.mxu0 0.0
    %2462 = vmatprep.subr.mxu0 0.0
    %2463 = vmatpush2.msra.mxu0 0.0
    %2464 = vmatprep.subr.mxu0 0.0
    %2465 = vmatpush2.msra.mxu0 0.0
    %2466 = vmatprep.subr.mxu0 0.0
    %2467 = vmatpush2.msra.mxu0 0.0
    %2468 = vmatprep.subr.mxu0 0.0
    %2469 = vmatpush2.msra.mxu0 0.0
    %2470 = vmatprep.subr.mxu0 0.0
    %2471 = vmatpush2.msra.mxu0 0.0
    %2472 = vmatprep.mubr.f32.mxu0 0.0
    %2473 = vmatmul.mubr.f32.gmra.mxu0 %v1859
    %v2474 = vpop.f32.mrf.mxu0
    %v2475 = vadd.f32 %v2406, %v2474
    %v2476 = vpop.f32.mrf.mxu0
    %2477 = vmatprep.mubr.f32.mxu0 0.0
    %2478 = vmatmul.mubr.f32.gmra.mxu0 %v1862
    %v2479 = vpop.f32.mrf.mxu0
    %v2480 = vadd.f32 %v2406, %v2479
    %v2481 = vpop.f32.mrf.mxu0
    %2482 = vmatprep.mubr.f32.mxu0 0.0
    %2483 = vmatmul.mubr.f32.gmra.mxu0 %v1865
    %v2484 = vpop.f32.mrf.mxu0
    %v2485 = vadd.f32 %v2406, %v2484
    %v2486 = vpop.f32.mrf.mxu0
    %2487 = vmatprep.mubr.f32.mxu0 0.0
    %2488 = vmatmul.mubr.f32.gmra.mxu0 %v1868
    %v2489 = vpop.f32.mrf.mxu0
    %v2490 = vadd.f32 %v2406, %v2489
    %v2491 = vpop.f32.mrf.mxu0
    %2492 = vdwg.mxu0
    %s2493 = scalar_lea.vmem %s4, 320
    %v2494 = vld [vmem:[%s2493] sm:$0xff]
    %v2495 = vld [vmem:[%s2493 + $0x8] sm:$0xff]
    %v2496 = vld [vmem:[%s2493 + $0x10] sm:$0xff]
    %v2497 = vld [vmem:[%s2493 + $0x18] sm:$0xff]
    %2498 = vrot.lane.b32.xlu0 %v1857, 80
    %v2499 = vpop.permute.xlu0 %2498
    %2501 = vmatprep.subr.mxu0 0.0
    %2502 = vmatpush1.msra.mxu0 0.0
    %2503 = vmatprep.subr.mxu0 0.0
    %2504 = vmatpush1.msra.mxu0 0.0
    %2505 = vmatprep.subr.mxu0 0.0
    %2506 = vmatpush1.msra.mxu0 0.0
    %2507 = vmatprep.subr.mxu0 0.0
    %2508 = vmatpush1.msra.mxu0 0.0
    %2509 = vmatprep.subr.mxu0 0.0
    %2510 = vmatpush1.msra.mxu0 0.0
    %2511 = vmatprep.subr.mxu0 0.0
    %2512 = vmatpush1.msra.mxu0 0.0
    %2513 = vmatprep.subr.mxu0 0.0
    %2514 = vmatpush1.msra.mxu0 0.0
    %2515 = vmatprep.subr.mxu0 0.0
    %2516 = vmatpush1.msra.mxu0 0.0
    %2517 = vmatprep.subr.mxu0 0.0
    %2518 = vmatpush1.msra.mxu0 0.0
    %2519 = vmatprep.subr.mxu0 0.0
    %2520 = vmatpush1.msra.mxu0 0.0
    %2521 = vmatprep.subr.mxu0 0.0
    %2522 = vmatpush1.msra.mxu0 0.0
    %2523 = vmatprep.subr.mxu0 0.0
    %2524 = vmatpush1.msra.mxu0 0.0
    %2525 = vmatprep.subr.mxu0 0.0
    %2526 = vmatpush1.msra.mxu0 %v2497
    %2527 = vmatprep.subr.mxu0 0.0
    %2528 = vmatpush1.msra.mxu0 %v2496
    %2529 = vmatprep.subr.mxu0 0.0
    %2530 = vmatpush1.msra.mxu0 %v2495
    %2531 = vmatprep.subr.mxu0 0.0
    %2532 = vmatpush1.msra.mxu0 %v2494
    %2533 = vmatprep.subr.mxu0 0.0
    %2534 = vmatpush2.msra.mxu0 0.0
    %2535 = vmatprep.subr.mxu0 0.0
    %2536 = vmatpush2.msra.mxu0 0.0
    %2537 = vmatprep.subr.mxu0 0.0
    %2538 = vmatpush2.msra.mxu0 0.0
    %2539 = vmatprep.subr.mxu0 0.0
    %2540 = vmatpush2.msra.mxu0 0.0
    %2541 = vmatprep.subr.mxu0 0.0
    %2542 = vmatpush2.msra.mxu0 0.0
    %2543 = vmatprep.subr.mxu0 0.0
    %2544 = vmatpush2.msra.mxu0 0.0
    %2545 = vmatprep.subr.mxu0 0.0
    %2546 = vmatpush2.msra.mxu0 0.0
    %2547 = vmatprep.subr.mxu0 0.0
    %2548 = vmatpush2.msra.mxu0 0.0
    %2549 = vmatprep.subr.mxu0 0.0
    %2550 = vmatpush2.msra.mxu0 0.0
    %2551 = vmatprep.subr.mxu0 0.0
    %2552 = vmatpush2.msra.mxu0 0.0
    %2553 = vmatprep.subr.mxu0 0.0
    %2554 = vmatpush2.msra.mxu0 0.0
    %2555 = vmatprep.subr.mxu0 0.0
    %2556 = vmatpush2.msra.mxu0 0.0
    %2557 = vmatprep.subr.mxu0 0.0
    %2558 = vmatpush2.msra.mxu0 0.0
    %2559 = vmatprep.subr.mxu0 0.0
    %2560 = vmatpush2.msra.mxu0 0.0
    %2561 = vmatprep.subr.mxu0 0.0
    %2562 = vmatpush2.msra.mxu0 0.0
    %2563 = vmatprep.subr.mxu0 0.0
    %2564 = vmatpush2.msra.mxu0 0.0
    %2565 = vmatprep.mubr.f32.mxu0 0.0
    %2566 = vmatmul.mubr.f32.gmra.mxu0 %v1859
    %v2567 = vpop.f32.mrf.mxu0
    %v2568 = vadd.f32 %v2499, %v2567
    %v2569 = vpop.f32.mrf.mxu0
    %2570 = vmatprep.mubr.f32.mxu0 0.0
    %2571 = vmatmul.mubr.f32.gmra.mxu0 %v1862
    %v2572 = vpop.f32.mrf.mxu0
    %v2573 = vadd.f32 %v2499, %v2572
    %v2574 = vpop.f32.mrf.mxu0
    %2575 = vmatprep.mubr.f32.mxu0 0.0
    %2576 = vmatmul.mubr.f32.gmra.mxu0 %v1865
    %v2577 = vpop.f32.mrf.mxu0
    %v2578 = vadd.f32 %v2499, %v2577
    %v2579 = vpop.f32.mrf.mxu0
    %2580 = vmatprep.mubr.f32.mxu0 0.0
    %2581 = vmatmul.mubr.f32.gmra.mxu0 %v1868
    %v2582 = vpop.f32.mrf.mxu0
    %v2583 = vadd.f32 %v2499, %v2582
    %v2584 = vpop.f32.mrf.mxu0
    %2585 = vdwg.mxu0
    %s2586 = scalar_lea.vmem %s4, 352
    %v2587 = vld [vmem:[%s2586] sm:$0xff]
    %v2588 = vld [vmem:[%s2586 + $0x8] sm:$0xff]
    %v2589 = vld [vmem:[%s2586 + $0x10] sm:$0xff]
    %v2590 = vld [vmem:[%s2586 + $0x18] sm:$0xff]
    %2591 = vrot.lane.b32.xlu0 %v1857, 48
    %v2592 = vpop.permute.xlu0 %2591
    %2594 = vmatprep.subr.mxu0 0.0
    %2595 = vmatpush1.msra.mxu0 0.0
    %2596 = vmatprep.subr.mxu0 0.0
    %2597 = vmatpush1.msra.mxu0 0.0
    %2598 = vmatprep.subr.mxu0 0.0
    %2599 = vmatpush1.msra.mxu0 0.0
    %2600 = vmatprep.subr.mxu0 0.0
    %2601 = vmatpush1.msra.mxu0 0.0
    %2602 = vmatprep.subr.mxu0 0.0
    %2603 = vmatpush1.msra.mxu0 0.0
    %2604 = vmatprep.subr.mxu0 0.0
    %2605 = vmatpush1.msra.mxu0 0.0
    %2606 = vmatprep.subr.mxu0 0.0
    %2607 = vmatpush1.msra.mxu0 0.0
    %2608 = vmatprep.subr.mxu0 0.0
    %2609 = vmatpush1.msra.mxu0 0.0
    %2610 = vmatprep.subr.mxu0 0.0
    %2611 = vmatpush1.msra.mxu0 0.0
    %2612 = vmatprep.subr.mxu0 0.0
    %2613 = vmatpush1.msra.mxu0 0.0
    %2614 = vmatprep.subr.mxu0 0.0
    %2615 = vmatpush1.msra.mxu0 0.0
    %2616 = vmatprep.subr.mxu0 0.0
    %2617 = vmatpush1.msra.mxu0 0.0
    %2618 = vmatprep.subr.mxu0 0.0
    %2619 = vmatpush1.msra.mxu0 %v2590
    %2620 = vmatprep.subr.mxu0 0.0
    %2621 = vmatpush1.msra.mxu0 %v2589
    %2622 = vmatprep.subr.mxu0 0.0
    %2623 = vmatpush1.msra.mxu0 %v2588
    %2624 = vmatprep.subr.mxu0 0.0
    %2625 = vmatpush1.msra.mxu0 %v2587
    %2626 = vmatprep.subr.mxu0 0.0
    %2627 = vmatpush2.msra.mxu0 0.0
    %2628 = vmatprep.subr.mxu0 0.0
    %2629 = vmatpush2.msra.mxu0 0.0
    %2630 = vmatprep.subr.mxu0 0.0
    %2631 = vmatpush2.msra.mxu0 0.0
    %2632 = vmatprep.subr.mxu0 0.0
    %2633 = vmatpush2.msra.mxu0 0.0
    %2634 = vmatprep.subr.mxu0 0.0
    %2635 = vmatpush2.msra.mxu0 0.0
    %2636 = vmatprep.subr.mxu0 0.0
    %2637 = vmatpush2.msra.mxu0 0.0
    %2638 = vmatprep.subr.mxu0 0.0
    %2639 = vmatpush2.msra.mxu0 0.0
    %2640 = vmatprep.subr.mxu0 0.0
    %2641 = vmatpush2.msra.mxu0 0.0
    %2642 = vmatprep.subr.mxu0 0.0
    %2643 = vmatpush2.msra.mxu0 0.0
    %2644 = vmatprep.subr.mxu0 0.0
    %2645 = vmatpush2.msra.mxu0 0.0
    %2646 = vmatprep.subr.mxu0 0.0
    %2647 = vmatpush2.msra.mxu0 0.0
    %2648 = vmatprep.subr.mxu0 0.0
    %2649 = vmatpush2.msra.mxu0 0.0
    %2650 = vmatprep.subr.mxu0 0.0
    %2651 = vmatpush2.msra.mxu0 0.0
    %2652 = vmatprep.subr.mxu0 0.0
    %2653 = vmatpush2.msra.mxu0 0.0
    %2654 = vmatprep.subr.mxu0 0.0
    %2655 = vmatpush2.msra.mxu0 0.0
    %2656 = vmatprep.subr.mxu0 0.0
    %2657 = vmatpush2.msra.mxu0 0.0
    %2658 = vmatprep.mubr.f32.mxu0 0.0
    %2659 = vmatmul.mubr.f32.gmra.mxu0 %v1859
    %v2660 = vpop.f32.mrf.mxu0
    %v2661 = vadd.f32 %v2592, %v2660
    %v2662 = vpop.f32.mrf.mxu0
    %2663 = vmatprep.mubr.f32.mxu0 0.0
    %2664 = vmatmul.mubr.f32.gmra.mxu0 %v1862
    %v2665 = vpop.f32.mrf.mxu0
    %v2666 = vadd.f32 %v2592, %v2665
    %v2667 = vpop.f32.mrf.mxu0
    %2668 = vmatprep.mubr.f32.mxu0 0.0
    %2669 = vmatmul.mubr.f32.gmra.mxu0 %v1865
    %v2670 = vpop.f32.mrf.mxu0
    %v2671 = vadd.f32 %v2592, %v2670
    %v2672 = vpop.f32.mrf.mxu0
    %2673 = vmatprep.mubr.f32.mxu0 0.0
    %2674 = vmatmul.mubr.f32.gmra.mxu0 %v1868
    %v2675 = vpop.f32.mrf.mxu0
    %v2676 = vadd.f32 %v2592, %v2675
    %v2677 = vpop.f32.mrf.mxu0
    %2678 = vdwg.mxu0
    %v2680 = vsel %vm451, %v2475, 0
    %v2683 = vsel %vm451, %v2480, 0
    %v2686 = vsel %vm451, %v2485, 0
    %v2689 = vsel %vm451, %v2490, 0
    %v2692 = vsel %vm451, %v2568, 0
    %v2695 = vsel %vm451, %v2573, 0
    %v2698 = vsel %vm451, %v2578, 0
    %v2701 = vsel %vm451, %v2583, 0
    %2703 = vmatprep.subr.mxu0 0.0
    %2704 = vmatpush1.xpose.msra.mxu0 0.0
    %2705 = vmatprep.subr.mxu0 0.0
    %2706 = vmatpush1.xpose.msra.mxu0 0.0
    %2707 = vmatprep.subr.mxu0 0.0
    %2708 = vmatpush1.xpose.msra.mxu0 0.0
    %2709 = vmatprep.subr.mxu0 0.0
    %2710 = vmatpush1.xpose.msra.mxu0 0.0
    %2711 = vmatprep.subr.mxu0 0.0
    %2712 = vmatpush1.xpose.msra.mxu0 0.0
    %2713 = vmatprep.subr.mxu0 0.0
    %2714 = vmatpush1.xpose.msra.mxu0 0.0
    %2715 = vmatprep.subr.mxu0 0.0
    %2716 = vmatpush1.xpose.msra.mxu0 0.0
    %2717 = vmatprep.subr.mxu0 0.0
    %2718 = vmatpush1.xpose.msra.mxu0 0.0
    %2719 = vmatprep.subr.mxu0 0.0
    %2720 = vmatpush1.xpose.msra.mxu0 0.0
    %2721 = vmatprep.subr.mxu0 0.0
    %2722 = vmatpush1.xpose.msra.mxu0 0.0
    %2723 = vmatprep.subr.mxu0 0.0
    %2724 = vmatpush1.xpose.msra.mxu0 0.0
    %2725 = vmatprep.subr.mxu0 0.0
    %2726 = vmatpush1.xpose.msra.mxu0 0.0
    %2727 = vmatprep.subr.mxu0 0.0
    %2728 = vmatpush1.xpose.msra.mxu0 %v2701
    %2729 = vmatprep.subr.mxu0 0.0
    %2730 = vmatpush1.xpose.msra.mxu0 %v2698
    %2731 = vmatprep.subr.mxu0 0.0
    %2732 = vmatpush1.xpose.msra.mxu0 %v2695
    %2733 = vmatprep.subr.mxu0 0.0
    %2734 = vmatpush1.xpose.msra.mxu0 %v2692
    %2735 = vmatprep.subr.mxu0 0.0
    %2736 = vmatpush2.xpose.msra.mxu0 0.0
    %2737 = vmatprep.subr.mxu0 0.0
    %2738 = vmatpush2.xpose.msra.mxu0 0.0
    %2739 = vmatprep.subr.mxu0 0.0
    %2740 = vmatpush2.xpose.msra.mxu0 0.0
    %2741 = vmatprep.subr.mxu0 0.0
    %2742 = vmatpush2.xpose.msra.mxu0 0.0
    %2743 = vmatprep.subr.mxu0 0.0
    %2744 = vmatpush2.xpose.msra.mxu0 0.0
    %2745 = vmatprep.subr.mxu0 0.0
    %2746 = vmatpush2.xpose.msra.mxu0 0.0
    %2747 = vmatprep.subr.mxu0 0.0
    %2748 = vmatpush2.xpose.msra.mxu0 0.0
    %2749 = vmatprep.subr.mxu0 0.0
    %2750 = vmatpush2.xpose.msra.mxu0 0.0
    %2751 = vmatprep.subr.mxu0 0.0
    %2752 = vmatpush2.xpose.msra.mxu0 0.0
    %2753 = vmatprep.subr.mxu0 0.0
    %2754 = vmatpush2.xpose.msra.mxu0 0.0
    %2755 = vmatprep.subr.mxu0 0.0
    %2756 = vmatpush2.xpose.msra.mxu0 0.0
    %2757 = vmatprep.subr.mxu0 0.0
    %2758 = vmatpush2.xpose.msra.mxu0 0.0
    %2759 = vmatprep.subr.mxu0 0.0
    %2760 = vmatpush2.xpose.msra.mxu0 0.0
    %2761 = vmatprep.subr.mxu0 0.0
    %2762 = vmatpush2.xpose.msra.mxu0 0.0
    %2763 = vmatprep.subr.mxu0 0.0
    %2764 = vmatpush2.xpose.msra.mxu0 0.0
    %2765 = vmatprep.subr.mxu0 0.0
    %2766 = vmatpush2.xpose.msra.mxu0 0.0
    %2767 = vmatprep.mubr.f32.mxu0 0.0
    %2768 = vmatmul.mubr.f32.gmra.mxu0 %v2680
    %v2769 = vpop.f32.mrf.mxu0
    %v2770 = vadd.f32 0.0, %v2769
    %v2771 = vpop.f32.mrf.mxu0
    %2772 = vmatprep.mubr.f32.mxu0 0.0
    %2773 = vmatmul.mubr.f32.gmra.mxu0 %v2683
    %v2774 = vpop.f32.mrf.mxu0
    %v2775 = vadd.f32 0.0, %v2774
    %v2776 = vpop.f32.mrf.mxu0
    %2777 = vmatprep.mubr.f32.mxu0 0.0
    %2778 = vmatmul.mubr.f32.gmra.mxu0 %v2686
    %v2779 = vpop.f32.mrf.mxu0
    %v2780 = vadd.f32 0.0, %v2779
    %v2781 = vpop.f32.mrf.mxu0
    %2782 = vmatprep.mubr.f32.mxu0 0.0
    %2783 = vmatmul.mubr.f32.gmra.mxu0 %v2689
    %v2784 = vpop.f32.mrf.mxu0
    %v2785 = vadd.f32 0.0, %v2784
    %v2786 = vpop.f32.mrf.mxu0
    %2787 = vdwg.mxu0
    %v2788 = vmul.f32 %v2770, 0.25
    %v2789 = vmul.f32 %v2775, 0.25
    %v2790 = vmul.f32 %v2780, 0.25
    %v2791 = vmul.f32 %v2785, 0.25
    %v2792 = vadd.f32 %v2788, %v77
    %v2793 = vadd.f32 %v2789, %v78
    %v2794 = vadd.f32 %v2790, %v79
    %v2795 = vadd.f32 %v2791, %v80
    %v2796 = vsel %vm85, %v2792, -inf
    %2797 = vmax.xlane.f32.xlu0 %v2796
    %v2798 = vpop.xlane.xlu0 %2797
    %v2799 = vsel %vm85, %v2793, -inf
    %2800 = vmax.xlane.f32.xlu0 %v2799
    %v2801 = vpop.xlane.xlu0 %2800
    %v2802 = vsel %vm85, %v2794, -inf
    %2803 = vmax.xlane.f32.xlu0 %v2802
    %v2804 = vpop.xlane.xlu0 %2803
    %v2805 = vsel %vm85, %v2795, -inf
    %2806 = vmax.xlane.f32.xlu0 %v2805
    %v2807 = vpop.xlane.xlu0 %2806
    %v2808 = vsub.f32 %v2792, %v2798
    %v2809 = vsub.f32 %v2793, %v2801
    %v2810 = vsub.f32 %v2794, %v2804
    %v2811 = vsub.f32 %v2795, %v2807
    %v2812 = vmul.f32 %v2808, 1.442695
    %v2813 = vpow.pop %v2812
    %v2814 = vmul.f32 %v2809, 1.442695
    %v2815 = vpow.pop %v2814
    %v2816 = vmul.f32 %v2810, 1.442695
    %v2817 = vpow.pop %v2816
    %v2818 = vmul.f32 %v2811, 1.442695
    %v2819 = vpow.pop %v2818
    %v2820 = vsel %vm85, %v2813, 0.0
    %2821 = vadd.xlane.f32.xlu0 %v2820
    %v2822 = vpop.xlane.xlu0 %2821
    %v2823 = vsel %vm85, %v2815, 0.0
    %2824 = vadd.xlane.f32.xlu0 %v2823
    %v2825 = vpop.xlane.xlu0 %2824
    %v2826 = vsel %vm85, %v2817, 0.0
    %2827 = vadd.xlane.f32.xlu0 %v2826
    %v2828 = vpop.xlane.xlu0 %2827
    %v2829 = vsel %vm85, %v2819, 0.0
    %2830 = vadd.xlane.f32.xlu0 %v2829
    %v2831 = vpop.xlane.xlu0 %2830
    %v2832 = vrcp.pop %v2822
    %v2833 = vrcp.pop %v2825
    %v2834 = vrcp.pop %v2828
    %v2835 = vrcp.pop %v2831
    %v2836 = vmul.f32 %v2813, %v2832
    %v2837 = vmul.f32 %v2815, %v2833
    %v2838 = vmul.f32 %v2817, %v2834
    %v2839 = vmul.f32 %v2819, %v2835
    %v2841 = vsel %vm85, %v2836, 0
    %v2844 = vsel %vm85, %v2837, 0
    %v2847 = vsel %vm85, %v2838, 0
    %v2850 = vsel %vm85, %v2839, 0
    %2852 = vmatprep.subr.mxu0 0.0
    %2853 = vmatpush1.msra.mxu0 0.0
    %2854 = vmatprep.subr.mxu0 0.0
    %2855 = vmatpush1.msra.mxu0 0.0
    %2856 = vmatprep.subr.mxu0 0.0
    %2857 = vmatpush1.msra.mxu0 0.0
    %2858 = vmatprep.subr.mxu0 0.0
    %2859 = vmatpush1.msra.mxu0 0.0
    %2860 = vmatprep.subr.mxu0 0.0
    %2861 = vmatpush1.msra.mxu0 0.0
    %2862 = vmatprep.subr.mxu0 0.0
    %2863 = vmatpush1.msra.mxu0 0.0
    %2864 = vmatprep.subr.mxu0 0.0
    %2865 = vmatpush1.msra.mxu0 0.0
    %2866 = vmatprep.subr.mxu0 0.0
    %2867 = vmatpush1.msra.mxu0 0.0
    %2868 = vmatprep.subr.mxu0 0.0
    %2869 = vmatpush1.msra.mxu0 0.0
    %2870 = vmatprep.subr.mxu0 0.0
    %2871 = vmatpush1.msra.mxu0 0.0
    %2872 = vmatprep.subr.mxu0 0.0
    %2873 = vmatpush1.msra.mxu0 0.0
    %2874 = vmatprep.subr.mxu0 0.0
    %2875 = vmatpush1.msra.mxu0 0.0
    %2876 = vmatprep.subr.mxu0 0.0
    %2877 = vmatpush1.msra.mxu0 %v2676
    %2878 = vmatprep.subr.mxu0 0.0
    %2879 = vmatpush1.msra.mxu0 %v2671
    %2880 = vmatprep.subr.mxu0 0.0
    %2881 = vmatpush1.msra.mxu0 %v2666
    %2882 = vmatprep.subr.mxu0 0.0
    %2883 = vmatpush1.msra.mxu0 %v2661
    %2884 = vmatprep.subr.mxu0 0.0
    %2885 = vmatpush2.msra.mxu0 0.0
    %2886 = vmatprep.subr.mxu0 0.0
    %2887 = vmatpush2.msra.mxu0 0.0
    %2888 = vmatprep.subr.mxu0 0.0
    %2889 = vmatpush2.msra.mxu0 0.0
    %2890 = vmatprep.subr.mxu0 0.0
    %2891 = vmatpush2.msra.mxu0 0.0
    %2892 = vmatprep.subr.mxu0 0.0
    %2893 = vmatpush2.msra.mxu0 0.0
    %2894 = vmatprep.subr.mxu0 0.0
    %2895 = vmatpush2.msra.mxu0 0.0
    %2896 = vmatprep.subr.mxu0 0.0
    %2897 = vmatpush2.msra.mxu0 0.0
    %2898 = vmatprep.subr.mxu0 0.0
    %2899 = vmatpush2.msra.mxu0 0.0
    %2900 = vmatprep.subr.mxu0 0.0
    %2901 = vmatpush2.msra.mxu0 0.0
    %2902 = vmatprep.subr.mxu0 0.0
    %2903 = vmatpush2.msra.mxu0 0.0
    %2904 = vmatprep.subr.mxu0 0.0
    %2905 = vmatpush2.msra.mxu0 0.0
    %2906 = vmatprep.subr.mxu0 0.0
    %2907 = vmatpush2.msra.mxu0 0.0
    %2908 = vmatprep.subr.mxu0 0.0
    %2909 = vmatpush2.msra.mxu0 0.0
    %2910 = vmatprep.subr.mxu0 0.0
    %2911 = vmatpush2.msra.mxu0 0.0
    %2912 = vmatprep.subr.mxu0 0.0
    %2913 = vmatpush2.msra.mxu0 0.0
    %2914 = vmatprep.subr.mxu0 0.0
    %2915 = vmatpush2.msra.mxu0 0.0
    %2916 = vmatprep.mubr.f32.mxu0 0.0
    %2917 = vmatmul.mubr.f32.gmra.mxu0 %v2841
    %v2918 = vpop.f32.mrf.mxu0
    %v2919 = vadd.f32 0.0, %v2918
    %v2920 = vpop.f32.mrf.mxu0
    %2921 = vmatprep.mubr.f32.mxu0 0.0
    %2922 = vmatmul.mubr.f32.gmra.mxu0 %v2844
    %v2923 = vpop.f32.mrf.mxu0
    %v2924 = vadd.f32 0.0, %v2923
    %v2925 = vpop.f32.mrf.mxu0
    %2926 = vmatprep.mubr.f32.mxu0 0.0
    %2927 = vmatmul.mubr.f32.gmra.mxu0 %v2847
    %v2928 = vpop.f32.mrf.mxu0
    %v2929 = vadd.f32 0.0, %v2928
    %v2930 = vpop.f32.mrf.mxu0
    %2931 = vmatprep.mubr.f32.mxu0 0.0
    %2932 = vmatmul.mubr.f32.gmra.mxu0 %v2850
    %v2933 = vpop.f32.mrf.mxu0
    %v2934 = vadd.f32 0.0, %v2933
    %v2935 = vpop.f32.mrf.mxu0
    %2936 = vdwg.mxu0
    %v2938 = vsel %vm451, %v2919, 0
    %v2941 = vsel %vm451, %v2924, 0
    %v2944 = vsel %vm451, %v2929, 0
    %v2947 = vsel %vm451, %v2934, 0
    %2949 = vmatprep.subr.mxu0 0.0
    %2950 = vmatpush1.msra.mxu0 0.0
    %2951 = vmatprep.subr.mxu0 0.0
    %2952 = vmatpush1.msra.mxu0 0.0
    %2953 = vmatprep.subr.mxu0 0.0
    %2954 = vmatpush1.msra.mxu0 0.0
    %2955 = vmatprep.subr.mxu0 0.0
    %2956 = vmatpush1.msra.mxu0 0.0
    %2957 = vmatprep.subr.mxu0 0.0
    %2958 = vmatpush1.msra.mxu0 0.0
    %2959 = vmatprep.subr.mxu0 0.0
    %2960 = vmatpush1.msra.mxu0 0.0
    %2961 = vmatprep.subr.mxu0 0.0
    %2962 = vmatpush1.msra.mxu0 0.0
    %2963 = vmatprep.subr.mxu0 0.0
    %2964 = vmatpush1.msra.mxu0 0.0
    %2965 = vmatprep.subr.mxu0 0.0
    %2966 = vmatpush1.msra.mxu0 0.0
    %2967 = vmatprep.subr.mxu0 0.0
    %2968 = vmatpush1.msra.mxu0 0.0
    %2969 = vmatprep.subr.mxu0 0.0
    %2970 = vmatpush1.msra.mxu0 0.0
    %2971 = vmatprep.subr.mxu0 0.0
    %2972 = vmatpush1.msra.mxu0 0.0
    %2973 = vmatprep.subr.mxu0 0.0
    %2974 = vmatpush1.msra.mxu0 0.0
    %2975 = vmatprep.subr.mxu0 0.0
    %2976 = vmatpush1.msra.mxu0 0.0
    %2977 = vmatprep.subr.mxu0 0.0
    %2978 = vmatpush1.msra.mxu0 %v1848
    %2979 = vmatprep.subr.mxu0 0.0
    %2980 = vmatpush1.msra.mxu0 %v1847
    %2981 = vmatprep.subr.mxu0 0.0
    %2982 = vmatpush2.msra.mxu0 0.0
    %2983 = vmatprep.subr.mxu0 0.0
    %2984 = vmatpush2.msra.mxu0 0.0
    %2985 = vmatprep.subr.mxu0 0.0
    %2986 = vmatpush2.msra.mxu0 0.0
    %2987 = vmatprep.subr.mxu0 0.0
    %2988 = vmatpush2.msra.mxu0 0.0
    %2989 = vmatprep.subr.mxu0 0.0
    %2990 = vmatpush2.msra.mxu0 0.0
    %2991 = vmatprep.subr.mxu0 0.0
    %2992 = vmatpush2.msra.mxu0 0.0
    %2993 = vmatprep.subr.mxu0 0.0
    %2994 = vmatpush2.msra.mxu0 0.0
    %2995 = vmatprep.subr.mxu0 0.0
    %2996 = vmatpush2.msra.mxu0 0.0
    %2997 = vmatprep.subr.mxu0 0.0
    %2998 = vmatpush2.msra.mxu0 0.0
    %2999 = vmatprep.subr.mxu0 0.0
    %3000 = vmatpush2.msra.mxu0 0.0
    %3001 = vmatprep.subr.mxu0 0.0
    %3002 = vmatpush2.msra.mxu0 0.0
    %3003 = vmatprep.subr.mxu0 0.0
    %3004 = vmatpush2.msra.mxu0 0.0
    %3005 = vmatprep.subr.mxu0 0.0
    %3006 = vmatpush2.msra.mxu0 0.0
    %3007 = vmatprep.subr.mxu0 0.0
    %3008 = vmatpush2.msra.mxu0 0.0
    %3009 = vmatprep.subr.mxu0 0.0
    %3010 = vmatpush2.msra.mxu0 0.0
    %3011 = vmatprep.subr.mxu0 0.0
    %3012 = vmatpush2.msra.mxu0 0.0
    %3013 = vmatprep.mubr.f32.mxu0 0.0
    %3014 = vmatmul.mubr.f32.gmra.mxu0 %v2938
    %v3015 = vpop.f32.mrf.mxu0
    %v3016 = vadd.f32 0.0, %v3015
    %v3017 = vpop.f32.mrf.mxu0
    %3018 = vmatprep.mubr.f32.mxu0 0.0
    %3019 = vmatmul.mubr.f32.gmra.mxu0 %v2941
    %v3020 = vpop.f32.mrf.mxu0
    %v3021 = vadd.f32 0.0, %v3020
    %v3022 = vpop.f32.mrf.mxu0
    %3023 = vmatprep.mubr.f32.mxu0 0.0
    %3024 = vmatmul.mubr.f32.gmra.mxu0 %v2944
    %v3025 = vpop.f32.mrf.mxu0
    %v3026 = vadd.f32 0.0, %v3025
    %v3027 = vpop.f32.mrf.mxu0
    %3028 = vmatprep.mubr.f32.mxu0 0.0
    %3029 = vmatmul.mubr.f32.gmra.mxu0 %v2947
    %v3030 = vpop.f32.mrf.mxu0
    %v3031 = vadd.f32 0.0, %v3030
    %v3032 = vpop.f32.mrf.mxu0
    %3033 = vdwg.mxu0
    %v3035 = vsel %vm451, %v2382, 0
    %v3038 = vsel %vm451, %v2387, 0
    %v3041 = vsel %vm451, %v2392, 0
    %v3044 = vsel %vm451, %v2397, 0
    %3046 = vmatprep.subr.mxu0 0.0
    %3047 = vmatpush1.msra.mxu0 0.0
    %3048 = vmatprep.subr.mxu0 0.0
    %3049 = vmatpush1.msra.mxu0 0.0
    %3050 = vmatprep.subr.mxu0 0.0
    %3051 = vmatpush1.msra.mxu0 0.0
    %3052 = vmatprep.subr.mxu0 0.0
    %3053 = vmatpush1.msra.mxu0 0.0
    %3054 = vmatprep.subr.mxu0 0.0
    %3055 = vmatpush1.msra.mxu0 0.0
    %3056 = vmatprep.subr.mxu0 0.0
    %3057 = vmatpush1.msra.mxu0 0.0
    %3058 = vmatprep.subr.mxu0 0.0
    %3059 = vmatpush1.msra.mxu0 0.0
    %3060 = vmatprep.subr.mxu0 0.0
    %3061 = vmatpush1.msra.mxu0 0.0
    %3062 = vmatprep.subr.mxu0 0.0
    %3063 = vmatpush1.msra.mxu0 0.0
    %3064 = vmatprep.subr.mxu0 0.0
    %3065 = vmatpush1.msra.mxu0 0.0
    %3066 = vmatprep.subr.mxu0 0.0
    %3067 = vmatpush1.msra.mxu0 0.0
    %3068 = vmatprep.subr.mxu0 0.0
    %3069 = vmatpush1.msra.mxu0 0.0
    %3070 = vmatprep.subr.mxu0 0.0
    %3071 = vmatpush1.msra.mxu0 0.0
    %3072 = vmatprep.subr.mxu0 0.0
    %3073 = vmatpush1.msra.mxu0 0.0
    %3074 = vmatprep.subr.mxu0 0.0
    %3075 = vmatpush1.msra.mxu0 %v1846
    %3076 = vmatprep.subr.mxu0 0.0
    %3077 = vmatpush1.msra.mxu0 %v1845
    %3078 = vmatprep.subr.mxu0 0.0
    %3079 = vmatpush2.msra.mxu0 0.0
    %3080 = vmatprep.subr.mxu0 0.0
    %3081 = vmatpush2.msra.mxu0 0.0
    %3082 = vmatprep.subr.mxu0 0.0
    %3083 = vmatpush2.msra.mxu0 0.0
    %3084 = vmatprep.subr.mxu0 0.0
    %3085 = vmatpush2.msra.mxu0 0.0
    %3086 = vmatprep.subr.mxu0 0.0
    %3087 = vmatpush2.msra.mxu0 0.0
    %3088 = vmatprep.subr.mxu0 0.0
    %3089 = vmatpush2.msra.mxu0 0.0
    %3090 = vmatprep.subr.mxu0 0.0
    %3091 = vmatpush2.msra.mxu0 0.0
    %3092 = vmatprep.subr.mxu0 0.0
    %3093 = vmatpush2.msra.mxu0 0.0
    %3094 = vmatprep.subr.mxu0 0.0
    %3095 = vmatpush2.msra.mxu0 0.0
    %3096 = vmatprep.subr.mxu0 0.0
    %3097 = vmatpush2.msra.mxu0 0.0
    %3098 = vmatprep.subr.mxu0 0.0
    %3099 = vmatpush2.msra.mxu0 0.0
    %3100 = vmatprep.subr.mxu0 0.0
    %3101 = vmatpush2.msra.mxu0 0.0
    %3102 = vmatprep.subr.mxu0 0.0
    %3103 = vmatpush2.msra.mxu0 0.0
    %3104 = vmatprep.subr.mxu0 0.0
    %3105 = vmatpush2.msra.mxu0 0.0
    %3106 = vmatprep.subr.mxu0 0.0
    %3107 = vmatpush2.msra.mxu0 0.0
    %3108 = vmatprep.subr.mxu0 0.0
    %3109 = vmatpush2.msra.mxu0 0.0
    %3110 = vmatprep.mubr.f32.mxu0 0.0
    %3111 = vmatmul.mubr.f32.gmra.mxu0 %v3035
    %v3112 = vpop.f32.mrf.mxu0
    %v3113 = vadd.f32 %v3016, %v3112
    %v3114 = vpop.f32.mrf.mxu0
    %3115 = vmatprep.mubr.f32.mxu0 0.0
    %3116 = vmatmul.mubr.f32.gmra.mxu0 %v3038
    %v3117 = vpop.f32.mrf.mxu0
    %v3118 = vadd.f32 %v3021, %v3117
    %v3119 = vpop.f32.mrf.mxu0
    %3120 = vmatprep.mubr.f32.mxu0 0.0
    %3121 = vmatmul.mubr.f32.gmra.mxu0 %v3041
    %v3122 = vpop.f32.mrf.mxu0
    %v3123 = vadd.f32 %v3026, %v3122
    %v3124 = vpop.f32.mrf.mxu0
    %3125 = vmatprep.mubr.f32.mxu0 0.0
    %3126 = vmatmul.mubr.f32.gmra.mxu0 %v3044
    %v3127 = vpop.f32.mrf.mxu0
    %v3128 = vadd.f32 %v3031, %v3127
    %v3129 = vpop.f32.mrf.mxu0
    %3130 = vdwg.mxu0
    %v3131 = vlaneseq
    %v3132 = vshrl.u32 %v3131, 7
    %v3133 = vsub.s32 3, %v3132
    %v3134 = vrot.slane %v37, %v3133
    %v3135 = vadd.f32 %v3113, %v3134
    %v3136 = vadd.f32 %v3118, %v3134
    %v3137 = vadd.f32 %v3123, %v3134
    %v3138 = vadd.f32 %v3128, %v3134
    %v3139 = vadd.f32 %v1840, %v3135
    %v3140 = vadd.f32 %v1841, %v3136
    %v3141 = vadd.f32 %v1842, %v3137
    %v3142 = vadd.f32 %v1843, %v3138
    %v3143 = vsel %vm85, %v3139, 0.0
    %3144 = vadd.xlane.f32.xlu0 %v3143
    %v3145 = vpop.xlane.xlu0 %3144
    %v3146 = vsel %vm85, %v3140, 0.0
    %3147 = vadd.xlane.f32.xlu0 %v3146
    %v3148 = vpop.xlane.xlu0 %3147
    %v3149 = vsel %vm85, %v3141, 0.0
    %3150 = vadd.xlane.f32.xlu0 %v3149
    %v3151 = vpop.xlane.xlu0 %3150
    %v3152 = vsel %vm85, %v3142, 0.0
    %3153 = vadd.xlane.f32.xlu0 %v3152
    %v3154 = vpop.xlane.xlu0 %3153
    %v3155 = vmul.f32 %v3145, %v98
    %v3156 = vmul.f32 %v3148, %v98
    %v3157 = vmul.f32 %v3151, %v98
    %v3158 = vmul.f32 %v3154, %v98
    %v3159 = vsub.f32 %v3139, %v3155
    %v3160 = vsub.f32 %v3140, %v3156
    %v3161 = vsub.f32 %v3141, %v3157
    %v3162 = vsub.f32 %v3142, %v3158
    %v3163 = vmul.f32 %v3159, %v3159
    %v3164 = vmul.f32 %v3160, %v3160
    %v3165 = vmul.f32 %v3161, %v3161
    %v3166 = vmul.f32 %v3162, %v3162
    %v3167 = vsel %vm85, %v3163, 0.0
    %3168 = vadd.xlane.f32.xlu0 %v3167
    %v3169 = vpop.xlane.xlu0 %3168
    %v3170 = vsel %vm85, %v3164, 0.0
    %3171 = vadd.xlane.f32.xlu0 %v3170
    %v3172 = vpop.xlane.xlu0 %3171
    %v3173 = vsel %vm85, %v3165, 0.0
    %3174 = vadd.xlane.f32.xlu0 %v3173
    %v3175 = vpop.xlane.xlu0 %3174
    %v3176 = vsel %vm85, %v3166, 0.0
    %3177 = vadd.xlane.f32.xlu0 %v3176
    %v3178 = vpop.xlane.xlu0 %3177
    %v3179 = vmul.f32 %v3169, %v98
    %v3180 = vmul.f32 %v3172, %v98
    %v3181 = vmul.f32 %v3175, %v98
    %v3182 = vmul.f32 %v3178, %v98
    %v3183 = vadd.f32 %v3179, 1e-05
    %v3184 = vadd.f32 %v3180, 1e-05
    %v3185 = vadd.f32 %v3181, 1e-05
    %v3186 = vadd.f32 %v3182, 1e-05
    %v3187 = vrsqrt.pop %v3183
    %v3188 = vrsqrt.pop %v3184
    %v3189 = vrsqrt.pop %v3185
    %v3190 = vrsqrt.pop %v3186
    %v3191 = vmul.f32 %v3159, %v3187
    %v3192 = vmul.f32 %v3160, %v3188
    %v3193 = vmul.f32 %v3161, %v3189
    %v3194 = vmul.f32 %v3162, %v3190
    %v3195 = vlaneseq
    %v3196 = vshrl.u32 %v3195, 7
    %v3197 = vsub.s32 4, %v3196
    %v3198 = vrot.slane %v37, %v3197
    %v3199 = vmul.f32 %v3191, %v3198
    %v3200 = vmul.f32 %v3192, %v3198
    %v3201 = vmul.f32 %v3193, %v3198
    %v3202 = vmul.f32 %v3194, %v3198
    %v3203 = vlaneseq
    %v3204 = vshrl.u32 %v3203, 7
    %v3205 = vsub.s32 5, %v3204
    %v3206 = vrot.slane %v37, %v3205
    %v3207 = vadd.f32 %v3199, %v3206
    %v3208 = vadd.f32 %v3200, %v3206
    %v3209 = vadd.f32 %v3201, %v3206
    %v3210 = vadd.f32 %v3202, %v3206
    %s3211 = scalar_lea.vmem %s6, 32
    %v3212 = vld [vmem:[%s3211] sm:$0xff]
    %v3213 = vld [vmem:[%s3211 + $0x8] sm:$0xff]
    %v3214 = vld [vmem:[%s3211 + $0x10] sm:$0xff]
    %v3215 = vld [vmem:[%s3211 + $0x18] sm:$0xff]
    %v3216 = vlaneseq
    %v3217 = vshrl.u32 %v3216, 7
    %v3218 = vsub.s32 6, %v3217
    %v3219 = vrot.slane %v37, %v3218
    %v3221 = vsel %vm85, %v3207, 0
    %v3224 = vsel %vm85, %v3208, 0
    %v3227 = vsel %vm85, %v3209, 0
    %v3230 = vsel %vm85, %v3210, 0
    %3232 = vmatprep.subr.mxu0 0.0
    %3233 = vmatpush1.msra.mxu0 0.0
    %3234 = vmatprep.subr.mxu0 0.0
    %3235 = vmatpush1.msra.mxu0 0.0
    %3236 = vmatprep.subr.mxu0 0.0
    %3237 = vmatpush1.msra.mxu0 0.0
    %3238 = vmatprep.subr.mxu0 0.0
    %3239 = vmatpush1.msra.mxu0 0.0
    %3240 = vmatprep.subr.mxu0 0.0
    %3241 = vmatpush1.msra.mxu0 0.0
    %3242 = vmatprep.subr.mxu0 0.0
    %3243 = vmatpush1.msra.mxu0 0.0
    %3244 = vmatprep.subr.mxu0 0.0
    %3245 = vmatpush1.msra.mxu0 0.0
    %3246 = vmatprep.subr.mxu0 0.0
    %3247 = vmatpush1.msra.mxu0 0.0
    %3248 = vmatprep.subr.mxu0 0.0
    %3249 = vmatpush1.msra.mxu0 0.0
    %3250 = vmatprep.subr.mxu0 0.0
    %3251 = vmatpush1.msra.mxu0 0.0
    %3252 = vmatprep.subr.mxu0 0.0
    %3253 = vmatpush1.msra.mxu0 0.0
    %3254 = vmatprep.subr.mxu0 0.0
    %3255 = vmatpush1.msra.mxu0 0.0
    %3256 = vmatprep.subr.mxu0 0.0
    %3257 = vmatpush1.msra.mxu0 %v3215
    %3258 = vmatprep.subr.mxu0 0.0
    %3259 = vmatpush1.msra.mxu0 %v3214
    %3260 = vmatprep.subr.mxu0 0.0
    %3261 = vmatpush1.msra.mxu0 %v3213
    %3262 = vmatprep.subr.mxu0 0.0
    %3263 = vmatpush1.msra.mxu0 %v3212
    %3264 = vmatprep.subr.mxu0 0.0
    %3265 = vmatpush2.msra.mxu0 0.0
    %3266 = vmatprep.subr.mxu0 0.0
    %3267 = vmatpush2.msra.mxu0 0.0
    %3268 = vmatprep.subr.mxu0 0.0
    %3269 = vmatpush2.msra.mxu0 0.0
    %3270 = vmatprep.subr.mxu0 0.0
    %3271 = vmatpush2.msra.mxu0 0.0
    %3272 = vmatprep.subr.mxu0 0.0
    %3273 = vmatpush2.msra.mxu0 0.0
    %3274 = vmatprep.subr.mxu0 0.0
    %3275 = vmatpush2.msra.mxu0 0.0
    %3276 = vmatprep.subr.mxu0 0.0
    %3277 = vmatpush2.msra.mxu0 0.0
    %3278 = vmatprep.subr.mxu0 0.0
    %3279 = vmatpush2.msra.mxu0 0.0
    %3280 = vmatprep.subr.mxu0 0.0
    %3281 = vmatpush2.msra.mxu0 0.0
    %3282 = vmatprep.subr.mxu0 0.0
    %3283 = vmatpush2.msra.mxu0 0.0
    %3284 = vmatprep.subr.mxu0 0.0
    %3285 = vmatpush2.msra.mxu0 0.0
    %3286 = vmatprep.subr.mxu0 0.0
    %3287 = vmatpush2.msra.mxu0 0.0
    %3288 = vmatprep.subr.mxu0 0.0
    %3289 = vmatpush2.msra.mxu0 0.0
    %3290 = vmatprep.subr.mxu0 0.0
    %3291 = vmatpush2.msra.mxu0 0.0
    %3292 = vmatprep.subr.mxu0 0.0
    %3293 = vmatpush2.msra.mxu0 0.0
    %3294 = vmatprep.subr.mxu0 0.0
    %3295 = vmatpush2.msra.mxu0 0.0
    %3296 = vmatprep.mubr.f32.mxu0 0.0
    %3297 = vmatmul.mubr.f32.gmra.mxu0 %v3221
    %v3298 = vpop.f32.mrf.mxu0
    %v3299 = vadd.f32 %v3219, %v3298
    %v3300 = vpop.f32.mrf.mxu0
    %3301 = vmatprep.mubr.f32.mxu0 0.0
    %3302 = vmatmul.mubr.f32.gmra.mxu0 %v3224
    %v3303 = vpop.f32.mrf.mxu0
    %v3304 = vadd.f32 %v3219, %v3303
    %v3305 = vpop.f32.mrf.mxu0
    %3306 = vmatprep.mubr.f32.mxu0 0.0
    %3307 = vmatmul.mubr.f32.gmra.mxu0 %v3227
    %v3308 = vpop.f32.mrf.mxu0
    %v3309 = vadd.f32 %v3219, %v3308
    %v3310 = vpop.f32.mrf.mxu0
    %3311 = vmatprep.mubr.f32.mxu0 0.0
    %3312 = vmatmul.mubr.f32.gmra.mxu0 %v3230
    %v3313 = vpop.f32.mrf.mxu0
    %v3314 = vadd.f32 %v3219, %v3313
    %v3315 = vpop.f32.mrf.mxu0
    %3316 = vdwg.mxu0
    %v3317 = vmul.f32 %v3299, %v3299
    %v3318 = vmul.f32 %v3304, %v3304
    %v3319 = vmul.f32 %v3309, %v3309
    %v3320 = vmul.f32 %v3314, %v3314
    %v3321 = vmul.f32 %v3299, %v3317
    %v3322 = vmul.f32 %v3304, %v3318
    %v3323 = vmul.f32 %v3309, %v3319
    %v3324 = vmul.f32 %v3314, %v3320
    %v3325 = vmul.f32 %v3321, 0.044715
    %v3326 = vmul.f32 %v3322, 0.044715
    %v3327 = vmul.f32 %v3323, 0.044715
    %v3328 = vmul.f32 %v3324, 0.044715
    %v3329 = vadd.f32 %v3299, %v3325
    %v3330 = vadd.f32 %v3304, %v3326
    %v3331 = vadd.f32 %v3309, %v3327
    %v3332 = vadd.f32 %v3314, %v3328
    %v3333 = vmul.f32 %v3329, 0.7978846
    %v3334 = vmul.f32 %v3330, 0.7978846
    %v3335 = vmul.f32 %v3331, 0.7978846
    %v3336 = vmul.f32 %v3332, 0.7978846
    %v3337 = vtanh.pop %v3333
    %v3338 = vtanh.pop %v3334
    %v3339 = vtanh.pop %v3335
    %v3340 = vtanh.pop %v3336
    %v3341 = vadd.f32 %v3337, 1.0
    %v3342 = vadd.f32 %v3338, 1.0
    %v3343 = vadd.f32 %v3339, 1.0
    %v3344 = vadd.f32 %v3340, 1.0
    %v3345 = vmul.f32 %v3341, 0.5
    %v3346 = vmul.f32 %v3342, 0.5
    %v3347 = vmul.f32 %v3343, 0.5
    %v3348 = vmul.f32 %v3344, 0.5
    %v3349 = vmul.f32 %v3299, %v3345
    %v3350 = vmul.f32 %v3304, %v3346
    %v3351 = vmul.f32 %v3309, %v3347
    %v3352 = vmul.f32 %v3314, %v3348
    %s3353 = scalar_lea.vmem %s7, 64
    %v3354 = vld [vmem:[%s3353] sm:$0xff]
    %v3355 = vld [vmem:[%s3353 + $0x8] sm:$0xff]
    %v3356 = vld [vmem:[%s3353 + $0x10] sm:$0xff]
    %v3357 = vld [vmem:[%s3353 + $0x18] sm:$0xff]
    %v3358 = vld [vmem:[%s3353 + $0x20] sm:$0xff]
    %v3359 = vld [vmem:[%s3353 + $0x28] sm:$0xff]
    %v3360 = vld [vmem:[%s3353 + $0x30] sm:$0xff]
    %v3361 = vld [vmem:[%s3353 + $0x38] sm:$0xff]
    %v3362 = vlaneseq
    %v3363 = vshrl.u32 %v3362, 7
    %v3364 = vsub.s32 7, %v3363
    %v3365 = vrot.slane %v37, %v3364
    %v3367 = vsel %vm1674, %v3349, 0
    %v3370 = vsel %vm1674, %v3350, 0
    %v3373 = vsel %vm1674, %v3351, 0
    %v3376 = vsel %vm1674, %v3352, 0
    %3378 = vmatprep.subr.mxu0 0.0
    %3379 = vmatpush1.msra.mxu0 0.0
    %3380 = vmatprep.subr.mxu0 0.0
    %3381 = vmatpush1.msra.mxu0 0.0
    %3382 = vmatprep.subr.mxu0 0.0
    %3383 = vmatpush1.msra.mxu0 0.0
    %3384 = vmatprep.subr.mxu0 0.0
    %3385 = vmatpush1.msra.mxu0 0.0
    %3386 = vmatprep.subr.mxu0 0.0
    %3387 = vmatpush1.msra.mxu0 0.0
    %3388 = vmatprep.subr.mxu0 0.0
    %3389 = vmatpush1.msra.mxu0 0.0
    %3390 = vmatprep.subr.mxu0 0.0
    %3391 = vmatpush1.msra.mxu0 0.0
    %3392 = vmatprep.subr.mxu0 0.0
    %3393 = vmatpush1.msra.mxu0 0.0
    %3394 = vmatprep.subr.mxu0 0.0
    %3395 = vmatpush1.msra.mxu0 %v3361
    %3396 = vmatprep.subr.mxu0 0.0
    %3397 = vmatpush1.msra.mxu0 %v3360
    %3398 = vmatprep.subr.mxu0 0.0
    %3399 = vmatpush1.msra.mxu0 %v3359
    %3400 = vmatprep.subr.mxu0 0.0
    %3401 = vmatpush1.msra.mxu0 %v3358
    %3402 = vmatprep.subr.mxu0 0.0
    %3403 = vmatpush1.msra.mxu0 %v3357
    %3404 = vmatprep.subr.mxu0 0.0
    %3405 = vmatpush1.msra.mxu0 %v3356
    %3406 = vmatprep.subr.mxu0 0.0
    %3407 = vmatpush1.msra.mxu0 %v3355
    %3408 = vmatprep.subr.mxu0 0.0
    %3409 = vmatpush1.msra.mxu0 %v3354
    %3410 = vmatprep.subr.mxu0 0.0
    %3411 = vmatpush2.msra.mxu0 0.0
    %3412 = vmatprep.subr.mxu0 0.0
    %3413 = vmatpush2.msra.mxu0 0.0
    %3414 = vmatprep.subr.mxu0 0.0
    %3415 = vmatpush2.msra.mxu0 0.0
    %3416 = vmatprep.subr.mxu0 0.0
    %3417 = vmatpush2.msra.mxu0 0.0
    %3418 = vmatprep.subr.mxu0 0.0
    %3419 = vmatpush2.msra.mxu0 0.0
    %3420 = vmatprep.subr.mxu0 0.0
    %3421 = vmatpush2.msra.mxu0 0.0
    %3422 = vmatprep.subr.mxu0 0.0
    %3423 = vmatpush2.msra.mxu0 0.0
    %3424 = vmatprep.subr.mxu0 0.0
    %3425 = vmatpush2.msra.mxu0 0.0
    %3426 = vmatprep.subr.mxu0 0.0
    %3427 = vmatpush2.msra.mxu0 0.0
    %3428 = vmatprep.subr.mxu0 0.0
    %3429 = vmatpush2.msra.mxu0 0.0
    %3430 = vmatprep.subr.mxu0 0.0
    %3431 = vmatpush2.msra.mxu0 0.0
    %3432 = vmatprep.subr.mxu0 0.0
    %3433 = vmatpush2.msra.mxu0 0.0
    %3434 = vmatprep.subr.mxu0 0.0
    %3435 = vmatpush2.msra.mxu0 0.0
    %3436 = vmatprep.subr.mxu0 0.0
    %3437 = vmatpush2.msra.mxu0 0.0
    %3438 = vmatprep.subr.mxu0 0.0
    %3439 = vmatpush2.msra.mxu0 0.0
    %3440 = vmatprep.subr.mxu0 0.0
    %3441 = vmatpush2.msra.mxu0 0.0
    %3442 = vmatprep.mubr.f32.mxu0 0.0
    %3443 = vmatmul.mubr.f32.gmra.mxu0 %v3367
    %v3444 = vpop.f32.mrf.mxu0
    %v3445 = vadd.f32 %v3365, %v3444
    %v3446 = vpop.f32.mrf.mxu0
    %3447 = vmatprep.mubr.f32.mxu0 0.0
    %3448 = vmatmul.mubr.f32.gmra.mxu0 %v3370
    %v3449 = vpop.f32.mrf.mxu0
    %v3450 = vadd.f32 %v3365, %v3449
    %v3451 = vpop.f32.mrf.mxu0
    %3452 = vmatprep.mubr.f32.mxu0 0.0
    %3453 = vmatmul.mubr.f32.gmra.mxu0 %v3373
    %v3454 = vpop.f32.mrf.mxu0
    %v3455 = vadd.f32 %v3365, %v3454
    %v3456 = vpop.f32.mrf.mxu0
    %3457 = vmatprep.mubr.f32.mxu0 0.0
    %3458 = vmatmul.mubr.f32.gmra.mxu0 %v3376
    %v3459 = vpop.f32.mrf.mxu0
    %v3460 = vadd.f32 %v3365, %v3459
    %v3461 = vpop.f32.mrf.mxu0
    %3462 = vdwg.mxu0
    %v3463 = vadd.f32 %v3207, %v3445
    %v3464 = vadd.f32 %v3208, %v3450
    %v3465 = vadd.f32 %v3209, %v3455
    %v3466 = vadd.f32 %v3210, %v3460
    %v3467 = vsel %vm85, %v3463, 0.0
    %3468 = vadd.xlane.f32.xlu0 %v3467
    %v3469 = vpop.xlane.xlu0 %3468
    %v3470 = vsel %vm85, %v3464, 0.0
    %3471 = vadd.xlane.f32.xlu0 %v3470
    %v3472 = vpop.xlane.xlu0 %3471
    %v3473 = vsel %vm85, %v3465, 0.0
    %3474 = vadd.xlane.f32.xlu0 %v3473
    %v3475 = vpop.xlane.xlu0 %3474
    %v3476 = vsel %vm85, %v3466, 0.0
    %3477 = vadd.xlane.f32.xlu0 %v3476
    %v3478 = vpop.xlane.xlu0 %3477
    %v3479 = vmul.f32 %v3469, %v98
    %v3480 = vmul.f32 %v3472, %v98
    %v3481 = vmul.f32 %v3475, %v98
    %v3482 = vmul.f32 %v3478, %v98
    %v3483 = vsub.f32 %v3463, %v3479
    %v3484 = vsub.f32 %v3464, %v3480
    %v3485 = vsub.f32 %v3465, %v3481
    %v3486 = vsub.f32 %v3466, %v3482
    %v3487 = vmul.f32 %v3483, %v3483
    %v3488 = vmul.f32 %v3484, %v3484
    %v3489 = vmul.f32 %v3485, %v3485
    %v3490 = vmul.f32 %v3486, %v3486
    %v3491 = vsel %vm85, %v3487, 0.0
    %3492 = vadd.xlane.f32.xlu0 %v3491
    %v3493 = vpop.xlane.xlu0 %3492
    %v3494 = vsel %vm85, %v3488, 0.0
    %3495 = vadd.xlane.f32.xlu0 %v3494
    %v3496 = vpop.xlane.xlu0 %3495
    %v3497 = vsel %vm85, %v3489, 0.0
    %3498 = vadd.xlane.f32.xlu0 %v3497
    %v3499 = vpop.xlane.xlu0 %3498
    %v3500 = vsel %vm85, %v3490, 0.0
    %3501 = vadd.xlane.f32.xlu0 %v3500
    %v3502 = vpop.xlane.xlu0 %3501
    %v3503 = vmul.f32 %v3493, %v98
    %v3504 = vmul.f32 %v3496, %v98
    %v3505 = vmul.f32 %v3499, %v98
    %v3506 = vmul.f32 %v3502, %v98
    %v3507 = vadd.f32 %v3503, 1e-05
    %v3508 = vadd.f32 %v3504, 1e-05
    %v3509 = vadd.f32 %v3505, 1e-05
    %v3510 = vadd.f32 %v3506, 1e-05
    %v3511 = vrsqrt.pop %v3507
    %v3512 = vrsqrt.pop %v3508
    %v3513 = vrsqrt.pop %v3509
    %v3514 = vrsqrt.pop %v3510
    %v3515 = vmul.f32 %v3483, %v3511
    %v3516 = vmul.f32 %v3484, %v3512
    %v3517 = vmul.f32 %v3485, %v3513
    %v3518 = vmul.f32 %v3486, %v3514
    %v3519 = vlaneseq
    %v3520 = vshrl.u32 %v3519, 7
    %v3521 = vsub.s32 0, %v3520
    %v3522 = vrot.slane %v38, %v3521
    %v3523 = vmul.f32 %v3515, %v3522
    %v3524 = vmul.f32 %v3516, %v3522
    %v3525 = vmul.f32 %v3517, %v3522
    %v3526 = vmul.f32 %v3518, %v3522
    %v3527 = vlaneseq
    %v3528 = vshrl.u32 %v3527, 7
    %v3529 = vsub.s32 1, %v3528
    %v3530 = vrot.slane %v38, %v3529
    %v3531 = vadd.f32 %v3523, %v3530
    %v3532 = vadd.f32 %v3524, %v3530
    %v3533 = vadd.f32 %v3525, %v3530
    %v3534 = vadd.f32 %v3526, %v3530
    %v3535 = vld [vmem:[%s2] sm:$0xf]
    %v3537 = vsel %vm85, %v3535, 0
    %3539 = vmatprep.subr.mxu0 0.0
    %3540 = vmatpush1.msra.mxu0 0.0
    %3541 = vmatprep.subr.mxu0 0.0
    %3542 = vmatpush1.msra.mxu0 0.0
    %3543 = vmatprep.subr.mxu0 0.0
    %3544 = vmatpush1.msra.mxu0 0.0
    %3545 = vmatprep.subr.mxu0 0.0
    %3546 = vmatpush1.msra.mxu0 0.0
    %3547 = vmatprep.subr.mxu0 0.0
    %3548 = vmatpush1.msra.mxu0 0.0
    %3549 = vmatprep.subr.mxu0 0.0
    %3550 = vmatpush1.msra.mxu0 0.0
    %3551 = vmatprep.subr.mxu0 0.0
    %3552 = vmatpush1.msra.mxu0 0.0
    %3553 = vmatprep.subr.mxu0 0.0
    %3554 = vmatpush1.msra.mxu0 0.0
    %3555 = vmatprep.subr.mxu0 0.0
    %3556 = vmatpush1.msra.mxu0 0.0
    %3557 = vmatprep.subr.mxu0 0.0
    %3558 = vmatpush1.msra.mxu0 0.0
    %3559 = vmatprep.subr.mxu0 0.0
    %3560 = vmatpush1.msra.mxu0 0.0
    %3561 = vmatprep.subr.mxu0 0.0
    %3562 = vmatpush1.msra.mxu0 0.0
    %3563 = vmatprep.subr.mxu0 0.0
    %3564 = vmatpush1.msra.mxu0 %v3534
    %3565 = vmatprep.subr.mxu0 0.0
    %3566 = vmatpush1.msra.mxu0 %v3533
    %3567 = vmatprep.subr.mxu0 0.0
    %3568 = vmatpush1.msra.mxu0 %v3532
    %3569 = vmatprep.subr.mxu0 0.0
    %3570 = vmatpush1.msra.mxu0 %v3531
    %3571 = vmatprep.subr.mxu0 0.0
    %3572 = vmatpush2.msra.mxu0 0.0
    %3573 = vmatprep.subr.mxu0 0.0
    %3574 = vmatpush2.msra.mxu0 0.0
    %3575 = vmatprep.subr.mxu0 0.0
    %3576 = vmatpush2.msra.mxu0 0.0
    %3577 = vmatprep.subr.mxu0 0.0
    %3578 = vmatpush2.msra.mxu0 0.0
    %3579 = vmatprep.subr.mxu0 0.0
    %3580 = vmatpush2.msra.mxu0 0.0
    %3581 = vmatprep.subr.mxu0 0.0
    %3582 = vmatpush2.msra.mxu0 0.0
    %3583 = vmatprep.subr.mxu0 0.0
    %3584 = vmatpush2.msra.mxu0 0.0
    %3585 = vmatprep.subr.mxu0 0.0
    %3586 = vmatpush2.msra.mxu0 0.0
    %3587 = vmatprep.subr.mxu0 0.0
    %3588 = vmatpush2.msra.mxu0 0.0
    %3589 = vmatprep.subr.mxu0 0.0
    %3590 = vmatpush2.msra.mxu0 0.0
    %3591 = vmatprep.subr.mxu0 0.0
    %3592 = vmatpush2.msra.mxu0 0.0
    %3593 = vmatprep.subr.mxu0 0.0
    %3594 = vmatpush2.msra.mxu0 0.0
    %3595 = vmatprep.subr.mxu0 0.0
    %3596 = vmatpush2.msra.mxu0 0.0
    %3597 = vmatprep.subr.mxu0 0.0
    %3598 = vmatpush2.msra.mxu0 0.0
    %3599 = vmatprep.subr.mxu0 0.0
    %3600 = vmatpush2.msra.mxu0 0.0
    %3601 = vmatprep.subr.mxu0 0.0
    %3602 = vmatpush2.msra.mxu0 0.0
    %3603 = vmatprep.mubr.f32.mxu0 0.0
    %3604 = vmatmul.mubr.f32.gmra.mxu0 %v3537
    %v3605 = vpop.f32.mrf.mxu0
    %v3606 = vadd.f32 0.0, %v3605
    %v3607 = vpop.f32.mrf.mxu0
    %3608 = vdwg.mxu0
    %v3609 = vld [vmem:[%s8] sm:$0xff]
    %v3610 = vld [vmem:[%s8 + $0x8] sm:$0xff]
    %v3611 = vld [vmem:[%s8 + $0x10] sm:$0xff]
    %v3612 = vld [vmem:[%s8 + $0x18] sm:$0xff]
    %v3613 = vlaneseq
    %v3614 = vshrl.u32 %v3613, 7
    %v3615 = vsub.s32 2, %v3614
    %v3616 = vrot.slane %v38, %v3615
    %v3618 = vsel %vm85, %v3606, 0
    %3620 = vmatprep.subr.mxu0 0.0
    %3621 = vmatpush1.msra.mxu0 0.0
    %3622 = vmatprep.subr.mxu0 0.0
    %3623 = vmatpush1.msra.mxu0 0.0
    %3624 = vmatprep.subr.mxu0 0.0
    %3625 = vmatpush1.msra.mxu0 0.0
    %3626 = vmatprep.subr.mxu0 0.0
    %3627 = vmatpush1.msra.mxu0 0.0
    %3628 = vmatprep.subr.mxu0 0.0
    %3629 = vmatpush1.msra.mxu0 0.0
    %3630 = vmatprep.subr.mxu0 0.0
    %3631 = vmatpush1.msra.mxu0 0.0
    %3632 = vmatprep.subr.mxu0 0.0
    %3633 = vmatpush1.msra.mxu0 0.0
    %3634 = vmatprep.subr.mxu0 0.0
    %3635 = vmatpush1.msra.mxu0 0.0
    %3636 = vmatprep.subr.mxu0 0.0
    %3637 = vmatpush1.msra.mxu0 0.0
    %3638 = vmatprep.subr.mxu0 0.0
    %3639 = vmatpush1.msra.mxu0 0.0
    %3640 = vmatprep.subr.mxu0 0.0
    %3641 = vmatpush1.msra.mxu0 0.0
    %3642 = vmatprep.subr.mxu0 0.0
    %3643 = vmatpush1.msra.mxu0 0.0
    %3644 = vmatprep.subr.mxu0 0.0
    %3645 = vmatpush1.msra.mxu0 %v3612
    %3646 = vmatprep.subr.mxu0 0.0
    %3647 = vmatpush1.msra.mxu0 %v3611
    %3648 = vmatprep.subr.mxu0 0.0
    %3649 = vmatpush1.msra.mxu0 %v3610
    %3650 = vmatprep.subr.mxu0 0.0
    %3651 = vmatpush1.msra.mxu0 %v3609
    %3652 = vmatprep.subr.mxu0 0.0
    %3653 = vmatpush2.msra.mxu0 0.0
    %3654 = vmatprep.subr.mxu0 0.0
    %3655 = vmatpush2.msra.mxu0 0.0
    %3656 = vmatprep.subr.mxu0 0.0
    %3657 = vmatpush2.msra.mxu0 0.0
    %3658 = vmatprep.subr.mxu0 0.0
    %3659 = vmatpush2.msra.mxu0 0.0
    %3660 = vmatprep.subr.mxu0 0.0
    %3661 = vmatpush2.msra.mxu0 0.0
    %3662 = vmatprep.subr.mxu0 0.0
    %3663 = vmatpush2.msra.mxu0 0.0
    %3664 = vmatprep.subr.mxu0 0.0
    %3665 = vmatpush2.msra.mxu0 0.0
    %3666 = vmatprep.subr.mxu0 0.0
    %3667 = vmatpush2.msra.mxu0 0.0
    %3668 = vmatprep.subr.mxu0 0.0
    %3669 = vmatpush2.msra.mxu0 0.0
    %3670 = vmatprep.subr.mxu0 0.0
    %3671 = vmatpush2.msra.mxu0 0.0
    %3672 = vmatprep.subr.mxu0 0.0
    %3673 = vmatpush2.msra.mxu0 0.0
    %3674 = vmatprep.subr.mxu0 0.0
    %3675 = vmatpush2.msra.mxu0 0.0
    %3676 = vmatprep.subr.mxu0 0.0
    %3677 = vmatpush2.msra.mxu0 0.0
    %3678 = vmatprep.subr.mxu0 0.0
    %3679 = vmatpush2.msra.mxu0 0.0
    %3680 = vmatprep.subr.mxu0 0.0
    %3681 = vmatpush2.msra.mxu0 0.0
    %3682 = vmatprep.subr.mxu0 0.0
    %3683 = vmatpush2.msra.mxu0 0.0
    %3684 = vmatprep.mubr.f32.mxu0 0.0
    %3685 = vmatmul.mubr.f32.gmra.mxu0 %v3618
    %v3686 = vpop.f32.mrf.mxu0
    %v3687 = vadd.f32 %v3616, %v3686
    %v3688 = vpop.f32.mrf.mxu0
    %3689 = vdwg.mxu0
    %v3690 = vtanh.pop %v3687
    %v3691 = vld [vmem:[%s9] sm:$0xff]
    %v3692 = vld [vmem:[%s9 + $0x8] sm:$0xff]
    %v3693 = vld [vmem:[%s9 + $0x10] sm:$0xff]
    %v3694 = vld [vmem:[%s9 + $0x18] sm:$0xff]
    %s3695 = scalar_lea.vmem %s9, 32
    %v3696 = vld [vmem:[%s3695] sm:$0xff]
    %v3697 = vld [vmem:[%s3695 + $0x8] sm:$0xff]
    %v3698 = vld [vmem:[%s3695 + $0x10] sm:$0xff]
    %v3699 = vld [vmem:[%s3695 + $0x18] sm:$0xff]
    %v3701 = vrot.slane %v3690, 2
    %v3702 = vsel %vm85, %v3701, 0
    %3704 = vmatprep.subr.mxu0 0.0
    %3705 = vmatpush1.msra.mxu0 0.0
    %3706 = vmatprep.subr.mxu0 0.0
    %3707 = vmatpush1.msra.mxu0 0.0
    %3708 = vmatprep.subr.mxu0 0.0
    %3709 = vmatpush1.msra.mxu0 0.0
    %3710 = vmatprep.subr.mxu0 0.0
    %3711 = vmatpush1.msra.mxu0 0.0
    %3712 = vmatprep.subr.mxu0 0.0
    %3713 = vmatpush1.msra.mxu0 0.0
    %3714 = vmatprep.subr.mxu0 0.0
    %3715 = vmatpush1.msra.mxu0 0.0
    %3716 = vmatprep.subr.mxu0 0.0
    %3717 = vmatpush1.msra.mxu0 0.0
    %3718 = vmatprep.subr.mxu0 0.0
    %3719 = vmatpush1.msra.mxu0 0.0
    %3720 = vmatprep.subr.mxu0 0.0
    %3721 = vmatpush1.msra.mxu0 0.0
    %3722 = vmatprep.subr.mxu0 0.0
    %3723 = vmatpush1.msra.mxu0 0.0
    %3724 = vmatprep.subr.mxu0 0.0
    %3725 = vmatpush1.msra.mxu0 0.0
    %3726 = vmatprep.subr.mxu0 0.0
    %3727 = vmatpush1.msra.mxu0 0.0
    %3728 = vmatprep.subr.mxu0 0.0
    %3729 = vmatpush1.msra.mxu0 %v3699
    %3730 = vmatprep.subr.mxu0 0.0
    %3731 = vmatpush1.msra.mxu0 %v3698
    %3732 = vmatprep.subr.mxu0 0.0
    %3733 = vmatpush1.msra.mxu0 %v3697
    %3734 = vmatprep.subr.mxu0 0.0
    %3735 = vmatpush1.msra.mxu0 %v3696
    %3736 = vmatprep.subr.mxu0 0.0
    %3737 = vmatpush2.msra.mxu0 0.0
    %3738 = vmatprep.subr.mxu0 0.0
    %3739 = vmatpush2.msra.mxu0 0.0
    %3740 = vmatprep.subr.mxu0 0.0
    %3741 = vmatpush2.msra.mxu0 0.0
    %3742 = vmatprep.subr.mxu0 0.0
    %3743 = vmatpush2.msra.mxu0 0.0
    %3744 = vmatprep.subr.mxu0 0.0
    %3745 = vmatpush2.msra.mxu0 0.0
    %3746 = vmatprep.subr.mxu0 0.0
    %3747 = vmatpush2.msra.mxu0 0.0
    %3748 = vmatprep.subr.mxu0 0.0
    %3749 = vmatpush2.msra.mxu0 0.0
    %3750 = vmatprep.subr.mxu0 0.0
    %3751 = vmatpush2.msra.mxu0 0.0
    %3752 = vmatprep.subr.mxu0 0.0
    %3753 = vmatpush2.msra.mxu0 0.0
    %3754 = vmatprep.subr.mxu0 0.0
    %3755 = vmatpush2.msra.mxu0 0.0
    %3756 = vmatprep.subr.mxu0 0.0
    %3757 = vmatpush2.msra.mxu0 0.0
    %3758 = vmatprep.subr.mxu0 0.0
    %3759 = vmatpush2.msra.mxu0 0.0
    %3760 = vmatprep.subr.mxu0 0.0
    %3761 = vmatpush2.msra.mxu0 0.0
    %3762 = vmatprep.subr.mxu0 0.0
    %3763 = vmatpush2.msra.mxu0 0.0
    %3764 = vmatprep.subr.mxu0 0.0
    %3765 = vmatpush2.msra.mxu0 0.0
    %3766 = vmatprep.subr.mxu0 0.0
    %3767 = vmatpush2.msra.mxu0 0.0
    %3768 = vmatprep.mubr.f32.mxu0 0.0
    %3769 = vmatmul.mubr.f32.gmra.mxu0 %v3702
    %v3770 = vpop.f32.mrf.mxu0
    %v3771 = vadd.f32 0.0, %v3770
    %v3772 = vpop.f32.mrf.mxu0
    %3773 = vdwg.mxu0
    %v3774 = vsel %vm85, %v3690, 0
    %3776 = vmatprep.subr.mxu0 0.0
    %3777 = vmatpush1.msra.mxu0 0.0
    %3778 = vmatprep.subr.mxu0 0.0
    %3779 = vmatpush1.msra.mxu0 0.0
    %3780 = vmatprep.subr.mxu0 0.0
    %3781 = vmatpush1.msra.mxu0 0.0
    %3782 = vmatprep.subr.mxu0 0.0
    %3783 = vmatpush1.msra.mxu0 0.0
    %3784 = vmatprep.subr.mxu0 0.0
    %3785 = vmatpush1.msra.mxu0 0.0
    %3786 = vmatprep.subr.mxu0 0.0
    %3787 = vmatpush1.msra.mxu0 0.0
    %3788 = vmatprep.subr.mxu0 0.0
    %3789 = vmatpush1.msra.mxu0 0.0
    %3790 = vmatprep.subr.mxu0 0.0
    %3791 = vmatpush1.msra.mxu0 0.0
    %3792 = vmatprep.subr.mxu0 0.0
    %3793 = vmatpush1.msra.mxu0 0.0
    %3794 = vmatprep.subr.mxu0 0.0
    %3795 = vmatpush1.msra.mxu0 0.0
    %3796 = vmatprep.subr.mxu0 0.0
    %3797 = vmatpush1.msra.mxu0 0.0
    %3798 = vmatprep.subr.mxu0 0.0
    %3799 = vmatpush1.msra.mxu0 0.0
    %3800 = vmatprep.subr.mxu0 0.0
    %3801 = vmatpush1.msra.mxu0 %v3694
    %3802 = vmatprep.subr.mxu0 0.0
    %3803 = vmatpush1.msra.mxu0 %v3693
    %3804 = vmatprep.subr.mxu0 0.0
    %3805 = vmatpush1.msra.mxu0 %v3692
    %3806 = vmatprep.subr.mxu0 0.0
    %3807 = vmatpush1.msra.mxu0 %v3691
    %3808 = vmatprep.subr.mxu0 0.0
    %3809 = vmatpush2.msra.mxu0 0.0
    %3810 = vmatprep.subr.mxu0 0.0
    %3811 = vmatpush2.msra.mxu0 0.0
    %3812 = vmatprep.subr.mxu0 0.0
    %3813 = vmatpush2.msra.mxu0 0.0
    %3814 = vmatprep.subr.mxu0 0.0
    %3815 = vmatpush2.msra.mxu0 0.0
    %3816 = vmatprep.subr.mxu0 0.0
    %3817 = vmatpush2.msra.mxu0 0.0
    %3818 = vmatprep.subr.mxu0 0.0
    %3819 = vmatpush2.msra.mxu0 0.0
    %3820 = vmatprep.subr.mxu0 0.0
    %3821 = vmatpush2.msra.mxu0 0.0
    %3822 = vmatprep.subr.mxu0 0.0
    %3823 = vmatpush2.msra.mxu0 0.0
    %3824 = vmatprep.subr.mxu0 0.0
    %3825 = vmatpush2.msra.mxu0 0.0
    %3826 = vmatprep.subr.mxu0 0.0
    %3827 = vmatpush2.msra.mxu0 0.0
    %3828 = vmatprep.subr.mxu0 0.0
    %3829 = vmatpush2.msra.mxu0 0.0
    %3830 = vmatprep.subr.mxu0 0.0
    %3831 = vmatpush2.msra.mxu0 0.0
    %3832 = vmatprep.subr.mxu0 0.0
    %3833 = vmatpush2.msra.mxu0 0.0
    %3834 = vmatprep.subr.mxu0 0.0
    %3835 = vmatpush2.msra.mxu0 0.0
    %3836 = vmatprep.subr.mxu0 0.0
    %3837 = vmatpush2.msra.mxu0 0.0
    %3838 = vmatprep.subr.mxu0 0.0
    %3839 = vmatpush2.msra.mxu0 0.0
    %3840 = vmatprep.mubr.f32.mxu0 0.0
    %3841 = vmatmul.mubr.f32.gmra.mxu0 %v3774
    %v3842 = vpop.f32.mrf.mxu0
    %v3843 = vadd.f32 %v3771, %v3842
    %v3844 = vpop.f32.mrf.mxu0
    %3845 = vdwg.mxu0
    %v3846 = vlaneseq
    %v3847 = vshrl.u32 %v3846, 7
    %v3848 = vsub.s32 3, %v3847
    %v3849 = vrot.slane %v38, %v3848
    %v3850 = vadd.f32 %v3843, %v3849
    %3851 = vst [vmem:[#allocation2] sm:$0x3] %v3850
    // Predicated region
    $region42: #{news_encoder_forward.1} parent=1 // pred_check
      _
    $region43: #{news_encoder_forward.1} parent=1 // pred_check_branch
      %3853 = sbr.rel (0) target = $region45
    $region44: #{news_encoder_forward.1} parent=1 // pred_region
      %s3855 = ssub.s32 32, 32
      %3856 = vsyncadd [#allocation3], %s3855
      %s3858 = sshll.u32 [#allocation2], 4
      %s3859 = int_to_ptr.vmem [resolvable:$true] %s3858
      %3861 = dma.vmem_to_hbm [thread:$0]  %s3859, 32, %s10, [#allocation3]
    $region45: #{news_encoder_forward.1} parent=1 // pred_fallthru
      _
    // Predicated region
    $region46: #{news_encoder_forward.1} parent=1 // pred_check
      _
    $region47: #{news_encoder_forward.1} parent=1 // pred_check_branch
      %3863 = sbr.rel (0) target = $region49
    $region48: #{news_encoder_forward.1} parent=1 // pred_region
      %3864 = dma.done [#allocation3], 32
    $region49: #{news_encoder_forward.1} parent=1 // pred_fallthru
      _
    %3865 = vsyncpa [#allocation3], 1

</llo_original>
